<compile_context>
chip_gen: v6e
topology: v6e:2x2x1
jax: 0.10.0
libtpu: 0.0.40
codegen_flags: <defaults>
</compile_context>

<pallas_src>
import jax
import jax.numpy as jnp
from jax import lax
from jax.experimental import pallas as pl
from jax.experimental.pallas import tpu as pltpu

LANE = 128


# ------------------------------- fused kernel -------------------------------- #

def _make_fused_cnn_kernel(S, M2, M3, K2, K3, compute_dtype):
    """Kernel body. S = compact flat row stride (=OW1); M2/M3 = rows computed for
    layers 2/3 per grid step; K2/K3 = square kernel sizes of layers 2/3."""

    def kernel(x_ref, w1_ref, b1_ref, w2_ref, b2_ref, w3_ref, b3_ref,
               o_ref, s1_ref, s2_ref):

        def conv_stage(src_ref, w_ref, b_ref, K, M):
            # Shifted-window conv on the compact flat layout (row stride S):
            # tap (ky, kx) is the STATIC slice src[ky*S+kx : ky*S+kx+M, :].
            # Operands are cast to compute_dtype at the dot -> bf16 MXU fast path;
            # accumulation stays f32. Single chained accumulation per layer.
            acc = None
            for ky in range(K):
                for kx in range(K):
                    a = src_ref[pl.ds(ky * S + kx, M), :].astype(compute_dtype)
                    p = jnp.dot(a, w_ref[ky * K + kx],
                                preferred_element_type=jnp.float32)
                    acc = p if acc is None else acc + p
            return acc + b_ref[...]

        # ---- layer 1: taps pre-folded into K by the wrapper's im2col packing ----
        # ONE (M1, K1) @ (K1, 128) dot, K1 = 8*8*Cin (256 for Cin=4).
        y1 = jnp.dot(x_ref[0], w1_ref[...],
                     preferred_element_type=jnp.float32) + b1_ref[...]
        s1_ref[...] = y1                                   # VMEM-resident (f32)

        # ---- layer 2 (k=4) and layer 3 (k=2): shifted-window taps ---------------
        s2_ref[...] = conv_stage(s1_ref, w2_ref, b2_ref, K2, M2)
        o_ref[0] = conv_stage(s2_ref, w3_ref, b3_ref, K3, M3).astype(o_ref.dtype)

    return kernel


# -------------------------------- forward pass -------------------------------- #

def cnn_forward(params, obs, compute_dtype=jnp.bfloat16):
    """Pallas forward of CNN(obs_size): torch.flatten(conv(obs)).

    params: [(w (Cout,Cin,K,K), b (Cout,)) x 3]; obs: (N, C, H, W) float32.
    compute_dtype: MXU operand dtype (bf16 fast path; f32 for tight parity).
    Accumulation is always f32; the kernel output is stored in f32.
    """
    N, C0, H, W = obs.shape
    (w1, b1), (w2, b2), (w3, b3) = params
    KH1, KW1 = w1.shape[2], w1.shape[3]          # 8, 8
    K2, K3 = w2.shape[2], w3.shape[2]            # 4, 2
    C1, C2, C3 = w1.shape[0], w2.shape[0], w3.shape[0]   # 64, 32, 32

    OH1, OW1 = H - KH1 + 1, W - KW1 + 1
    OH2, OW2 = OH1 - K2 + 1, OW1 - K2 + 1
    OH3, OW3 = OH2 - K3 + 1, OW2 - K3 + 1
    S = OW1                        # compact flat row stride used by layers 2/3
    SEG = OH1 * OW1                # per-image segment (all rows valid after L1)

    # Batch blocking: stack B_blk images along the matmul M dimension.
    B_blk = max(d for d in range(1, min(N, 8) + 1) if N % d == 0)
    G = N // B_blk
    M1 = B_blk * SEG                              # layer-1 rows per grid step
    M2 = M1 - ((K2 - 1) * S + (K2 - 1))           # layer-2 rows (drop max tap shift)
    M3 = M2 - ((K3 - 1) * S + (K3 - 1))           # layer-3 rows

    # ---- im2col pack of the input over (ky, kx, cin): K1 = KH1*KW1*C0 ----------
    K1 = KH1 * KW1 * C0
    xh = jnp.transpose(obs, (0, 2, 3, 1))         # NHWC
    taps = [xh[:, ky:ky + OH1, kx:kx + OW1, :]
            for ky in range(KH1) for kx in range(KW1)]
    xp = jnp.concatenate(taps, axis=-1)           # (N, OH1, OW1, K1), (ky,kx,c) order
    xp = xp.reshape(G, M1, K1).astype(compute_dtype)   # lane-dense LHS (K1 = 256)

    # ---- weights: tap order matches packing; channels zero-padded to 128 lanes --
    w1p = jnp.transpose(w1, (2, 3, 1, 0)).reshape(K1, C1)
    w1p = jnp.pad(w1p, ((0, 0), (0, LANE - C1))).astype(compute_dtype)        # (K1,128)
    w2p = jnp.transpose(w2, (2, 3, 1, 0)).reshape(K2 * K2, C1, C2)
    w2p = jnp.pad(w2p, ((0, 0), (0, LANE - C1), (0, LANE - C2))).astype(compute_dtype)
    w3p = jnp.transpose(w3, (2, 3, 1, 0)).reshape(K3 * K3, C2, C3)
    w3p = jnp.pad(w3p, ((0, 0), (0, LANE - C2), (0, LANE - C3))).astype(compute_dtype)
    b1p = jnp.pad(b1.reshape(1, C1), ((0, 0), (0, LANE - C1))).astype(jnp.float32)
    b2p = jnp.pad(b2.reshape(1, C2), ((0, 0), (0, LANE - C2))).astype(jnp.float32)
    b3p = jnp.pad(b3.reshape(1, C3), ((0, 0), (0, LANE - C3))).astype(jnp.float32)

    const2 = lambda g: (0, 0)
    const3 = lambda g: (0, 0, 0)
    # NOTE: weight/bias blocks use constant index maps so they stay resident across
    # grid steps; pl.Buffered(1) single-buffering skipped (negligible at this size).
    out = pl.pallas_call(
        _make_fused_cnn_kernel(S, M2, M3, K2, K3, compute_dtype),
        out_shape=jax.ShapeDtypeStruct((G, M3, LANE), jnp.float32),
        grid_spec=pltpu.PrefetchScalarGridSpec(
            num_scalar_prefetch=0,
            grid=(G,),
            in_specs=[
                pl.BlockSpec((1, M1, K1), lambda g: (g, 0, 0)),
                pl.BlockSpec(w1p.shape, const2),
                pl.BlockSpec(b1p.shape, const2),
                pl.BlockSpec(w2p.shape, const3),
                pl.BlockSpec(b2p.shape, const2),
                pl.BlockSpec(w3p.shape, const3),
                pl.BlockSpec(b3p.shape, const2),
            ],
            out_specs=pl.BlockSpec((1, M3, LANE), lambda g: (g, 0, 0)),
            scratch_shapes=[pltpu.VMEM((M1, LANE), jnp.float32),
                            pltpu.VMEM((M2, LANE), jnp.float32)]),
        compiler_params=pltpu.CompilerParams(
            dimension_semantics=("parallel",),           # batch blocks split across TCs
            vmem_limit_bytes=32 * 1024 * 1024),          # safe on v5e/v6e/v7x
    )(xp, w1p, b1p, w2p, b2p, w3p, b3p)

    # ---- unpack: strip row-stride garbage + channel pad, back to torch order ----
    y = jnp.pad(out, ((0, 0), (0, B_blk * SEG - M3), (0, 0)))    # (G, B_blk*SEG, 128)
    y = y.reshape(G, B_blk, OH1, OW1, LANE)[:, :, :OH3, :OW3, :C3]
    y = y.reshape(N, OH3, OW3, C3)
    y = jnp.transpose(y, (0, 3, 1, 2))                           # NCHW
    return y.reshape(-1)                                         # torch.flatten


# ------------------------------ params & reference ---------------------------- #

def init_cnn_params(obs_size, key):
    """Deterministic init mimicking PyTorch Conv2d defaults (uniform +-1/sqrt(fan_in))."""
    layers = [(obs_size, 64, 8), (64, 32, 4), (32, 32, 2)]
    params = []
    for (cin, cout, k) in layers:
        key, kw, kb = jax.random.split(key, 3)
        bound = 1.0 / jnp.sqrt(cin * k * k)
        w = jax.random.uniform(kw, (cout, cin, k, k), jnp.float32, -bound, bound)
        b = jax.random.uniform(kb, (cout,), jnp.float32, -bound, bound)
        params.append((w, b))
    return params


def cnn_forward_ref(params, obs):
    out = obs
    for (w, b) in params:
        out = lax.conv_general_dilated(
            out, w, window_strides=(1, 1), padding="VALID",
            dimension_numbers=("NCHW", "OIHW", "NCHW"),
            precision=lax.Precision.HIGHEST)
        out = out + b.reshape(1, -1, 1, 1)
    return out.reshape(-1)


# ------------------------------------ main ------------------------------------ #

if __name__ == "__main__":
    key = jax.random.PRNGKey(0)
    key, kx = jax.random.split(key)

    obs_size = 4
    # spatial must be >= 12 for the three valid convs (k=8,4,2) to produce output
    x = jax.random.normal(kx, (2, obs_size, 16, 16), jnp.float32)
    params = init_cnn_params(obs_size, key)

    ref = cnn_forward_ref(params, x)

    # f32-operand path: tight parity with the PyTorch-equivalent reference.
    out_f32 = jax.block_until_ready(
        jax.jit(lambda p, o: cnn_forward(p, o, jnp.float32))(params, x))
    assert out_f32.shape == (2 * 32 * 5 * 5,), out_f32.shape
    assert jnp.allclose(out_f32, ref, rtol=1e-3, atol=1e-3), \
        float(jnp.max(jnp.abs(out_f32 - ref)))

    # bf16-operand / f32-accumulate fast path (v5e/v6e/v7x MXU). Tolerance widened
    # to cover bf16 operand quantization across three stacked conv layers.
    out_bf16 = jax.block_until_ready(
        jax.jit(lambda p, o: cnn_forward(p, o, jnp.bfloat16))(params, x))
    assert out_bf16.shape == (2 * 32 * 5 * 5,), out_bf16.shape
    assert jnp.allclose(out_bf16, ref, rtol=5e-2, atol=5e-2), \
        float(jnp.max(jnp.abs(out_bf16 - ref)))

    print("KERNEL_OK")
</pallas_src>

<mosaic_0001>
module attributes {stable_mosaic.version = 11 : i64} {
  func.func @kernel(%arg0: i32, %arg1: memref<1x162x256xf32, #tpu.memory_space<vmem>>, %arg2: memref<256x128xf32, #tpu.memory_space<vmem>>, %arg3: memref<1x128xf32, #tpu.memory_space<vmem>>, %arg4: memref<16x128x128xf32, #tpu.memory_space<vmem>>, %arg5: memref<1x128xf32, #tpu.memory_space<vmem>>, %arg6: memref<4x128x128xf32, #tpu.memory_space<vmem>>, %arg7: memref<1x128xf32, #tpu.memory_space<vmem>>, %arg8: memref<1x122x128xf32, #tpu.memory_space<vmem>>, %arg9: memref<162x128xf32, #tpu.memory_space<vmem>>, %arg10: memref<132x128xf32, #tpu.memory_space<vmem>>) attributes {dimension_semantics = [#tpu.dimension_semantics<parallel>], iteration_bounds = array<i64: 1>, scalar_prefetch = 0 : i64, scratch_operands = 2 : i64, tpu.core_type = #tpu.core_type<tc>, window_params = [{transform_indices = @transform_0, window_bounds = array<i64: 1, 162, 256>}, {pipeline_mode = #tpu.pipeline_mode<synchronous>, transform_indices = @transform_1, window_bounds = array<i64: 256, 128>}, {pipeline_mode = #tpu.pipeline_mode<synchronous>, transform_indices = @transform_2, window_bounds = array<i64: 1, 128>}, {pipeline_mode = #tpu.pipeline_mode<synchronous>, transform_indices = @transform_3, window_bounds = array<i64: 16, 128, 128>}, {pipeline_mode = #tpu.pipeline_mode<synchronous>, transform_indices = @transform_4, window_bounds = array<i64: 1, 128>}, {pipeline_mode = #tpu.pipeline_mode<synchronous>, transform_indices = @transform_5, window_bounds = array<i64: 4, 128, 128>}, {pipeline_mode = #tpu.pipeline_mode<synchronous>, transform_indices = @transform_6, window_bounds = array<i64: 1, 128>}, {transform_indices = @transform_7, window_bounds = array<i64: 1, 122, 128>}]} {
    %c0 = arith.constant 0 : index
    %c0_0 = arith.constant 0 : index
    %c0_1 = arith.constant 0 : index
    %0 = vector.load %arg1[%c0, %c0_0, %c0_1] : memref<1x162x256xf32, #tpu.memory_space<vmem>>, vector<1x162x256xf32>
    %1 = vector.shape_cast %0 : vector<1x162x256xf32> to vector<162x256xf32>
    %c0_2 = arith.constant 0 : index
    %c0_3 = arith.constant 0 : index
    %2 = vector.load %arg2[%c0_2, %c0_3] : memref<256x128xf32, #tpu.memory_space<vmem>>, vector<256x128xf32>
    %cst = arith.constant dense<0.000000e+00> : vector<162x128xf32>
    %3 = tpu.matmul %1, %2, %cst {dimension_numbers = #tpu.dot_dimension_numbers<[1], [0], [0], [1], [0, 0, 1, 1], [], []>} : vector<162x256xf32>, vector<256x128xf32>, vector<162x128xf32> -> vector<162x128xf32>
    %c0_4 = arith.constant 0 : index
    %c0_5 = arith.constant 0 : index
    %4 = vector.load %arg3[%c0_4, %c0_5] : memref<1x128xf32, #tpu.memory_space<vmem>>, vector<1x128xf32>
    %5 = vector.broadcast %4 : vector<1x128xf32> to vector<162x128xf32>
    %6 = arith.addf %3, %5 : vector<162x128xf32>
    %c0_6 = arith.constant 0 : index
    %c0_7 = arith.constant 0 : index
    %7 = vector.load %arg9[%c0_6, %c0_7] : memref<162x128xf32, #tpu.memory_space<vmem>>, vector<162x128xf32>
    tpu.vector_store %arg9[%c0_6, %c0_7], %6 {strides = array<i32>} : memref<162x128xf32, #tpu.memory_space<vmem>>, vector<162x128xf32>,
    %c0_8 = arith.constant 0 : index
    %c0_9 = arith.constant 0 : index
    %8 = vector.load %arg9[%c0_8, %c0_9] : memref<162x128xf32, #tpu.memory_space<vmem>>, vector<132x128xf32>
    %c0_10 = arith.constant 0 : index
    %c0_11 = arith.constant 0 : index
    %c0_12 = arith.constant 0 : index
    %9 = vector.load %arg4[%c0_10, %c0_11, %c0_12] : memref<16x128x128xf32, #tpu.memory_space<vmem>>, vector<1x128x128xf32>
    %10 = vector.shape_cast %9 : vector<1x128x128xf32> to vector<128x128xf32>
    %cst_13 = arith.constant dense<0.000000e+00> : vector<132x128xf32>
    %11 = tpu.matmul %8, %10, %cst_13 {dimension_numbers = #tpu.dot_dimension_numbers<[1], [0], [0], [1], [0, 0, 1, 1], [], []>} : vector<132x128xf32>, vector<128x128xf32>, vector<132x128xf32> -> vector<132x128xf32>
    %c1 = arith.constant 1 : index
    %c0_14 = arith.constant 0 : index
    %12 = vector.load %arg9[%c1, %c0_14] : memref<162x128xf32, #tpu.memory_space<vmem>>, vector<132x128xf32>
    %c1_15 = arith.constant 1 : index
    %c0_16 = arith.constant 0 : index
    %c0_17 = arith.constant 0 : index
    %13 = vector.load %arg4[%c1_15, %c0_16, %c0_17] : memref<16x128x128xf32, #tpu.memory_space<vmem>>, vector<1x128x128xf32>
    %14 = vector.shape_cast %13 : vector<1x128x128xf32> to vector<128x128xf32>
    %cst_18 = arith.constant dense<0.000000e+00> : vector<132x128xf32>
    %15 = tpu.matmul %12, %14, %cst_18 {dimension_numbers = #tpu.dot_dimension_numbers<[1], [0], [0], [1], [0, 0, 1, 1], [], []>} : vector<132x128xf32>, vector<128x128xf32>, vector<132x128xf32> -> vector<132x128xf32>
    %16 = arith.addf %11, %15 : vector<132x128xf32>
    %c2 = arith.constant 2 : index
    %c0_19 = arith.constant 0 : index
    %17 = vector.load %arg9[%c2, %c0_19] : memref<162x128xf32, #tpu.memory_space<vmem>>, vector<132x128xf32>
    %c2_20 = arith.constant 2 : index
    %c0_21 = arith.constant 0 : index
    %c0_22 = arith.constant 0 : index
    %18 = vector.load %arg4[%c2_20, %c0_21, %c0_22] : memref<16x128x128xf32, #tpu.memory_space<vmem>>, vector<1x128x128xf32>
    %19 = vector.shape_cast %18 : vector<1x128x128xf32> to vector<128x128xf32>
    %cst_23 = arith.constant dense<0.000000e+00> : vector<132x128xf32>
    %20 = tpu.matmul %17, %19, %cst_23 {dimension_numbers = #tpu.dot_dimension_numbers<[1], [0], [0], [1], [0, 0, 1, 1], [], []>} : vector<132x128xf32>, vector<128x128xf32>, vector<132x128xf32> -> vector<132x128xf32>
    %21 = arith.addf %16, %20 : vector<132x128xf32>
    %c3 = arith.constant 3 : index
    %c0_24 = arith.constant 0 : index
    %22 = vector.load %arg9[%c3, %c0_24] : memref<162x128xf32, #tpu.memory_space<vmem>>, vector<132x128xf32>
    %c3_25 = arith.constant 3 : index
    %c0_26 = arith.constant 0 : index
    %c0_27 = arith.constant 0 : index
    %23 = vector.load %arg4[%c3_25, %c0_26, %c0_27] : memref<16x128x128xf32, #tpu.memory_space<vmem>>, vector<1x128x128xf32>
    %24 = vector.shape_cast %23 : vector<1x128x128xf32> to vector<128x128xf32>
    %cst_28 = arith.constant dense<0.000000e+00> : vector<132x128xf32>
    %25 = tpu.matmul %22, %24, %cst_28 {dimension_numbers = #tpu.dot_dimension_numbers<[1], [0], [0], [1], [0, 0, 1, 1], [], []>} : vector<132x128xf32>, vector<128x128xf32>, vector<132x128xf32> -> vector<132x128xf32>
    %26 = arith.addf %21, %25 : vector<132x128xf32>
    %c9 = arith.constant 9 : index
    %c0_29 = arith.constant 0 : index
    %27 = vector.load %arg9[%c9, %c0_29] : memref<162x128xf32, #tpu.memory_space<vmem>>, vector<132x128xf32>
    %c4 = arith.constant 4 : index
    %c0_30 = arith.constant 0 : index
    %c0_31 = arith.constant 0 : index
    %28 = vector.load %arg4[%c4, %c0_30, %c0_31] : memref<16x128x128xf32, #tpu.memory_space<vmem>>, vector<1x128x128xf32>
    %29 = vector.shape_cast %28 : vector<1x128x128xf32> to vector<128x128xf32>
    %cst_32 = arith.constant dense<0.000000e+00> : vector<132x128xf32>
    %30 = tpu.matmul %27, %29, %cst_32 {dimension_numbers = #tpu.dot_dimension_numbers<[1], [0], [0], [1], [0, 0, 1, 1], [], []>} : vector<132x128xf32>, vector<128x128xf32>, vector<132x128xf32> -> vector<132x128xf32>
    %31 = arith.addf %26, %30 : vector<132x128xf32>
    %c10 = arith.constant 10 : index
    %c0_33 = arith.constant 0 : index
    %32 = vector.load %arg9[%c10, %c0_33] : memref<162x128xf32, #tpu.memory_space<vmem>>, vector<132x128xf32>
    %c5 = arith.constant 5 : index
    %c0_34 = arith.constant 0 : index
    %c0_35 = arith.constant 0 : index
    %33 = vector.load %arg4[%c5, %c0_34, %c0_35] : memref<16x128x128xf32, #tpu.memory_space<vmem>>, vector<1x128x128xf32>
    %34 = vector.shape_cast %33 : vector<1x128x128xf32> to vector<128x128xf32>
    %cst_36 = arith.constant dense<0.000000e+00> : vector<132x128xf32>
    %35 = tpu.matmul %32, %34, %cst_36 {dimension_numbers = #tpu.dot_dimension_numbers<[1], [0], [0], [1], [0, 0, 1, 1], [], []>} : vector<132x128xf32>, vector<128x128xf32>, vector<132x128xf32> -> vector<132x128xf32>
    %36 = arith.addf %31, %35 : vector<132x128xf32>
    %c11 = arith.constant 11 : index
    %c0_37 = arith.constant 0 : index
    %37 = vector.load %arg9[%c11, %c0_37] : memref<162x128xf32, #tpu.memory_space<vmem>>, vector<132x128xf32>
    %c6 = arith.constant 6 : index
    %c0_38 = arith.constant 0 : index
    %c0_39 = arith.constant 0 : index
    %38 = vector.load %arg4[%c6, %c0_38, %c0_39] : memref<16x128x128xf32, #tpu.memory_space<vmem>>, vector<1x128x128xf32>
    %39 = vector.shape_cast %38 : vector<1x128x128xf32> to vector<128x128xf32>
    %cst_40 = arith.constant dense<0.000000e+00> : vector<132x128xf32>
    %40 = tpu.matmul %37, %39, %cst_40 {dimension_numbers = #tpu.dot_dimension_numbers<[1], [0], [0], [1], [0, 0, 1, 1], [], []>} : vector<132x128xf32>, vector<128x128xf32>, vector<132x128xf32> -> vector<132x128xf32>
    %41 = arith.addf %36, %40 : vector<132x128xf32>
    %c12 = arith.constant 12 : index
    %c0_41 = arith.constant 0 : index
    %42 = vector.load %arg9[%c12, %c0_41] : memref<162x128xf32, #tpu.memory_space<vmem>>, vector<132x128xf32>
    %c7 = arith.constant 7 : index
    %c0_42 = arith.constant 0 : index
    %c0_43 = arith.constant 0 : index
    %43 = vector.load %arg4[%c7, %c0_42, %c0_43] : memref<16x128x128xf32, #tpu.memory_space<vmem>>, vector<1x128x128xf32>
    %44 = vector.shape_cast %43 : vector<1x128x128xf32> to vector<128x128xf32>
    %cst_44 = arith.constant dense<0.000000e+00> : vector<132x128xf32>
    %45 = tpu.matmul %42, %44, %cst_44 {dimension_numbers = #tpu.dot_dimension_numbers<[1], [0], [0], [1], [0, 0, 1, 1], [], []>} : vector<132x128xf32>, vector<128x128xf32>, vector<132x128xf32> -> vector<132x128xf32>
    %46 = arith.addf %41, %45 : vector<132x128xf32>
    %c18 = arith.constant 18 : index
    %c0_45 = arith.constant 0 : index
    %47 = vector.load %arg9[%c18, %c0_45] : memref<162x128xf32, #tpu.memory_space<vmem>>, vector<132x128xf32>
    %c8 = arith.constant 8 : index
    %c0_46 = arith.constant 0 : index
    %c0_47 = arith.constant 0 : index
    %48 = vector.load %arg4[%c8, %c0_46, %c0_47] : memref<16x128x128xf32, #tpu.memory_space<vmem>>, vector<1x128x128xf32>
    %49 = vector.shape_cast %48 : vector<1x128x128xf32> to vector<128x128xf32>
    %cst_48 = arith.constant dense<0.000000e+00> : vector<132x128xf32>
    %50 = tpu.matmul %47, %49, %cst_48 {dimension_numbers = #tpu.dot_dimension_numbers<[1], [0], [0], [1], [0, 0, 1, 1], [], []>} : vector<132x128xf32>, vector<128x128xf32>, vector<132x128xf32> -> vector<132x128xf32>
    %51 = arith.addf %46, %50 : vector<132x128xf32>
    %c19 = arith.constant 19 : index
    %c0_49 = arith.constant 0 : index
    %52 = vector.load %arg9[%c19, %c0_49] : memref<162x128xf32, #tpu.memory_space<vmem>>, vector<132x128xf32>
    %c9_50 = arith.constant 9 : index
    %c0_51 = arith.constant 0 : index
    %c0_52 = arith.constant 0 : index
    %53 = vector.load %arg4[%c9_50, %c0_51, %c0_52] : memref<16x128x128xf32, #tpu.memory_space<vmem>>, vector<1x128x128xf32>
    %54 = vector.shape_cast %53 : vector<1x128x128xf32> to vector<128x128xf32>
    %cst_53 = arith.constant dense<0.000000e+00> : vector<132x128xf32>
    %55 = tpu.matmul %52, %54, %cst_53 {dimension_numbers = #tpu.dot_dimension_numbers<[1], [0], [0], [1], [0, 0, 1, 1], [], []>} : vector<132x128xf32>, vector<128x128xf32>, vector<132x128xf32> -> vector<132x128xf32>
    %56 = arith.addf %51, %55 : vector<132x128xf32>
    %c20 = arith.constant 20 : index
    %c0_54 = arith.constant 0 : index
    %57 = vector.load %arg9[%c20, %c0_54] : memref<162x128xf32, #tpu.memory_space<vmem>>, vector<132x128xf32>
    %c10_55 = arith.constant 10 : index
    %c0_56 = arith.constant 0 : index
    %c0_57 = arith.constant 0 : index
    %58 = vector.load %arg4[%c10_55, %c0_56, %c0_57] : memref<16x128x128xf32, #tpu.memory_space<vmem>>, vector<1x128x128xf32>
    %59 = vector.shape_cast %58 : vector<1x128x128xf32> to vector<128x128xf32>
    %cst_58 = arith.constant dense<0.000000e+00> : vector<132x128xf32>
    %60 = tpu.matmul %57, %59, %cst_58 {dimension_numbers = #tpu.dot_dimension_numbers<[1], [0], [0], [1], [0, 0, 1, 1], [], []>} : vector<132x128xf32>, vector<128x128xf32>, vector<132x128xf32> -> vector<132x128xf32>
    %61 = arith.addf %56, %60 : vector<132x128xf32>
    %c21 = arith.constant 21 : index
    %c0_59 = arith.constant 0 : index
    %62 = vector.load %arg9[%c21, %c0_59] : memref<162x128xf32, #tpu.memory_space<vmem>>, vector<132x128xf32>
    %c11_60 = arith.constant 11 : index
    %c0_61 = arith.constant 0 : index
    %c0_62 = arith.constant 0 : index
    %63 = vector.load %arg4[%c11_60, %c0_61, %c0_62] : memref<16x128x128xf32, #tpu.memory_space<vmem>>, vector<1x128x128xf32>
    %64 = vector.shape_cast %63 : vector<1x128x128xf32> to vector<128x128xf32>
    %cst_63 = arith.constant dense<0.000000e+00> : vector<132x128xf32>
    %65 = tpu.matmul %62, %64, %cst_63 {dimension_numbers = #tpu.dot_dimension_numbers<[1], [0], [0], [1], [0, 0, 1, 1], [], []>} : vector<132x128xf32>, vector<128x128xf32>, vector<132x128xf32> -> vector<132x128xf32>
    %66 = arith.addf %61, %65 : vector<132x128xf32>
    %c27 = arith.constant 27 : index
    %c0_64 = arith.constant 0 : index
    %67 = vector.load %arg9[%c27, %c0_64] : memref<162x128xf32, #tpu.memory_space<vmem>>, vector<132x128xf32>
    %c12_65 = arith.constant 12 : index
    %c0_66 = arith.constant 0 : index
    %c0_67 = arith.constant 0 : index
    %68 = vector.load %arg4[%c12_65, %c0_66, %c0_67] : memref<16x128x128xf32, #tpu.memory_space<vmem>>, vector<1x128x128xf32>
    %69 = vector.shape_cast %68 : vector<1x128x128xf32> to vector<128x128xf32>
    %cst_68 = arith.constant dense<0.000000e+00> : vector<132x128xf32>
    %70 = tpu.matmul %67, %69, %cst_68 {dimension_numbers = #tpu.dot_dimension_numbers<[1], [0], [0], [1], [0, 0, 1, 1], [], []>} : vector<132x128xf32>, vector<128x128xf32>, vector<132x128xf32> -> vector<132x128xf32>
    %71 = arith.addf %66, %70 : vector<132x128xf32>
    %c28 = arith.constant 28 : index
    %c0_69 = arith.constant 0 : index
    %72 = vector.load %arg9[%c28, %c0_69] : memref<162x128xf32, #tpu.memory_space<vmem>>, vector<132x128xf32>
    %c13 = arith.constant 13 : index
    %c0_70 = arith.constant 0 : index
    %c0_71 = arith.constant 0 : index
    %73 = vector.load %arg4[%c13, %c0_70, %c0_71] : memref<16x128x128xf32, #tpu.memory_space<vmem>>, vector<1x128x128xf32>
    %74 = vector.shape_cast %73 : vector<1x128x128xf32> to vector<128x128xf32>
    %cst_72 = arith.constant dense<0.000000e+00> : vector<132x128xf32>
    %75 = tpu.matmul %72, %74, %cst_72 {dimension_numbers = #tpu.dot_dimension_numbers<[1], [0], [0], [1], [0, 0, 1, 1], [], []>} : vector<132x128xf32>, vector<128x128xf32>, vector<132x128xf32> -> vector<132x128xf32>
    %76 = arith.addf %71, %75 : vector<132x128xf32>
    %c29 = arith.constant 29 : index
    %c0_73 = arith.constant 0 : index
    %77 = vector.load %arg9[%c29, %c0_73] : memref<162x128xf32, #tpu.memory_space<vmem>>, vector<132x128xf32>
    %c14 = arith.constant 14 : index
    %c0_74 = arith.constant 0 : index
    %c0_75 = arith.constant 0 : index
    %78 = vector.load %arg4[%c14, %c0_74, %c0_75] : memref<16x128x128xf32, #tpu.memory_space<vmem>>, vector<1x128x128xf32>
    %79 = vector.shape_cast %78 : vector<1x128x128xf32> to vector<128x128xf32>
    %cst_76 = arith.constant dense<0.000000e+00> : vector<132x128xf32>
    %80 = tpu.matmul %77, %79, %cst_76 {dimension_numbers = #tpu.dot_dimension_numbers<[1], [0], [0], [1], [0, 0, 1, 1], [], []>} : vector<132x128xf32>, vector<128x128xf32>, vector<132x128xf32> -> vector<132x128xf32>
    %81 = arith.addf %76, %80 : vector<132x128xf32>
    %c30 = arith.constant 30 : index
    %c0_77 = arith.constant 0 : index
    %82 = vector.load %arg9[%c30, %c0_77] : memref<162x128xf32, #tpu.memory_space<vmem>>, vector<132x128xf32>
    %c15 = arith.constant 15 : index
    %c0_78 = arith.constant 0 : index
    %c0_79 = arith.constant 0 : index
    %83 = vector.load %arg4[%c15, %c0_78, %c0_79] : memref<16x128x128xf32, #tpu.memory_space<vmem>>, vector<1x128x128xf32>
    %84 = vector.shape_cast %83 : vector<1x128x128xf32> to vector<128x128xf32>
    %cst_80 = arith.constant dense<0.000000e+00> : vector<132x128xf32>
    %85 = tpu.matmul %82, %84, %cst_80 {dimension_numbers = #tpu.dot_dimension_numbers<[1], [0], [0], [1], [0, 0, 1, 1], [], []>} : vector<132x128xf32>, vector<128x128xf32>, vector<132x128xf32> -> vector<132x128xf32>
    %86 = arith.addf %81, %85 : vector<132x128xf32>
    %c0_81 = arith.constant 0 : index
    %c0_82 = arith.constant 0 : index
    %87 = vector.load %arg5[%c0_81, %c0_82] : memref<1x128xf32, #tpu.memory_space<vmem>>, vector<1x128xf32>
    %88 = vector.broadcast %87 : vector<1x128xf32> to vector<132x128xf32>
    %89 = arith.addf %86, %88 : vector<132x128xf32>
    %c0_83 = arith.constant 0 : index
    %c0_84 = arith.constant 0 : index
    %90 = vector.load %arg10[%c0_83, %c0_84] : memref<132x128xf32, #tpu.memory_space<vmem>>, vector<132x128xf32>
    tpu.vector_store %arg10[%c0_83, %c0_84], %89 {strides = array<i32>} : memref<132x128xf32, #tpu.memory_space<vmem>>, vector<132x128xf32>,
    %c0_85 = arith.constant 0 : index
    %c0_86 = arith.constant 0 : index
    %91 = vector.load %arg10[%c0_85, %c0_86] : memref<132x128xf32, #tpu.memory_space<vmem>>, vector<122x128xf32>
    %c0_87 = arith.constant 0 : index
    %c0_88 = arith.constant 0 : index
    %c0_89 = arith.constant 0 : index
    %92 = vector.load %arg6[%c0_87, %c0_88, %c0_89] : memref<4x128x128xf32, #tpu.memory_space<vmem>>, vector<1x128x128xf32>
    %93 = vector.shape_cast %92 : vector<1x128x128xf32> to vector<128x128xf32>
    %cst_90 = arith.constant dense<0.000000e+00> : vector<122x128xf32>
    %94 = tpu.matmul %91, %93, %cst_90 {dimension_numbers = #tpu.dot_dimension_numbers<[1], [0], [0], [1], [0, 0, 1, 1], [], []>} : vector<122x128xf32>, vector<128x128xf32>, vector<122x128xf32> -> vector<122x128xf32>
    %c1_91 = arith.constant 1 : index
    %c0_92 = arith.constant 0 : index
    %95 = vector.load %arg10[%c1_91, %c0_92] : memref<132x128xf32, #tpu.memory_space<vmem>>, vector<122x128xf32>
    %c1_93 = arith.constant 1 : index
    %c0_94 = arith.constant 0 : index
    %c0_95 = arith.constant 0 : index
    %96 = vector.load %arg6[%c1_93, %c0_94, %c0_95] : memref<4x128x128xf32, #tpu.memory_space<vmem>>, vector<1x128x128xf32>
    %97 = vector.shape_cast %96 : vector<1x128x128xf32> to vector<128x128xf32>
    %cst_96 = arith.constant dense<0.000000e+00> : vector<122x128xf32>
    %98 = tpu.matmul %95, %97, %cst_96 {dimension_numbers = #tpu.dot_dimension_numbers<[1], [0], [0], [1], [0, 0, 1, 1], [], []>} : vector<122x128xf32>, vector<128x128xf32>, vector<122x128xf32> -> vector<122x128xf32>
    %99 = arith.addf %94, %98 : vector<122x128xf32>
    %c9_97 = arith.constant 9 : index
    %c0_98 = arith.constant 0 : index
    %100 = vector.load %arg10[%c9_97, %c0_98] : memref<132x128xf32, #tpu.memory_space<vmem>>, vector<122x128xf32>
    %c2_99 = arith.constant 2 : index
    %c0_100 = arith.constant 0 : index
    %c0_101 = arith.constant 0 : index
    %101 = vector.load %arg6[%c2_99, %c0_100, %c0_101] : memref<4x128x128xf32, #tpu.memory_space<vmem>>, vector<1x128x128xf32>
    %102 = vector.shape_cast %101 : vector<1x128x128xf32> to vector<128x128xf32>
    %cst_102 = arith.constant dense<0.000000e+00> : vector<122x128xf32>
    %103 = tpu.matmul %100, %102, %cst_102 {dimension_numbers = #tpu.dot_dimension_numbers<[1], [0], [0], [1], [0, 0, 1, 1], [], []>} : vector<122x128xf32>, vector<128x128xf32>, vector<122x128xf32> -> vector<122x128xf32>
    %104 = arith.addf %99, %103 : vector<122x128xf32>
    %c10_103 = arith.constant 10 : index
    %c0_104 = arith.constant 0 : index
    %105 = vector.load %arg10[%c10_103, %c0_104] : memref<132x128xf32, #tpu.memory_space<vmem>>, vector<122x128xf32>
    %c3_105 = arith.constant 3 : index
    %c0_106 = arith.constant 0 : index
    %c0_107 = arith.constant 0 : index
    %106 = vector.load %arg6[%c3_105, %c0_106, %c0_107] : memref<4x128x128xf32, #tpu.memory_space<vmem>>, vector<1x128x128xf32>
    %107 = vector.shape_cast %106 : vector<1x128x128xf32> to vector<128x128xf32>
    %cst_108 = arith.constant dense<0.000000e+00> : vector<122x128xf32>
    %108 = tpu.matmul %105, %107, %cst_108 {dimension_numbers = #tpu.dot_dimension_numbers<[1], [0], [0], [1], [0, 0, 1, 1], [], []>} : vector<122x128xf32>, vector<128x128xf32>, vector<122x128xf32> -> vector<122x128xf32>
    %109 = arith.addf %104, %108 : vector<122x128xf32>
    %c0_109 = arith.constant 0 : index
    %c0_110 = arith.constant 0 : index
    %110 = vector.load %arg7[%c0_109, %c0_110] : memref<1x128xf32, #tpu.memory_space<vmem>>, vector<1x128xf32>
    %111 = vector.broadcast %110 : vector<1x128xf32> to vector<122x128xf32>
    %112 = arith.addf %109, %111 : vector<122x128xf32>
    %c0_111 = arith.constant 0 : index
    %c0_112 = arith.constant 0 : index
    %c0_113 = arith.constant 0 : index
    %113 = vector.load %arg8[%c0_111, %c0_112, %c0_113] : memref<1x122x128xf32, #tpu.memory_space<vmem>>, vector<1x122x128xf32>
    %114 = vector.shape_cast %113 : vector<1x122x128xf32> to vector<122x128xf32>
    %115 = vector.shape_cast %112 : vector<122x128xf32> to vector<1x122x128xf32>
    tpu.vector_store %arg8[%c0_111, %c0_112, %c0_113], %115 {strides = array<i32>} : memref<1x122x128xf32, #tpu.memory_space<vmem>>, vector<1x122x128xf32>,
    return
  }
  func.func @transform_0(%arg0: i32) -> (i32, i32, i32) {
    %c0_i32 = arith.constant 0 : i32
    %c0_i32_0 = arith.constant 0 : i32
    %c0_i32_1 = arith.constant 0 : i32
    return %arg0, %c0_i32, %c0_i32_0 : i32, i32, i32
  }
  func.func @transform_1(%arg0: i32) -> (i32, i32) {
    %c0_i32 = arith.constant 0 : i32
    %c0_i32_0 = arith.constant 0 : i32
    %c0_i32_1 = arith.constant 0 : i32
    return %c0_i32, %c0_i32_0 : i32, i32
  }
  func.func @transform_2(%arg0: i32) -> (i32, i32) {
    %c0_i32 = arith.constant 0 : i32
    %c0_i32_0 = arith.constant 0 : i32
    %c0_i32_1 = arith.constant 0 : i32
    return %c0_i32, %c0_i32_0 : i32, i32
  }
  func.func @transform_3(%arg0: i32) -> (i32, i32, i32) {
    %c0_i32 = arith.constant 0 : i32
    %c0_i32_0 = arith.constant 0 : i32
    %c0_i32_1 = arith.constant 0 : i32
    %c0_i32_2 = arith.constant 0 : i32
    return %c0_i32, %c0_i32_0, %c0_i32_1 : i32, i32, i32
  }
  func.func @transform_4(%arg0: i32) -> (i32, i32) {
    %c0_i32 = arith.constant 0 : i32
    %c0_i32_0 = arith.constant 0 : i32
    %c0_i32_1 = arith.constant 0 : i32
    return %c0_i32, %c0_i32_0 : i32, i32
  }
  func.func @transform_5(%arg0: i32) -> (i32, i32, i32) {
    %c0_i32 = arith.constant 0 : i32
    %c0_i32_0 = arith.constant 0 : i32
    %c0_i32_1 = arith.constant 0 : i32
    %c0_i32_2 = arith.constant 0 : i32
    return %c0_i32, %c0_i32_0, %c0_i32_1 : i32, i32, i32
  }
  func.func @transform_6(%arg0: i32) -> (i32, i32) {
    %c0_i32 = arith.constant 0 : i32
    %c0_i32_0 = arith.constant 0 : i32
    %c0_i32_1 = arith.constant 0 : i32
    return %c0_i32, %c0_i32_0 : i32, i32
  }
  func.func @transform_7(%arg0: i32) -> (i32, i32, i32) {
    %c0_i32 = arith.constant 0 : i32
    %c0_i32_0 = arith.constant 0 : i32
    %c0_i32_1 = arith.constant 0 : i32
    return %arg0, %c0_i32, %c0_i32_0 : i32, i32, i32
  }
}

</mosaic_0001>

<llo_original>
// kernel: _lambda_.1
$region0: #{_lambda_.1}
  #allocation0 [shape = 'u32[]', space=smem, size = 0x4, offset = 0x4, fixed_abs, tag = 'smem constant byte address 0x4 - core index']
  #allocation1 [shape = 'u32[144,128]{1,0:T(1,128)}', space=vmem, size = 0x12000, scoped, tag = 'internal scratch']
  #allocation2 [shape = 'f32[162,128]{1,0:T(8,128)}', space=vmem, size = 0x15000, scoped, tag = 'scratch operand']
  #allocation3 [shape = 'f32[132,128]{1,0:T(8,128)}', space=vmem, size = 0x11000, scoped, tag = 'scratch operand']
  %s0 = inlined_call_operand.vmem [shape: f32[1,162,256], index: 0, kind: input, shape index: {}]
  %s1 = inlined_call_operand.vmem [shape: f32[256,128], index: 1, kind: input, shape index: {}]
  %s2 = inlined_call_operand.vmem [shape: f32[1,128], index: 2, kind: input, shape index: {}]
  %s3 = inlined_call_operand.vmem [shape: f32[16,128,128], index: 3, kind: input, shape index: {}]
  %s4 = inlined_call_operand.vmem [shape: f32[1,128], index: 4, kind: input, shape index: {}]
  %s5 = inlined_call_operand.vmem [shape: f32[4,128,128], index: 5, kind: input, shape index: {}]
  %s6 = inlined_call_operand.vmem [shape: f32[1,128], index: 6, kind: input, shape index: {}]
  %s7 = inlined_call_operand.vmem [shape: f32[1,122,128], index: 7, kind: output, shape index: {}]
  %s8 = sld [smem:[#allocation0]]
  $region38: #{_lambda_.1} parent=0
    _
  %s10 = ssub.s32 1, %s8
  %s11 = scalar_select 0, %s10, %s8
  // Predicated region
  $region2: #{_lambda_.1} parent=0 // pred_check
    _
  $region3: #{_lambda_.1} parent=0 // pred_check_branch
    %13 = sbr.rel (0) target = $region5
  $region4: #{_lambda_.1} parent=0 // pred_region
    _
  $region5: #{_lambda_.1} parent=0 // pred_fallthru
    _
  // Predicated region
  $region6: #{_lambda_.1} parent=0 // pred_check
    _
  $region7: #{_lambda_.1} parent=0 // pred_check_branch
    %15 = sbr.rel (0) target = $region9
  $region8: #{_lambda_.1} parent=0 // pred_region
    _
  $region9: #{_lambda_.1} parent=0 // pred_fallthru
    _
  // Predicated region
  $region10: #{_lambda_.1} parent=0 // pred_check
    _
  $region11: #{_lambda_.1} parent=0 // pred_check_branch
    %17 = sbr.rel (0) target = $region13
  $region12: #{_lambda_.1} parent=0 // pred_region
    _
  $region13: #{_lambda_.1} parent=0 // pred_fallthru
    _
  // Predicated region
  $region14: #{_lambda_.1} parent=0 // pred_check
    _
  $region15: #{_lambda_.1} parent=0 // pred_check_branch
    %19 = sbr.rel (0) target = $region17
  $region16: #{_lambda_.1} parent=0 // pred_region
    _
  $region17: #{_lambda_.1} parent=0 // pred_fallthru
    _
  // Predicated region
  $region18: #{_lambda_.1} parent=0 // pred_check
    _
  $region19: #{_lambda_.1} parent=0 // pred_check_branch
    %21 = sbr.rel (0) target = $region21
  $region20: #{_lambda_.1} parent=0 // pred_region
    _
  $region21: #{_lambda_.1} parent=0 // pred_fallthru
    _
  // Predicated region
  $region22: #{_lambda_.1} parent=0 // pred_check
    _
  $region23: #{_lambda_.1} parent=0 // pred_check_branch
    %23 = sbr.rel (0) target = $region25
  $region24: #{_lambda_.1} parent=0 // pred_region
    _
  $region25: #{_lambda_.1} parent=0 // pred_fallthru
    _
  // Predicated region
  $region26: #{_lambda_.1} parent=0 // pred_check
    _
  $region27: #{_lambda_.1} parent=0 // pred_check_branch
    %25 = sbr.rel (0) target = $region29
  $region28: #{_lambda_.1} parent=0 // pred_region
    _
  $region29: #{_lambda_.1} parent=0 // pred_fallthru
    _
  %v26 = vld [vmem:[%s0] sm:$0xff]
  %v27 = vld [vmem:[%s0 + $0x8] sm:$0xff]
  %v28 = vld [vmem:[%s0 + $0x10] sm:$0xff]
  %v29 = vld [vmem:[%s0 + $0x18] sm:$0xff]
  %v30 = vld [vmem:[%s0 + $0x20] sm:$0xff]
  %v31 = vld [vmem:[%s0 + $0x28] sm:$0xff]
  %v32 = vld [vmem:[%s0 + $0x30] sm:$0xff]
  %v33 = vld [vmem:[%s0 + $0x38] sm:$0xff]
  %v34 = vld [vmem:[%s0 + $0x40] sm:$0xff]
  %v35 = vld [vmem:[%s0 + $0x48] sm:$0xff]
  %v36 = vld [vmem:[%s0 + $0x50] sm:$0xff]
  %v37 = vld [vmem:[%s0 + $0x58] sm:$0xff]
  %v38 = vld [vmem:[%s0 + $0x60] sm:$0xff]
  %v39 = vld [vmem:[%s0 + $0x68] sm:$0xff]
  %v40 = vld [vmem:[%s0 + $0x70] sm:$0xff]
  %v41 = vld [vmem:[%s0 + $0x78] sm:$0xff]
  %v42 = vld [vmem:[%s0 + $0x80] sm:$0xff]
  %v43 = vld [vmem:[%s0 + $0x88] sm:$0xff]
  %v44 = vld [vmem:[%s0 + $0x90] sm:$0xff]
  %v45 = vld [vmem:[%s0 + $0x98] sm:$0xff]
  %v46 = vld [vmem:[%s0 + $0xa0] sm:$0xff]
  %v47 = vld [vmem:[%s0 + $0xa8] sm:$0xff]
  %v48 = vld [vmem:[%s0 + $0xb0] sm:$0xff]
  %v49 = vld [vmem:[%s0 + $0xb8] sm:$0xff]
  %v50 = vld [vmem:[%s0 + $0xc0] sm:$0xff]
  %v51 = vld [vmem:[%s0 + $0xc8] sm:$0xff]
  %v52 = vld [vmem:[%s0 + $0xd0] sm:$0xff]
  %v53 = vld [vmem:[%s0 + $0xd8] sm:$0xff]
  %v54 = vld [vmem:[%s0 + $0xe0] sm:$0xff]
  %v55 = vld [vmem:[%s0 + $0xe8] sm:$0xff]
  %v56 = vld [vmem:[%s0 + $0xf0] sm:$0xff]
  %v57 = vld [vmem:[%s0 + $0xf8] sm:$0xff]
  %v58 = vld [vmem:[%s0 + $0x100] sm:$0xff]
  %v59 = vld [vmem:[%s0 + $0x108] sm:$0xff]
  %v60 = vld [vmem:[%s0 + $0x110] sm:$0xff]
  %v61 = vld [vmem:[%s0 + $0x118] sm:$0xff]
  %v62 = vld [vmem:[%s0 + $0x120] sm:$0xff]
  %v63 = vld [vmem:[%s0 + $0x128] sm:$0xff]
  %v64 = vld [vmem:[%s0 + $0x130] sm:$0xff]
  %v65 = vld [vmem:[%s0 + $0x138] sm:$0xff]
  %v66 = vld [vmem:[%s0 + $0x140] sm:$0x3]
  %v67 = vld [vmem:[%s0 + $0x148] sm:$0x3]
  %v68 = vld [vmem:[%s1] sm:$0xff]
  %v69 = vld [vmem:[%s1 + $0x8] sm:$0xff]
  %v70 = vld [vmem:[%s1 + $0x10] sm:$0xff]
  %v71 = vld [vmem:[%s1 + $0x18] sm:$0xff]
  %v72 = vld [vmem:[%s1 + $0x20] sm:$0xff]
  %v73 = vld [vmem:[%s1 + $0x28] sm:$0xff]
  %v74 = vld [vmem:[%s1 + $0x30] sm:$0xff]
  %v75 = vld [vmem:[%s1 + $0x38] sm:$0xff]
  %v76 = vld [vmem:[%s1 + $0x40] sm:$0xff]
  %v77 = vld [vmem:[%s1 + $0x48] sm:$0xff]
  %v78 = vld [vmem:[%s1 + $0x50] sm:$0xff]
  %v79 = vld [vmem:[%s1 + $0x58] sm:$0xff]
  %v80 = vld [vmem:[%s1 + $0x60] sm:$0xff]
  %v81 = vld [vmem:[%s1 + $0x68] sm:$0xff]
  %v82 = vld [vmem:[%s1 + $0x70] sm:$0xff]
  %v83 = vld [vmem:[%s1 + $0x78] sm:$0xff]
  %v84 = vld [vmem:[%s1 + $0x80] sm:$0xff]
  %v85 = vld [vmem:[%s1 + $0x88] sm:$0xff]
  %v86 = vld [vmem:[%s1 + $0x90] sm:$0xff]
  %v87 = vld [vmem:[%s1 + $0x98] sm:$0xff]
  %v88 = vld [vmem:[%s1 + $0xa0] sm:$0xff]
  %v89 = vld [vmem:[%s1 + $0xa8] sm:$0xff]
  %v90 = vld [vmem:[%s1 + $0xb0] sm:$0xff]
  %v91 = vld [vmem:[%s1 + $0xb8] sm:$0xff]
  %v92 = vld [vmem:[%s1 + $0xc0] sm:$0xff]
  %v93 = vld [vmem:[%s1 + $0xc8] sm:$0xff]
  %v94 = vld [vmem:[%s1 + $0xd0] sm:$0xff]
  %v95 = vld [vmem:[%s1 + $0xd8] sm:$0xff]
  %v96 = vld [vmem:[%s1 + $0xe0] sm:$0xff]
  %v97 = vld [vmem:[%s1 + $0xe8] sm:$0xff]
  %v98 = vld [vmem:[%s1 + $0xf0] sm:$0xff]
  %v99 = vld [vmem:[%s1 + $0xf8] sm:$0xff]
  %v100 = vld [vmem:[%s2] sm:$0x1]
  %v102 = vlaneseq
  %v103 = vshrl.u32 %v102, 7
  %v104 = vsub.s32 0, %v103
  %v105 = vrot.slane %v100, %v104
  %107 = vmatprep.subr.mxu0 0.0
  %108 = vmatpush1.msra.mxu0 %v83
  %109 = vmatprep.subr.mxu0 0.0
  %110 = vmatpush1.msra.mxu0 %v82
  %111 = vmatprep.subr.mxu0 0.0
  %112 = vmatpush1.msra.mxu0 %v81
  %113 = vmatprep.subr.mxu0 0.0
  %114 = vmatpush1.msra.mxu0 %v80
  %115 = vmatprep.subr.mxu0 0.0
  %116 = vmatpush1.msra.mxu0 %v79
  %117 = vmatprep.subr.mxu0 0.0
  %118 = vmatpush1.msra.mxu0 %v78
  %119 = vmatprep.subr.mxu0 0.0
  %120 = vmatpush1.msra.mxu0 %v77
  %121 = vmatprep.subr.mxu0 0.0
  %122 = vmatpush1.msra.mxu0 %v76
  %123 = vmatprep.subr.mxu0 0.0
  %124 = vmatpush1.msra.mxu0 %v75
  %125 = vmatprep.subr.mxu0 0.0
  %126 = vmatpush1.msra.mxu0 %v74
  %127 = vmatprep.subr.mxu0 0.0
  %128 = vmatpush1.msra.mxu0 %v73
  %129 = vmatprep.subr.mxu0 0.0
  %130 = vmatpush1.msra.mxu0 %v72
  %131 = vmatprep.subr.mxu0 0.0
  %132 = vmatpush1.msra.mxu0 %v71
  %133 = vmatprep.subr.mxu0 0.0
  %134 = vmatpush1.msra.mxu0 %v70
  %135 = vmatprep.subr.mxu0 0.0
  %136 = vmatpush1.msra.mxu0 %v69
  %137 = vmatprep.subr.mxu0 0.0
  %138 = vmatpush1.msra.mxu0 %v68
  %139 = vmatprep.subr.mxu0 0.0
  %140 = vmatpush2.msra.mxu0 %v99
  %141 = vmatprep.subr.mxu0 0.0
  %142 = vmatpush2.msra.mxu0 %v98
  %143 = vmatprep.subr.mxu0 0.0
  %144 = vmatpush2.msra.mxu0 %v97
  %145 = vmatprep.subr.mxu0 0.0
  %146 = vmatpush2.msra.mxu0 %v96
  %147 = vmatprep.subr.mxu0 0.0
  %148 = vmatpush2.msra.mxu0 %v95
  %149 = vmatprep.subr.mxu0 0.0
  %150 = vmatpush2.msra.mxu0 %v94
  %151 = vmatprep.subr.mxu0 0.0
  %152 = vmatpush2.msra.mxu0 %v93
  %153 = vmatprep.subr.mxu0 0.0
  %154 = vmatpush2.msra.mxu0 %v92
  %155 = vmatprep.subr.mxu0 0.0
  %156 = vmatpush2.msra.mxu0 %v91
  %157 = vmatprep.subr.mxu0 0.0
  %158 = vmatpush2.msra.mxu0 %v90
  %159 = vmatprep.subr.mxu0 0.0
  %160 = vmatpush2.msra.mxu0 %v89
  %161 = vmatprep.subr.mxu0 0.0
  %162 = vmatpush2.msra.mxu0 %v88
  %163 = vmatprep.subr.mxu0 0.0
  %164 = vmatpush2.msra.mxu0 %v87
  %165 = vmatprep.subr.mxu0 0.0
  %166 = vmatpush2.msra.mxu0 %v86
  %167 = vmatprep.subr.mxu0 0.0
  %168 = vmatpush2.msra.mxu0 %v85
  %169 = vmatprep.subr.mxu0 0.0
  %170 = vmatpush2.msra.mxu0 %v84
  %171 = vmatprep.mubr.f32.mxu0 %v27
  %172 = vmatmul.mubr.f32.gmra.mxu0 %v26
  %v173 = vpop.f32.mrf.mxu0
  %v174 = vadd.f32 %v105, %v173
  %v175 = vpop.f32.mrf.mxu0
  %176 = vmatprep.mubr.f32.mxu0 %v29
  %177 = vmatmul.mubr.f32.gmra.mxu0 %v28
  %v178 = vpop.f32.mrf.mxu0
  %v179 = vadd.f32 %v105, %v178
  %v180 = vpop.f32.mrf.mxu0
  %181 = vmatprep.mubr.f32.mxu0 %v31
  %182 = vmatmul.mubr.f32.gmra.mxu0 %v30
  %v183 = vpop.f32.mrf.mxu0
  %v184 = vadd.f32 %v105, %v183
  %v185 = vpop.f32.mrf.mxu0
  %186 = vmatprep.mubr.f32.mxu0 %v33
  %187 = vmatmul.mubr.f32.gmra.mxu0 %v32
  %v188 = vpop.f32.mrf.mxu0
  %v189 = vadd.f32 %v105, %v188
  %v190 = vpop.f32.mrf.mxu0
  %191 = vmatprep.mubr.f32.mxu0 %v35
  %192 = vmatmul.mubr.f32.gmra.mxu0 %v34
  %v193 = vpop.f32.mrf.mxu0
  %v194 = vadd.f32 %v105, %v193
  %v195 = vpop.f32.mrf.mxu0
  %196 = vmatprep.mubr.f32.mxu0 %v37
  %197 = vmatmul.mubr.f32.gmra.mxu0 %v36
  %v198 = vpop.f32.mrf.mxu0
  %v199 = vadd.f32 %v105, %v198
  %v200 = vpop.f32.mrf.mxu0
  %201 = vmatprep.mubr.f32.mxu0 %v39
  %202 = vmatmul.mubr.f32.gmra.mxu0 %v38
  %v203 = vpop.f32.mrf.mxu0
  %v204 = vadd.f32 %v105, %v203
  %v205 = vpop.f32.mrf.mxu0
  %206 = vmatprep.mubr.f32.mxu0 %v41
  %207 = vmatmul.mubr.f32.gmra.mxu0 %v40
  %v208 = vpop.f32.mrf.mxu0
  %v209 = vadd.f32 %v105, %v208
  %v210 = vpop.f32.mrf.mxu0
  %211 = vmatprep.mubr.f32.mxu0 %v43
  %212 = vmatmul.mubr.f32.gmra.mxu0 %v42
  %v213 = vpop.f32.mrf.mxu0
  %v214 = vadd.f32 %v105, %v213
  %v215 = vpop.f32.mrf.mxu0
  %216 = vmatprep.mubr.f32.mxu0 %v45
  %217 = vmatmul.mubr.f32.gmra.mxu0 %v44
  %v218 = vpop.f32.mrf.mxu0
  %v219 = vadd.f32 %v105, %v218
  %v220 = vpop.f32.mrf.mxu0
  %221 = vmatprep.mubr.f32.mxu0 %v47
  %222 = vmatmul.mubr.f32.gmra.mxu0 %v46
  %v223 = vpop.f32.mrf.mxu0
  %v224 = vadd.f32 %v105, %v223
  %v225 = vpop.f32.mrf.mxu0
  %226 = vmatprep.mubr.f32.mxu0 %v49
  %227 = vmatmul.mubr.f32.gmra.mxu0 %v48
  %v228 = vpop.f32.mrf.mxu0
  %v229 = vadd.f32 %v105, %v228
  %v230 = vpop.f32.mrf.mxu0
  %231 = vmatprep.mubr.f32.mxu0 %v51
  %232 = vmatmul.mubr.f32.gmra.mxu0 %v50
  %v233 = vpop.f32.mrf.mxu0
  %v234 = vadd.f32 %v105, %v233
  %v235 = vpop.f32.mrf.mxu0
  %236 = vmatprep.mubr.f32.mxu0 %v53
  %237 = vmatmul.mubr.f32.gmra.mxu0 %v52
  %v238 = vpop.f32.mrf.mxu0
  %v239 = vadd.f32 %v105, %v238
  %v240 = vpop.f32.mrf.mxu0
  %241 = vmatprep.mubr.f32.mxu0 %v55
  %242 = vmatmul.mubr.f32.gmra.mxu0 %v54
  %v243 = vpop.f32.mrf.mxu0
  %v244 = vadd.f32 %v105, %v243
  %v245 = vpop.f32.mrf.mxu0
  %246 = vmatprep.mubr.f32.mxu0 %v57
  %247 = vmatmul.mubr.f32.gmra.mxu0 %v56
  %v248 = vpop.f32.mrf.mxu0
  %v249 = vadd.f32 %v105, %v248
  %v250 = vpop.f32.mrf.mxu0
  %251 = vmatprep.mubr.f32.mxu0 %v59
  %252 = vmatmul.mubr.f32.gmra.mxu0 %v58
  %v253 = vpop.f32.mrf.mxu0
  %v254 = vadd.f32 %v105, %v253
  %v255 = vpop.f32.mrf.mxu0
  %256 = vmatprep.mubr.f32.mxu0 %v61
  %257 = vmatmul.mubr.f32.gmra.mxu0 %v60
  %v258 = vpop.f32.mrf.mxu0
  %v259 = vadd.f32 %v105, %v258
  %v260 = vpop.f32.mrf.mxu0
  %261 = vmatprep.mubr.f32.mxu0 %v63
  %262 = vmatmul.mubr.f32.gmra.mxu0 %v62
  %v263 = vpop.f32.mrf.mxu0
  %v264 = vadd.f32 %v105, %v263
  %v265 = vpop.f32.mrf.mxu0
  %266 = vmatprep.mubr.f32.mxu0 %v65
  %267 = vmatmul.mubr.f32.gmra.mxu0 %v64
  %v268 = vpop.f32.mrf.mxu0
  %v269 = vadd.f32 %v105, %v268
  %v270 = vpop.f32.mrf.mxu0
  %271 = vmatprep.mubr.f32.mxu0 %v67
  %272 = vmatmul.mubr.f32.gmra.mxu0 %v66
  %v273 = vpop.f32.mrf.mxu0
  %v274 = vadd.f32 %v105, %v273
  %v275 = vpop.f32.mrf.mxu0
  %276 = vdwg.mxu0
  %277 = vst [vmem:[#allocation2] sm:$0xff] %v174
  %278 = vst [vmem:[#allocation2 + $0x8] sm:$0xff] %v179
  %279 = vst [vmem:[#allocation2 + $0x10] sm:$0xff] %v184
  %280 = vst [vmem:[#allocation2 + $0x18] sm:$0xff] %v189
  %281 = vst [vmem:[#allocation2 + $0x20] sm:$0xff] %v194
  %282 = vst [vmem:[#allocation2 + $0x28] sm:$0xff] %v199
  %283 = vst [vmem:[#allocation2 + $0x30] sm:$0xff] %v204
  %284 = vst [vmem:[#allocation2 + $0x38] sm:$0xff] %v209
  %285 = vst [vmem:[#allocation2 + $0x40] sm:$0xff] %v214
  %286 = vst [vmem:[#allocation2 + $0x48] sm:$0xff] %v219
  %287 = vst [vmem:[#allocation2 + $0x50] sm:$0xff] %v224
  %288 = vst [vmem:[#allocation2 + $0x58] sm:$0xff] %v229
  %289 = vst [vmem:[#allocation2 + $0x60] sm:$0xff] %v234
  %290 = vst [vmem:[#allocation2 + $0x68] sm:$0xff] %v239
  %291 = vst [vmem:[#allocation2 + $0x70] sm:$0xff] %v244
  %292 = vst [vmem:[#allocation2 + $0x78] sm:$0xff] %v249
  %293 = vst [vmem:[#allocation2 + $0x80] sm:$0xff] %v254
  %294 = vst [vmem:[#allocation2 + $0x88] sm:$0xff] %v259
  %295 = vst [vmem:[#allocation2 + $0x90] sm:$0xff] %v264
  %296 = vst [vmem:[#allocation2 + $0x98] sm:$0xff] %v269
  %297 = vst [vmem:[#allocation2 + $0xa0] sm:$0x3] %v274
  %v298 = vld [vmem:[#allocation2] sm:$0xff]
  %v299 = vld [vmem:[#allocation2 + $0x8] sm:$0xff]
  %v300 = vld [vmem:[#allocation2 + $0x10] sm:$0xff]
  %v301 = vld [vmem:[#allocation2 + $0x18] sm:$0xff]
  %v302 = vld [vmem:[#allocation2 + $0x20] sm:$0xff]
  %v303 = vld [vmem:[#allocation2 + $0x28] sm:$0xff]
  %v304 = vld [vmem:[#allocation2 + $0x30] sm:$0xff]
  %v305 = vld [vmem:[#allocation2 + $0x38] sm:$0xff]
  %v306 = vld [vmem:[#allocation2 + $0x40] sm:$0xff]
  %v307 = vld [vmem:[#allocation2 + $0x48] sm:$0xff]
  %v308 = vld [vmem:[#allocation2 + $0x50] sm:$0xff]
  %v309 = vld [vmem:[#allocation2 + $0x58] sm:$0xff]
  %v310 = vld [vmem:[#allocation2 + $0x60] sm:$0xff]
  %v311 = vld [vmem:[#allocation2 + $0x68] sm:$0xff]
  %v312 = vld [vmem:[#allocation2 + $0x70] sm:$0xff]
  %v313 = vld [vmem:[#allocation2 + $0x78] sm:$0xff]
  %v314 = vld [vmem:[#allocation2 + $0x80] sm:$0xf]
  %v315 = vld [vmem:[%s3] sm:$0xff]
  %v316 = vld [vmem:[%s3 + $0x8] sm:$0xff]
  %v317 = vld [vmem:[%s3 + $0x10] sm:$0xff]
  %v318 = vld [vmem:[%s3 + $0x18] sm:$0xff]
  %v319 = vld [vmem:[%s3 + $0x20] sm:$0xff]
  %v320 = vld [vmem:[%s3 + $0x28] sm:$0xff]
  %v321 = vld [vmem:[%s3 + $0x30] sm:$0xff]
  %v322 = vld [vmem:[%s3 + $0x38] sm:$0xff]
  %v323 = vld [vmem:[%s3 + $0x40] sm:$0xff]
  %v324 = vld [vmem:[%s3 + $0x48] sm:$0xff]
  %v325 = vld [vmem:[%s3 + $0x50] sm:$0xff]
  %v326 = vld [vmem:[%s3 + $0x58] sm:$0xff]
  %v327 = vld [vmem:[%s3 + $0x60] sm:$0xff]
  %v328 = vld [vmem:[%s3 + $0x68] sm:$0xff]
  %v329 = vld [vmem:[%s3 + $0x70] sm:$0xff]
  %v330 = vld [vmem:[%s3 + $0x78] sm:$0xff]
  %v331 = vld [vmem:[#allocation2 + $0x1] sm:$0xff]
  %v332 = vld [vmem:[#allocation2 + $0x9] sm:$0xff]
  %v333 = vld [vmem:[#allocation2 + $0x11] sm:$0xff]
  %v334 = vld [vmem:[#allocation2 + $0x19] sm:$0xff]
  %v335 = vld [vmem:[#allocation2 + $0x21] sm:$0xff]
  %v336 = vld [vmem:[#allocation2 + $0x29] sm:$0xff]
  %v337 = vld [vmem:[#allocation2 + $0x31] sm:$0xff]
  %v338 = vld [vmem:[#allocation2 + $0x39] sm:$0xff]
  %v339 = vld [vmem:[#allocation2 + $0x41] sm:$0xff]
  %v340 = vld [vmem:[#allocation2 + $0x49] sm:$0xff]
  %v341 = vld [vmem:[#allocation2 + $0x51] sm:$0xff]
  %v342 = vld [vmem:[#allocation2 + $0x59] sm:$0xff]
  %v343 = vld [vmem:[#allocation2 + $0x61] sm:$0xff]
  %v344 = vld [vmem:[#allocation2 + $0x69] sm:$0xff]
  %v345 = vld [vmem:[#allocation2 + $0x71] sm:$0xff]
  %v346 = vld [vmem:[#allocation2 + $0x79] sm:$0xff]
  %v347 = vld [vmem:[#allocation2 + $0x81] sm:$0xf]
  %s348 = scalar_lea.vmem %s3, 128
  %v349 = vld [vmem:[%s348] sm:$0xff]
  %v350 = vld [vmem:[%s348 + $0x8] sm:$0xff]
  %v351 = vld [vmem:[%s348 + $0x10] sm:$0xff]
  %v352 = vld [vmem:[%s348 + $0x18] sm:$0xff]
  %v353 = vld [vmem:[%s348 + $0x20] sm:$0xff]
  %v354 = vld [vmem:[%s348 + $0x28] sm:$0xff]
  %v355 = vld [vmem:[%s348 + $0x30] sm:$0xff]
  %v356 = vld [vmem:[%s348 + $0x38] sm:$0xff]
  %v357 = vld [vmem:[%s348 + $0x40] sm:$0xff]
  %v358 = vld [vmem:[%s348 + $0x48] sm:$0xff]
  %v359 = vld [vmem:[%s348 + $0x50] sm:$0xff]
  %v360 = vld [vmem:[%s348 + $0x58] sm:$0xff]
  %v361 = vld [vmem:[%s348 + $0x60] sm:$0xff]
  %v362 = vld [vmem:[%s348 + $0x68] sm:$0xff]
  %v363 = vld [vmem:[%s348 + $0x70] sm:$0xff]
  %v364 = vld [vmem:[%s348 + $0x78] sm:$0xff]
  %365 = vmatprep.subr.mxu0 0.0
  %366 = vmatpush1.msra.mxu0 %v364
  %367 = vmatprep.subr.mxu0 0.0
  %368 = vmatpush1.msra.mxu0 %v363
  %369 = vmatprep.subr.mxu0 0.0
  %370 = vmatpush1.msra.mxu0 %v362
  %371 = vmatprep.subr.mxu0 0.0
  %372 = vmatpush1.msra.mxu0 %v361
  %373 = vmatprep.subr.mxu0 0.0
  %374 = vmatpush1.msra.mxu0 %v360
  %375 = vmatprep.subr.mxu0 0.0
  %376 = vmatpush1.msra.mxu0 %v359
  %377 = vmatprep.subr.mxu0 0.0
  %378 = vmatpush1.msra.mxu0 %v358
  %379 = vmatprep.subr.mxu0 0.0
  %380 = vmatpush1.msra.mxu0 %v357
  %381 = vmatprep.subr.mxu0 0.0
  %382 = vmatpush1.msra.mxu0 %v356
  %383 = vmatprep.subr.mxu0 0.0
  %384 = vmatpush1.msra.mxu0 %v355
  %385 = vmatprep.subr.mxu0 0.0
  %386 = vmatpush1.msra.mxu0 %v354
  %387 = vmatprep.subr.mxu0 0.0
  %388 = vmatpush1.msra.mxu0 %v353
  %389 = vmatprep.subr.mxu0 0.0
  %390 = vmatpush1.msra.mxu0 %v352
  %391 = vmatprep.subr.mxu0 0.0
  %392 = vmatpush1.msra.mxu0 %v351
  %393 = vmatprep.subr.mxu0 0.0
  %394 = vmatpush1.msra.mxu0 %v350
  %395 = vmatprep.subr.mxu0 0.0
  %396 = vmatpush1.msra.mxu0 %v349
  %397 = vmatprep.subr.mxu0 0.0
  %398 = vmatpush2.msra.mxu0 0.0
  %399 = vmatprep.subr.mxu0 0.0
  %400 = vmatpush2.msra.mxu0 0.0
  %401 = vmatprep.subr.mxu0 0.0
  %402 = vmatpush2.msra.mxu0 0.0
  %403 = vmatprep.subr.mxu0 0.0
  %404 = vmatpush2.msra.mxu0 0.0
  %405 = vmatprep.subr.mxu0 0.0
  %406 = vmatpush2.msra.mxu0 0.0
  %407 = vmatprep.subr.mxu0 0.0
  %408 = vmatpush2.msra.mxu0 0.0
  %409 = vmatprep.subr.mxu0 0.0
  %410 = vmatpush2.msra.mxu0 0.0
  %411 = vmatprep.subr.mxu0 0.0
  %412 = vmatpush2.msra.mxu0 0.0
  %413 = vmatprep.subr.mxu0 0.0
  %414 = vmatpush2.msra.mxu0 0.0
  %415 = vmatprep.subr.mxu0 0.0
  %416 = vmatpush2.msra.mxu0 0.0
  %417 = vmatprep.subr.mxu0 0.0
  %418 = vmatpush2.msra.mxu0 0.0
  %419 = vmatprep.subr.mxu0 0.0
  %420 = vmatpush2.msra.mxu0 0.0
  %421 = vmatprep.subr.mxu0 0.0
  %422 = vmatpush2.msra.mxu0 0.0
  %423 = vmatprep.subr.mxu0 0.0
  %424 = vmatpush2.msra.mxu0 0.0
  %425 = vmatprep.subr.mxu0 0.0
  %426 = vmatpush2.msra.mxu0 0.0
  %427 = vmatprep.subr.mxu0 0.0
  %428 = vmatpush2.msra.mxu0 0.0
  %429 = vmatprep.mubr.f32.mxu0 0.0
  %430 = vmatmul.mubr.f32.gmra.mxu0 %v331
  %v431 = vpop.f32.mrf.mxu0
  %v432 = vadd.f32 0.0, %v431
  %v433 = vpop.f32.mrf.mxu0
  %434 = vmatprep.mubr.f32.mxu0 0.0
  %435 = vmatmul.mubr.f32.gmra.mxu0 %v332
  %v436 = vpop.f32.mrf.mxu0
  %v437 = vadd.f32 0.0, %v436
  %v438 = vpop.f32.mrf.mxu0
  %439 = vmatprep.mubr.f32.mxu0 0.0
  %440 = vmatmul.mubr.f32.gmra.mxu0 %v333
  %v441 = vpop.f32.mrf.mxu0
  %v442 = vadd.f32 0.0, %v441
  %v443 = vpop.f32.mrf.mxu0
  %444 = vmatprep.mubr.f32.mxu0 0.0
  %445 = vmatmul.mubr.f32.gmra.mxu0 %v334
  %v446 = vpop.f32.mrf.mxu0
  %v447 = vadd.f32 0.0, %v446
  %v448 = vpop.f32.mrf.mxu0
  %449 = vmatprep.mubr.f32.mxu0 0.0
  %450 = vmatmul.mubr.f32.gmra.mxu0 %v335
  %v451 = vpop.f32.mrf.mxu0
  %v452 = vadd.f32 0.0, %v451
  %v453 = vpop.f32.mrf.mxu0
  %454 = vmatprep.mubr.f32.mxu0 0.0
  %455 = vmatmul.mubr.f32.gmra.mxu0 %v336
  %v456 = vpop.f32.mrf.mxu0
  %v457 = vadd.f32 0.0, %v456
  %v458 = vpop.f32.mrf.mxu0
  %459 = vmatprep.mubr.f32.mxu0 0.0
  %460 = vmatmul.mubr.f32.gmra.mxu0 %v337
  %v461 = vpop.f32.mrf.mxu0
  %v462 = vadd.f32 0.0, %v461
  %v463 = vpop.f32.mrf.mxu0
  %464 = vmatprep.mubr.f32.mxu0 0.0
  %465 = vmatmul.mubr.f32.gmra.mxu0 %v338
  %v466 = vpop.f32.mrf.mxu0
  %v467 = vadd.f32 0.0, %v466
  %v468 = vpop.f32.mrf.mxu0
  %469 = vmatprep.mubr.f32.mxu0 0.0
  %470 = vmatmul.mubr.f32.gmra.mxu0 %v339
  %v471 = vpop.f32.mrf.mxu0
  %v472 = vadd.f32 0.0, %v471
  %v473 = vpop.f32.mrf.mxu0
  %474 = vmatprep.mubr.f32.mxu0 0.0
  %475 = vmatmul.mubr.f32.gmra.mxu0 %v340
  %v476 = vpop.f32.mrf.mxu0
  %v477 = vadd.f32 0.0, %v476
  %v478 = vpop.f32.mrf.mxu0
  %479 = vmatprep.mubr.f32.mxu0 0.0
  %480 = vmatmul.mubr.f32.gmra.mxu0 %v341
  %v481 = vpop.f32.mrf.mxu0
  %v482 = vadd.f32 0.0, %v481
  %v483 = vpop.f32.mrf.mxu0
  %484 = vmatprep.mubr.f32.mxu0 0.0
  %485 = vmatmul.mubr.f32.gmra.mxu0 %v342
  %v486 = vpop.f32.mrf.mxu0
  %v487 = vadd.f32 0.0, %v486
  %v488 = vpop.f32.mrf.mxu0
  %489 = vmatprep.mubr.f32.mxu0 0.0
  %490 = vmatmul.mubr.f32.gmra.mxu0 %v343
  %v491 = vpop.f32.mrf.mxu0
  %v492 = vadd.f32 0.0, %v491
  %v493 = vpop.f32.mrf.mxu0
  %494 = vmatprep.mubr.f32.mxu0 0.0
  %495 = vmatmul.mubr.f32.gmra.mxu0 %v344
  %v496 = vpop.f32.mrf.mxu0
  %v497 = vadd.f32 0.0, %v496
  %v498 = vpop.f32.mrf.mxu0
  %499 = vmatprep.mubr.f32.mxu0 0.0
  %500 = vmatmul.mubr.f32.gmra.mxu0 %v345
  %v501 = vpop.f32.mrf.mxu0
  %v502 = vadd.f32 0.0, %v501
  %v503 = vpop.f32.mrf.mxu0
  %504 = vmatprep.mubr.f32.mxu0 0.0
  %505 = vmatmul.mubr.f32.gmra.mxu0 %v346
  %v506 = vpop.f32.mrf.mxu0
  %v507 = vadd.f32 0.0, %v506
  %v508 = vpop.f32.mrf.mxu0
  %509 = vmatprep.mubr.f32.mxu0 0.0
  %510 = vmatmul.mubr.f32.gmra.mxu0 %v347
  %v511 = vpop.f32.mrf.mxu0
  %v512 = vadd.f32 0.0, %v511
  %v513 = vpop.f32.mrf.mxu0
  %514 = vdwg.mxu0
  %515 = vmatprep.subr.mxu0 0.0
  %516 = vmatpush1.msra.mxu0 %v330
  %517 = vmatprep.subr.mxu0 0.0
  %518 = vmatpush1.msra.mxu0 %v329
  %519 = vmatprep.subr.mxu0 0.0
  %520 = vmatpush1.msra.mxu0 %v328
  %521 = vmatprep.subr.mxu0 0.0
  %522 = vmatpush1.msra.mxu0 %v327
  %523 = vmatprep.subr.mxu0 0.0
  %524 = vmatpush1.msra.mxu0 %v326
  %525 = vmatprep.subr.mxu0 0.0
  %526 = vmatpush1.msra.mxu0 %v325
  %527 = vmatprep.subr.mxu0 0.0
  %528 = vmatpush1.msra.mxu0 %v324
  %529 = vmatprep.subr.mxu0 0.0
  %530 = vmatpush1.msra.mxu0 %v323
  %531 = vmatprep.subr.mxu0 0.0
  %532 = vmatpush1.msra.mxu0 %v322
  %533 = vmatprep.subr.mxu0 0.0
  %534 = vmatpush1.msra.mxu0 %v321
  %535 = vmatprep.subr.mxu0 0.0
  %536 = vmatpush1.msra.mxu0 %v320
  %537 = vmatprep.subr.mxu0 0.0
  %538 = vmatpush1.msra.mxu0 %v319
  %539 = vmatprep.subr.mxu0 0.0
  %540 = vmatpush1.msra.mxu0 %v318
  %541 = vmatprep.subr.mxu0 0.0
  %542 = vmatpush1.msra.mxu0 %v317
  %543 = vmatprep.subr.mxu0 0.0
  %544 = vmatpush1.msra.mxu0 %v316
  %545 = vmatprep.subr.mxu0 0.0
  %546 = vmatpush1.msra.mxu0 %v315
  %547 = vmatprep.subr.mxu0 0.0
  %548 = vmatpush2.msra.mxu0 0.0
  %549 = vmatprep.subr.mxu0 0.0
  %550 = vmatpush2.msra.mxu0 0.0
  %551 = vmatprep.subr.mxu0 0.0
  %552 = vmatpush2.msra.mxu0 0.0
  %553 = vmatprep.subr.mxu0 0.0
  %554 = vmatpush2.msra.mxu0 0.0
  %555 = vmatprep.subr.mxu0 0.0
  %556 = vmatpush2.msra.mxu0 0.0
  %557 = vmatprep.subr.mxu0 0.0
  %558 = vmatpush2.msra.mxu0 0.0
  %559 = vmatprep.subr.mxu0 0.0
  %560 = vmatpush2.msra.mxu0 0.0
  %561 = vmatprep.subr.mxu0 0.0
  %562 = vmatpush2.msra.mxu0 0.0
  %563 = vmatprep.subr.mxu0 0.0
  %564 = vmatpush2.msra.mxu0 0.0
  %565 = vmatprep.subr.mxu0 0.0
  %566 = vmatpush2.msra.mxu0 0.0
  %567 = vmatprep.subr.mxu0 0.0
  %568 = vmatpush2.msra.mxu0 0.0
  %569 = vmatprep.subr.mxu0 0.0
  %570 = vmatpush2.msra.mxu0 0.0
  %571 = vmatprep.subr.mxu0 0.0
  %572 = vmatpush2.msra.mxu0 0.0
  %573 = vmatprep.subr.mxu0 0.0
  %574 = vmatpush2.msra.mxu0 0.0
  %575 = vmatprep.subr.mxu0 0.0
  %576 = vmatpush2.msra.mxu0 0.0
  %577 = vmatprep.subr.mxu0 0.0
  %578 = vmatpush2.msra.mxu0 0.0
  %579 = vmatprep.mubr.f32.mxu0 0.0
  %580 = vmatmul.mubr.f32.gmra.mxu0 %v298
  %v581 = vpop.f32.mrf.mxu0
  %v582 = vadd.f32 %v432, %v581
  %v583 = vpop.f32.mrf.mxu0
  %584 = vmatprep.mubr.f32.mxu0 0.0
  %585 = vmatmul.mubr.f32.gmra.mxu0 %v299
  %v586 = vpop.f32.mrf.mxu0
  %v587 = vadd.f32 %v437, %v586
  %v588 = vpop.f32.mrf.mxu0
  %589 = vmatprep.mubr.f32.mxu0 0.0
  %590 = vmatmul.mubr.f32.gmra.mxu0 %v300
  %v591 = vpop.f32.mrf.mxu0
  %v592 = vadd.f32 %v442, %v591
  %v593 = vpop.f32.mrf.mxu0
  %594 = vmatprep.mubr.f32.mxu0 0.0
  %595 = vmatmul.mubr.f32.gmra.mxu0 %v301
  %v596 = vpop.f32.mrf.mxu0
  %v597 = vadd.f32 %v447, %v596
  %v598 = vpop.f32.mrf.mxu0
  %599 = vmatprep.mubr.f32.mxu0 0.0
  %600 = vmatmul.mubr.f32.gmra.mxu0 %v302
  %v601 = vpop.f32.mrf.mxu0
  %v602 = vadd.f32 %v452, %v601
  %v603 = vpop.f32.mrf.mxu0
  %604 = vmatprep.mubr.f32.mxu0 0.0
  %605 = vmatmul.mubr.f32.gmra.mxu0 %v303
  %v606 = vpop.f32.mrf.mxu0
  %v607 = vadd.f32 %v457, %v606
  %v608 = vpop.f32.mrf.mxu0
  %609 = vmatprep.mubr.f32.mxu0 0.0
  %610 = vmatmul.mubr.f32.gmra.mxu0 %v304
  %v611 = vpop.f32.mrf.mxu0
  %v612 = vadd.f32 %v462, %v611
  %v613 = vpop.f32.mrf.mxu0
  %614 = vmatprep.mubr.f32.mxu0 0.0
  %615 = vmatmul.mubr.f32.gmra.mxu0 %v305
  %v616 = vpop.f32.mrf.mxu0
  %v617 = vadd.f32 %v467, %v616
  %v618 = vpop.f32.mrf.mxu0
  %619 = vmatprep.mubr.f32.mxu0 0.0
  %620 = vmatmul.mubr.f32.gmra.mxu0 %v306
  %v621 = vpop.f32.mrf.mxu0
  %v622 = vadd.f32 %v472, %v621
  %v623 = vpop.f32.mrf.mxu0
  %624 = vmatprep.mubr.f32.mxu0 0.0
  %625 = vmatmul.mubr.f32.gmra.mxu0 %v307
  %v626 = vpop.f32.mrf.mxu0
  %v627 = vadd.f32 %v477, %v626
  %v628 = vpop.f32.mrf.mxu0
  %629 = vmatprep.mubr.f32.mxu0 0.0
  %630 = vmatmul.mubr.f32.gmra.mxu0 %v308
  %v631 = vpop.f32.mrf.mxu0
  %v632 = vadd.f32 %v482, %v631
  %v633 = vpop.f32.mrf.mxu0
  %634 = vmatprep.mubr.f32.mxu0 0.0
  %635 = vmatmul.mubr.f32.gmra.mxu0 %v309
  %v636 = vpop.f32.mrf.mxu0
  %v637 = vadd.f32 %v487, %v636
  %v638 = vpop.f32.mrf.mxu0
  %639 = vmatprep.mubr.f32.mxu0 0.0
  %640 = vmatmul.mubr.f32.gmra.mxu0 %v310
  %v641 = vpop.f32.mrf.mxu0
  %v642 = vadd.f32 %v492, %v641
  %v643 = vpop.f32.mrf.mxu0
  %644 = vmatprep.mubr.f32.mxu0 0.0
  %645 = vmatmul.mubr.f32.gmra.mxu0 %v311
  %v646 = vpop.f32.mrf.mxu0
  %v647 = vadd.f32 %v497, %v646
  %v648 = vpop.f32.mrf.mxu0
  %649 = vmatprep.mubr.f32.mxu0 0.0
  %650 = vmatmul.mubr.f32.gmra.mxu0 %v312
  %v651 = vpop.f32.mrf.mxu0
  %v652 = vadd.f32 %v502, %v651
  %v653 = vpop.f32.mrf.mxu0
  %654 = vmatprep.mubr.f32.mxu0 0.0
  %655 = vmatmul.mubr.f32.gmra.mxu0 %v313
  %v656 = vpop.f32.mrf.mxu0
  %v657 = vadd.f32 %v507, %v656
  %v658 = vpop.f32.mrf.mxu0
  %659 = vmatprep.mubr.f32.mxu0 0.0
  %660 = vmatmul.mubr.f32.gmra.mxu0 %v314
  %v661 = vpop.f32.mrf.mxu0
  %v662 = vadd.f32 %v512, %v661
  %v663 = vpop.f32.mrf.mxu0
  %664 = vdwg.mxu0
  %v665 = vld [vmem:[#allocation2 + $0x2] sm:$0xff]
  %v666 = vld [vmem:[#allocation2 + $0xa] sm:$0xff]
  %v667 = vld [vmem:[#allocation2 + $0x12] sm:$0xff]
  %v668 = vld [vmem:[#allocation2 + $0x1a] sm:$0xff]
  %v669 = vld [vmem:[#allocation2 + $0x22] sm:$0xff]
  %v670 = vld [vmem:[#allocation2 + $0x2a] sm:$0xff]
  %v671 = vld [vmem:[#allocation2 + $0x32] sm:$0xff]
  %v672 = vld [vmem:[#allocation2 + $0x3a] sm:$0xff]
  %v673 = vld [vmem:[#allocation2 + $0x42] sm:$0xff]
  %v674 = vld [vmem:[#allocation2 + $0x4a] sm:$0xff]
  %v675 = vld [vmem:[#allocation2 + $0x52] sm:$0xff]
  %v676 = vld [vmem:[#allocation2 + $0x5a] sm:$0xff]
  %v677 = vld [vmem:[#allocation2 + $0x62] sm:$0xff]
  %v678 = vld [vmem:[#allocation2 + $0x6a] sm:$0xff]
  %v679 = vld [vmem:[#allocation2 + $0x72] sm:$0xff]
  %v680 = vld [vmem:[#allocation2 + $0x7a] sm:$0xff]
  %v681 = vld [vmem:[#allocation2 + $0x82] sm:$0xf]
  %s682 = scalar_lea.vmem %s3, 256
  %v683 = vld [vmem:[%s682] sm:$0xff]
  %v684 = vld [vmem:[%s682 + $0x8] sm:$0xff]
  %v685 = vld [vmem:[%s682 + $0x10] sm:$0xff]
  %v686 = vld [vmem:[%s682 + $0x18] sm:$0xff]
  %v687 = vld [vmem:[%s682 + $0x20] sm:$0xff]
  %v688 = vld [vmem:[%s682 + $0x28] sm:$0xff]
  %v689 = vld [vmem:[%s682 + $0x30] sm:$0xff]
  %v690 = vld [vmem:[%s682 + $0x38] sm:$0xff]
  %v691 = vld [vmem:[%s682 + $0x40] sm:$0xff]
  %v692 = vld [vmem:[%s682 + $0x48] sm:$0xff]
  %v693 = vld [vmem:[%s682 + $0x50] sm:$0xff]
  %v694 = vld [vmem:[%s682 + $0x58] sm:$0xff]
  %v695 = vld [vmem:[%s682 + $0x60] sm:$0xff]
  %v696 = vld [vmem:[%s682 + $0x68] sm:$0xff]
  %v697 = vld [vmem:[%s682 + $0x70] sm:$0xff]
  %v698 = vld [vmem:[%s682 + $0x78] sm:$0xff]
  %699 = vmatprep.subr.mxu0 0.0
  %700 = vmatpush1.msra.mxu0 %v698
  %701 = vmatprep.subr.mxu0 0.0
  %702 = vmatpush1.msra.mxu0 %v697
  %703 = vmatprep.subr.mxu0 0.0
  %704 = vmatpush1.msra.mxu0 %v696
  %705 = vmatprep.subr.mxu0 0.0
  %706 = vmatpush1.msra.mxu0 %v695
  %707 = vmatprep.subr.mxu0 0.0
  %708 = vmatpush1.msra.mxu0 %v694
  %709 = vmatprep.subr.mxu0 0.0
  %710 = vmatpush1.msra.mxu0 %v693
  %711 = vmatprep.subr.mxu0 0.0
  %712 = vmatpush1.msra.mxu0 %v692
  %713 = vmatprep.subr.mxu0 0.0
  %714 = vmatpush1.msra.mxu0 %v691
  %715 = vmatprep.subr.mxu0 0.0
  %716 = vmatpush1.msra.mxu0 %v690
  %717 = vmatprep.subr.mxu0 0.0
  %718 = vmatpush1.msra.mxu0 %v689
  %719 = vmatprep.subr.mxu0 0.0
  %720 = vmatpush1.msra.mxu0 %v688
  %721 = vmatprep.subr.mxu0 0.0
  %722 = vmatpush1.msra.mxu0 %v687
  %723 = vmatprep.subr.mxu0 0.0
  %724 = vmatpush1.msra.mxu0 %v686
  %725 = vmatprep.subr.mxu0 0.0
  %726 = vmatpush1.msra.mxu0 %v685
  %727 = vmatprep.subr.mxu0 0.0
  %728 = vmatpush1.msra.mxu0 %v684
  %729 = vmatprep.subr.mxu0 0.0
  %730 = vmatpush1.msra.mxu0 %v683
  %731 = vmatprep.subr.mxu0 0.0
  %732 = vmatpush2.msra.mxu0 0.0
  %733 = vmatprep.subr.mxu0 0.0
  %734 = vmatpush2.msra.mxu0 0.0
  %735 = vmatprep.subr.mxu0 0.0
  %736 = vmatpush2.msra.mxu0 0.0
  %737 = vmatprep.subr.mxu0 0.0
  %738 = vmatpush2.msra.mxu0 0.0
  %739 = vmatprep.subr.mxu0 0.0
  %740 = vmatpush2.msra.mxu0 0.0
  %741 = vmatprep.subr.mxu0 0.0
  %742 = vmatpush2.msra.mxu0 0.0
  %743 = vmatprep.subr.mxu0 0.0
  %744 = vmatpush2.msra.mxu0 0.0
  %745 = vmatprep.subr.mxu0 0.0
  %746 = vmatpush2.msra.mxu0 0.0
  %747 = vmatprep.subr.mxu0 0.0
  %748 = vmatpush2.msra.mxu0 0.0
  %749 = vmatprep.subr.mxu0 0.0
  %750 = vmatpush2.msra.mxu0 0.0
  %751 = vmatprep.subr.mxu0 0.0
  %752 = vmatpush2.msra.mxu0 0.0
  %753 = vmatprep.subr.mxu0 0.0
  %754 = vmatpush2.msra.mxu0 0.0
  %755 = vmatprep.subr.mxu0 0.0
  %756 = vmatpush2.msra.mxu0 0.0
  %757 = vmatprep.subr.mxu0 0.0
  %758 = vmatpush2.msra.mxu0 0.0
  %759 = vmatprep.subr.mxu0 0.0
  %760 = vmatpush2.msra.mxu0 0.0
  %761 = vmatprep.subr.mxu0 0.0
  %762 = vmatpush2.msra.mxu0 0.0
  %763 = vmatprep.mubr.f32.mxu0 0.0
  %764 = vmatmul.mubr.f32.gmra.mxu0 %v665
  %v765 = vpop.f32.mrf.mxu0
  %v766 = vadd.f32 0.0, %v765
  %v767 = vpop.f32.mrf.mxu0
  %768 = vmatprep.mubr.f32.mxu0 0.0
  %769 = vmatmul.mubr.f32.gmra.mxu0 %v666
  %v770 = vpop.f32.mrf.mxu0
  %v771 = vadd.f32 0.0, %v770
  %v772 = vpop.f32.mrf.mxu0
  %773 = vmatprep.mubr.f32.mxu0 0.0
  %774 = vmatmul.mubr.f32.gmra.mxu0 %v667
  %v775 = vpop.f32.mrf.mxu0
  %v776 = vadd.f32 0.0, %v775
  %v777 = vpop.f32.mrf.mxu0
  %778 = vmatprep.mubr.f32.mxu0 0.0
  %779 = vmatmul.mubr.f32.gmra.mxu0 %v668
  %v780 = vpop.f32.mrf.mxu0
  %v781 = vadd.f32 0.0, %v780
  %v782 = vpop.f32.mrf.mxu0
  %783 = vmatprep.mubr.f32.mxu0 0.0
  %784 = vmatmul.mubr.f32.gmra.mxu0 %v669
  %v785 = vpop.f32.mrf.mxu0
  %v786 = vadd.f32 0.0, %v785
  %v787 = vpop.f32.mrf.mxu0
  %788 = vmatprep.mubr.f32.mxu0 0.0
  %789 = vmatmul.mubr.f32.gmra.mxu0 %v670
  %v790 = vpop.f32.mrf.mxu0
  %v791 = vadd.f32 0.0, %v790
  %v792 = vpop.f32.mrf.mxu0
  %793 = vmatprep.mubr.f32.mxu0 0.0
  %794 = vmatmul.mubr.f32.gmra.mxu0 %v671
  %v795 = vpop.f32.mrf.mxu0
  %v796 = vadd.f32 0.0, %v795
  %v797 = vpop.f32.mrf.mxu0
  %798 = vmatprep.mubr.f32.mxu0 0.0
  %799 = vmatmul.mubr.f32.gmra.mxu0 %v672
  %v800 = vpop.f32.mrf.mxu0
  %v801 = vadd.f32 0.0, %v800
  %v802 = vpop.f32.mrf.mxu0
  %803 = vmatprep.mubr.f32.mxu0 0.0
  %804 = vmatmul.mubr.f32.gmra.mxu0 %v673
  %v805 = vpop.f32.mrf.mxu0
  %v806 = vadd.f32 0.0, %v805
  %v807 = vpop.f32.mrf.mxu0
  %808 = vmatprep.mubr.f32.mxu0 0.0
  %809 = vmatmul.mubr.f32.gmra.mxu0 %v674
  %v810 = vpop.f32.mrf.mxu0
  %v811 = vadd.f32 0.0, %v810
  %v812 = vpop.f32.mrf.mxu0
  %813 = vmatprep.mubr.f32.mxu0 0.0
  %814 = vmatmul.mubr.f32.gmra.mxu0 %v675
  %v815 = vpop.f32.mrf.mxu0
  %v816 = vadd.f32 0.0, %v815
  %v817 = vpop.f32.mrf.mxu0
  %818 = vmatprep.mubr.f32.mxu0 0.0
  %819 = vmatmul.mubr.f32.gmra.mxu0 %v676
  %v820 = vpop.f32.mrf.mxu0
  %v821 = vadd.f32 0.0, %v820
  %v822 = vpop.f32.mrf.mxu0
  %823 = vmatprep.mubr.f32.mxu0 0.0
  %824 = vmatmul.mubr.f32.gmra.mxu0 %v677
  %v825 = vpop.f32.mrf.mxu0
  %v826 = vadd.f32 0.0, %v825
  %v827 = vpop.f32.mrf.mxu0
  %828 = vmatprep.mubr.f32.mxu0 0.0
  %829 = vmatmul.mubr.f32.gmra.mxu0 %v678
  %v830 = vpop.f32.mrf.mxu0
  %v831 = vadd.f32 0.0, %v830
  %v832 = vpop.f32.mrf.mxu0
  %833 = vmatprep.mubr.f32.mxu0 0.0
  %834 = vmatmul.mubr.f32.gmra.mxu0 %v679
  %v835 = vpop.f32.mrf.mxu0
  %v836 = vadd.f32 0.0, %v835
  %v837 = vpop.f32.mrf.mxu0
  %838 = vmatprep.mubr.f32.mxu0 0.0
  %839 = vmatmul.mubr.f32.gmra.mxu0 %v680
  %v840 = vpop.f32.mrf.mxu0
  %v841 = vadd.f32 0.0, %v840
  %v842 = vpop.f32.mrf.mxu0
  %843 = vmatprep.mubr.f32.mxu0 0.0
  %844 = vmatmul.mubr.f32.gmra.mxu0 %v681
  %v845 = vpop.f32.mrf.mxu0
  %v846 = vadd.f32 0.0, %v845
  %v847 = vpop.f32.mrf.mxu0
  %848 = vdwg.mxu0
  %v849 = vadd.f32 %v582, %v766
  %v850 = vadd.f32 %v587, %v771
  %v851 = vadd.f32 %v592, %v776
  %v852 = vadd.f32 %v597, %v781
  %v853 = vadd.f32 %v602, %v786
  %v854 = vadd.f32 %v607, %v791
  %v855 = vadd.f32 %v612, %v796
  %v856 = vadd.f32 %v617, %v801
  %v857 = vadd.f32 %v622, %v806
  %v858 = vadd.f32 %v627, %v811
  %v859 = vadd.f32 %v632, %v816
  %v860 = vadd.f32 %v637, %v821
  %v861 = vadd.f32 %v642, %v826
  %v862 = vadd.f32 %v647, %v831
  %v863 = vadd.f32 %v652, %v836
  %v864 = vadd.f32 %v657, %v841
  %v865 = vadd.f32 %v662, %v846
  %v866 = vld [vmem:[#allocation2 + $0x3] sm:$0xff]
  %v867 = vld [vmem:[#allocation2 + $0xb] sm:$0xff]
  %v868 = vld [vmem:[#allocation2 + $0x13] sm:$0xff]
  %v869 = vld [vmem:[#allocation2 + $0x1b] sm:$0xff]
  %v870 = vld [vmem:[#allocation2 + $0x23] sm:$0xff]
  %v871 = vld [vmem:[#allocation2 + $0x2b] sm:$0xff]
  %v872 = vld [vmem:[#allocation2 + $0x33] sm:$0xff]
  %v873 = vld [vmem:[#allocation2 + $0x3b] sm:$0xff]
  %v874 = vld [vmem:[#allocation2 + $0x43] sm:$0xff]
  %v875 = vld [vmem:[#allocation2 + $0x4b] sm:$0xff]
  %v876 = vld [vmem:[#allocation2 + $0x53] sm:$0xff]
  %v877 = vld [vmem:[#allocation2 + $0x5b] sm:$0xff]
  %v878 = vld [vmem:[#allocation2 + $0x63] sm:$0xff]
  %v879 = vld [vmem:[#allocation2 + $0x6b] sm:$0xff]
  %v880 = vld [vmem:[#allocation2 + $0x73] sm:$0xff]
  %v881 = vld [vmem:[#allocation2 + $0x7b] sm:$0xff]
  %v882 = vld [vmem:[#allocation2 + $0x83] sm:$0xf]
  %s883 = scalar_lea.vmem %s3, 384
  %v884 = vld [vmem:[%s883] sm:$0xff]
  %v885 = vld [vmem:[%s883 + $0x8] sm:$0xff]
  %v886 = vld [vmem:[%s883 + $0x10] sm:$0xff]
  %v887 = vld [vmem:[%s883 + $0x18] sm:$0xff]
  %v888 = vld [vmem:[%s883 + $0x20] sm:$0xff]
  %v889 = vld [vmem:[%s883 + $0x28] sm:$0xff]
  %v890 = vld [vmem:[%s883 + $0x30] sm:$0xff]
  %v891 = vld [vmem:[%s883 + $0x38] sm:$0xff]
  %v892 = vld [vmem:[%s883 + $0x40] sm:$0xff]
  %v893 = vld [vmem:[%s883 + $0x48] sm:$0xff]
  %v894 = vld [vmem:[%s883 + $0x50] sm:$0xff]
  %v895 = vld [vmem:[%s883 + $0x58] sm:$0xff]
  %v896 = vld [vmem:[%s883 + $0x60] sm:$0xff]
  %v897 = vld [vmem:[%s883 + $0x68] sm:$0xff]
  %v898 = vld [vmem:[%s883 + $0x70] sm:$0xff]
  %v899 = vld [vmem:[%s883 + $0x78] sm:$0xff]
  %900 = vmatprep.subr.mxu0 0.0
  %901 = vmatpush1.msra.mxu0 %v899
  %902 = vmatprep.subr.mxu0 0.0
  %903 = vmatpush1.msra.mxu0 %v898
  %904 = vmatprep.subr.mxu0 0.0
  %905 = vmatpush1.msra.mxu0 %v897
  %906 = vmatprep.subr.mxu0 0.0
  %907 = vmatpush1.msra.mxu0 %v896
  %908 = vmatprep.subr.mxu0 0.0
  %909 = vmatpush1.msra.mxu0 %v895
  %910 = vmatprep.subr.mxu0 0.0
  %911 = vmatpush1.msra.mxu0 %v894
  %912 = vmatprep.subr.mxu0 0.0
  %913 = vmatpush1.msra.mxu0 %v893
  %914 = vmatprep.subr.mxu0 0.0
  %915 = vmatpush1.msra.mxu0 %v892
  %916 = vmatprep.subr.mxu0 0.0
  %917 = vmatpush1.msra.mxu0 %v891
  %918 = vmatprep.subr.mxu0 0.0
  %919 = vmatpush1.msra.mxu0 %v890
  %920 = vmatprep.subr.mxu0 0.0
  %921 = vmatpush1.msra.mxu0 %v889
  %922 = vmatprep.subr.mxu0 0.0
  %923 = vmatpush1.msra.mxu0 %v888
  %924 = vmatprep.subr.mxu0 0.0
  %925 = vmatpush1.msra.mxu0 %v887
  %926 = vmatprep.subr.mxu0 0.0
  %927 = vmatpush1.msra.mxu0 %v886
  %928 = vmatprep.subr.mxu0 0.0
  %929 = vmatpush1.msra.mxu0 %v885
  %930 = vmatprep.subr.mxu0 0.0
  %931 = vmatpush1.msra.mxu0 %v884
  %932 = vmatprep.subr.mxu0 0.0
  %933 = vmatpush2.msra.mxu0 0.0
  %934 = vmatprep.subr.mxu0 0.0
  %935 = vmatpush2.msra.mxu0 0.0
  %936 = vmatprep.subr.mxu0 0.0
  %937 = vmatpush2.msra.mxu0 0.0
  %938 = vmatprep.subr.mxu0 0.0
  %939 = vmatpush2.msra.mxu0 0.0
  %940 = vmatprep.subr.mxu0 0.0
  %941 = vmatpush2.msra.mxu0 0.0
  %942 = vmatprep.subr.mxu0 0.0
  %943 = vmatpush2.msra.mxu0 0.0
  %944 = vmatprep.subr.mxu0 0.0
  %945 = vmatpush2.msra.mxu0 0.0
  %946 = vmatprep.subr.mxu0 0.0
  %947 = vmatpush2.msra.mxu0 0.0
  %948 = vmatprep.subr.mxu0 0.0
  %949 = vmatpush2.msra.mxu0 0.0
  %950 = vmatprep.subr.mxu0 0.0
  %951 = vmatpush2.msra.mxu0 0.0
  %952 = vmatprep.subr.mxu0 0.0
  %953 = vmatpush2.msra.mxu0 0.0
  %954 = vmatprep.subr.mxu0 0.0
  %955 = vmatpush2.msra.mxu0 0.0
  %956 = vmatprep.subr.mxu0 0.0
  %957 = vmatpush2.msra.mxu0 0.0
  %958 = vmatprep.subr.mxu0 0.0
  %959 = vmatpush2.msra.mxu0 0.0
  %960 = vmatprep.subr.mxu0 0.0
  %961 = vmatpush2.msra.mxu0 0.0
  %962 = vmatprep.subr.mxu0 0.0
  %963 = vmatpush2.msra.mxu0 0.0
  %964 = vmatprep.mubr.f32.mxu0 0.0
  %965 = vmatmul.mubr.f32.gmra.mxu0 %v866
  %v966 = vpop.f32.mrf.mxu0
  %v967 = vadd.f32 0.0, %v966
  %v968 = vpop.f32.mrf.mxu0
  %969 = vmatprep.mubr.f32.mxu0 0.0
  %970 = vmatmul.mubr.f32.gmra.mxu0 %v867
  %v971 = vpop.f32.mrf.mxu0
  %v972 = vadd.f32 0.0, %v971
  %v973 = vpop.f32.mrf.mxu0
  %974 = vmatprep.mubr.f32.mxu0 0.0
  %975 = vmatmul.mubr.f32.gmra.mxu0 %v868
  %v976 = vpop.f32.mrf.mxu0
  %v977 = vadd.f32 0.0, %v976
  %v978 = vpop.f32.mrf.mxu0
  %979 = vmatprep.mubr.f32.mxu0 0.0
  %980 = vmatmul.mubr.f32.gmra.mxu0 %v869
  %v981 = vpop.f32.mrf.mxu0
  %v982 = vadd.f32 0.0, %v981
  %v983 = vpop.f32.mrf.mxu0
  %984 = vmatprep.mubr.f32.mxu0 0.0
  %985 = vmatmul.mubr.f32.gmra.mxu0 %v870
  %v986 = vpop.f32.mrf.mxu0
  %v987 = vadd.f32 0.0, %v986
  %v988 = vpop.f32.mrf.mxu0
  %989 = vmatprep.mubr.f32.mxu0 0.0
  %990 = vmatmul.mubr.f32.gmra.mxu0 %v871
  %v991 = vpop.f32.mrf.mxu0
  %v992 = vadd.f32 0.0, %v991
  %v993 = vpop.f32.mrf.mxu0
  %994 = vmatprep.mubr.f32.mxu0 0.0
  %995 = vmatmul.mubr.f32.gmra.mxu0 %v872
  %v996 = vpop.f32.mrf.mxu0
  %v997 = vadd.f32 0.0, %v996
  %v998 = vpop.f32.mrf.mxu0
  %999 = vmatprep.mubr.f32.mxu0 0.0
  %1000 = vmatmul.mubr.f32.gmra.mxu0 %v873
  %v1001 = vpop.f32.mrf.mxu0
  %v1002 = vadd.f32 0.0, %v1001
  %v1003 = vpop.f32.mrf.mxu0
  %1004 = vmatprep.mubr.f32.mxu0 0.0
  %1005 = vmatmul.mubr.f32.gmra.mxu0 %v874
  %v1006 = vpop.f32.mrf.mxu0
  %v1007 = vadd.f32 0.0, %v1006
  %v1008 = vpop.f32.mrf.mxu0
  %1009 = vmatprep.mubr.f32.mxu0 0.0
  %1010 = vmatmul.mubr.f32.gmra.mxu0 %v875
  %v1011 = vpop.f32.mrf.mxu0
  %v1012 = vadd.f32 0.0, %v1011
  %v1013 = vpop.f32.mrf.mxu0
  %1014 = vmatprep.mubr.f32.mxu0 0.0
  %1015 = vmatmul.mubr.f32.gmra.mxu0 %v876
  %v1016 = vpop.f32.mrf.mxu0
  %v1017 = vadd.f32 0.0, %v1016
  %v1018 = vpop.f32.mrf.mxu0
  %1019 = vmatprep.mubr.f32.mxu0 0.0
  %1020 = vmatmul.mubr.f32.gmra.mxu0 %v877
  %v1021 = vpop.f32.mrf.mxu0
  %v1022 = vadd.f32 0.0, %v1021
  %v1023 = vpop.f32.mrf.mxu0
  %1024 = vmatprep.mubr.f32.mxu0 0.0
  %1025 = vmatmul.mubr.f32.gmra.mxu0 %v878
  %v1026 = vpop.f32.mrf.mxu0
  %v1027 = vadd.f32 0.0, %v1026
  %v1028 = vpop.f32.mrf.mxu0
  %1029 = vmatprep.mubr.f32.mxu0 0.0
  %1030 = vmatmul.mubr.f32.gmra.mxu0 %v879
  %v1031 = vpop.f32.mrf.mxu0
  %v1032 = vadd.f32 0.0, %v1031
  %v1033 = vpop.f32.mrf.mxu0
  %1034 = vmatprep.mubr.f32.mxu0 0.0
  %1035 = vmatmul.mubr.f32.gmra.mxu0 %v880
  %v1036 = vpop.f32.mrf.mxu0
  %v1037 = vadd.f32 0.0, %v1036
  %v1038 = vpop.f32.mrf.mxu0
  %1039 = vmatprep.mubr.f32.mxu0 0.0
  %1040 = vmatmul.mubr.f32.gmra.mxu0 %v881
  %v1041 = vpop.f32.mrf.mxu0
  %v1042 = vadd.f32 0.0, %v1041
  %v1043 = vpop.f32.mrf.mxu0
  %1044 = vmatprep.mubr.f32.mxu0 0.0
  %1045 = vmatmul.mubr.f32.gmra.mxu0 %v882
  %v1046 = vpop.f32.mrf.mxu0
  %v1047 = vadd.f32 0.0, %v1046
  %v1048 = vpop.f32.mrf.mxu0
  %1049 = vdwg.mxu0
  %v1050 = vadd.f32 %v849, %v967
  %v1051 = vadd.f32 %v850, %v972
  %v1052 = vadd.f32 %v851, %v977
  %v1053 = vadd.f32 %v852, %v982
  %v1054 = vadd.f32 %v853, %v987
  %v1055 = vadd.f32 %v854, %v992
  %v1056 = vadd.f32 %v855, %v997
  %v1057 = vadd.f32 %v856, %v1002
  %v1058 = vadd.f32 %v857, %v1007
  %v1059 = vadd.f32 %v858, %v1012
  %v1060 = vadd.f32 %v859, %v1017
  %v1061 = vadd.f32 %v860, %v1022
  %v1062 = vadd.f32 %v861, %v1027
  %v1063 = vadd.f32 %v862, %v1032
  %v1064 = vadd.f32 %v863, %v1037
  %v1065 = vadd.f32 %v864, %v1042
  %v1066 = vadd.f32 %v865, %v1047
  %v1067 = vld [vmem:[#allocation2 + $0x9] sm:$0xff]
  %v1068 = vld [vmem:[#allocation2 + $0x11] sm:$0xff]
  %v1069 = vld [vmem:[#allocation2 + $0x19] sm:$0xff]
  %v1070 = vld [vmem:[#allocation2 + $0x21] sm:$0xff]
  %v1071 = vld [vmem:[#allocation2 + $0x29] sm:$0xff]
  %v1072 = vld [vmem:[#allocation2 + $0x31] sm:$0xff]
  %v1073 = vld [vmem:[#allocation2 + $0x39] sm:$0xff]
  %v1074 = vld [vmem:[#allocation2 + $0x41] sm:$0xff]
  %v1075 = vld [vmem:[#allocation2 + $0x49] sm:$0xff]
  %v1076 = vld [vmem:[#allocation2 + $0x51] sm:$0xff]
  %v1077 = vld [vmem:[#allocation2 + $0x59] sm:$0xff]
  %v1078 = vld [vmem:[#allocation2 + $0x61] sm:$0xff]
  %v1079 = vld [vmem:[#allocation2 + $0x69] sm:$0xff]
  %v1080 = vld [vmem:[#allocation2 + $0x71] sm:$0xff]
  %v1081 = vld [vmem:[#allocation2 + $0x79] sm:$0xff]
  %v1082 = vld [vmem:[#allocation2 + $0x81] sm:$0xff]
  %v1083 = vld [vmem:[#allocation2 + $0x89] sm:$0xf]
  %s1084 = scalar_lea.vmem %s3, 512
  %v1085 = vld [vmem:[%s1084] sm:$0xff]
  %v1086 = vld [vmem:[%s1084 + $0x8] sm:$0xff]
  %v1087 = vld [vmem:[%s1084 + $0x10] sm:$0xff]
  %v1088 = vld [vmem:[%s1084 + $0x18] sm:$0xff]
  %v1089 = vld [vmem:[%s1084 + $0x20] sm:$0xff]
  %v1090 = vld [vmem:[%s1084 + $0x28] sm:$0xff]
  %v1091 = vld [vmem:[%s1084 + $0x30] sm:$0xff]
  %v1092 = vld [vmem:[%s1084 + $0x38] sm:$0xff]
  %v1093 = vld [vmem:[%s1084 + $0x40] sm:$0xff]
  %v1094 = vld [vmem:[%s1084 + $0x48] sm:$0xff]
  %v1095 = vld [vmem:[%s1084 + $0x50] sm:$0xff]
  %v1096 = vld [vmem:[%s1084 + $0x58] sm:$0xff]
  %v1097 = vld [vmem:[%s1084 + $0x60] sm:$0xff]
  %v1098 = vld [vmem:[%s1084 + $0x68] sm:$0xff]
  %v1099 = vld [vmem:[%s1084 + $0x70] sm:$0xff]
  %v1100 = vld [vmem:[%s1084 + $0x78] sm:$0xff]
  %1101 = vmatprep.subr.mxu0 0.0
  %1102 = vmatpush1.msra.mxu0 %v1100
  %1103 = vmatprep.subr.mxu0 0.0
  %1104 = vmatpush1.msra.mxu0 %v1099
  %1105 = vmatprep.subr.mxu0 0.0
  %1106 = vmatpush1.msra.mxu0 %v1098
  %1107 = vmatprep.subr.mxu0 0.0
  %1108 = vmatpush1.msra.mxu0 %v1097
  %1109 = vmatprep.subr.mxu0 0.0
  %1110 = vmatpush1.msra.mxu0 %v1096
  %1111 = vmatprep.subr.mxu0 0.0
  %1112 = vmatpush1.msra.mxu0 %v1095
  %1113 = vmatprep.subr.mxu0 0.0
  %1114 = vmatpush1.msra.mxu0 %v1094
  %1115 = vmatprep.subr.mxu0 0.0
  %1116 = vmatpush1.msra.mxu0 %v1093
  %1117 = vmatprep.subr.mxu0 0.0
  %1118 = vmatpush1.msra.mxu0 %v1092
  %1119 = vmatprep.subr.mxu0 0.0
  %1120 = vmatpush1.msra.mxu0 %v1091
  %1121 = vmatprep.subr.mxu0 0.0
  %1122 = vmatpush1.msra.mxu0 %v1090
  %1123 = vmatprep.subr.mxu0 0.0
  %1124 = vmatpush1.msra.mxu0 %v1089
  %1125 = vmatprep.subr.mxu0 0.0
  %1126 = vmatpush1.msra.mxu0 %v1088
  %1127 = vmatprep.subr.mxu0 0.0
  %1128 = vmatpush1.msra.mxu0 %v1087
  %1129 = vmatprep.subr.mxu0 0.0
  %1130 = vmatpush1.msra.mxu0 %v1086
  %1131 = vmatprep.subr.mxu0 0.0
  %1132 = vmatpush1.msra.mxu0 %v1085
  %1133 = vmatprep.subr.mxu0 0.0
  %1134 = vmatpush2.msra.mxu0 0.0
  %1135 = vmatprep.subr.mxu0 0.0
  %1136 = vmatpush2.msra.mxu0 0.0
  %1137 = vmatprep.subr.mxu0 0.0
  %1138 = vmatpush2.msra.mxu0 0.0
  %1139 = vmatprep.subr.mxu0 0.0
  %1140 = vmatpush2.msra.mxu0 0.0
  %1141 = vmatprep.subr.mxu0 0.0
  %1142 = vmatpush2.msra.mxu0 0.0
  %1143 = vmatprep.subr.mxu0 0.0
  %1144 = vmatpush2.msra.mxu0 0.0
  %1145 = vmatprep.subr.mxu0 0.0
  %1146 = vmatpush2.msra.mxu0 0.0
  %1147 = vmatprep.subr.mxu0 0.0
  %1148 = vmatpush2.msra.mxu0 0.0
  %1149 = vmatprep.subr.mxu0 0.0
  %1150 = vmatpush2.msra.mxu0 0.0
  %1151 = vmatprep.subr.mxu0 0.0
  %1152 = vmatpush2.msra.mxu0 0.0
  %1153 = vmatprep.subr.mxu0 0.0
  %1154 = vmatpush2.msra.mxu0 0.0
  %1155 = vmatprep.subr.mxu0 0.0
  %1156 = vmatpush2.msra.mxu0 0.0
  %1157 = vmatprep.subr.mxu0 0.0
  %1158 = vmatpush2.msra.mxu0 0.0
  %1159 = vmatprep.subr.mxu0 0.0
  %1160 = vmatpush2.msra.mxu0 0.0
  %1161 = vmatprep.subr.mxu0 0.0
  %1162 = vmatpush2.msra.mxu0 0.0
  %1163 = vmatprep.subr.mxu0 0.0
  %1164 = vmatpush2.msra.mxu0 0.0
  %1165 = vmatprep.mubr.f32.mxu0 0.0
  %1166 = vmatmul.mubr.f32.gmra.mxu0 %v1067
  %v1167 = vpop.f32.mrf.mxu0
  %v1168 = vadd.f32 0.0, %v1167
  %v1169 = vpop.f32.mrf.mxu0
  %1170 = vmatprep.mubr.f32.mxu0 0.0
  %1171 = vmatmul.mubr.f32.gmra.mxu0 %v1068
  %v1172 = vpop.f32.mrf.mxu0
  %v1173 = vadd.f32 0.0, %v1172
  %v1174 = vpop.f32.mrf.mxu0
  %1175 = vmatprep.mubr.f32.mxu0 0.0
  %1176 = vmatmul.mubr.f32.gmra.mxu0 %v1069
  %v1177 = vpop.f32.mrf.mxu0
  %v1178 = vadd.f32 0.0, %v1177
  %v1179 = vpop.f32.mrf.mxu0
  %1180 = vmatprep.mubr.f32.mxu0 0.0
  %1181 = vmatmul.mubr.f32.gmra.mxu0 %v1070
  %v1182 = vpop.f32.mrf.mxu0
  %v1183 = vadd.f32 0.0, %v1182
  %v1184 = vpop.f32.mrf.mxu0
  %1185 = vmatprep.mubr.f32.mxu0 0.0
  %1186 = vmatmul.mubr.f32.gmra.mxu0 %v1071
  %v1187 = vpop.f32.mrf.mxu0
  %v1188 = vadd.f32 0.0, %v1187
  %v1189 = vpop.f32.mrf.mxu0
  %1190 = vmatprep.mubr.f32.mxu0 0.0
  %1191 = vmatmul.mubr.f32.gmra.mxu0 %v1072
  %v1192 = vpop.f32.mrf.mxu0
  %v1193 = vadd.f32 0.0, %v1192
  %v1194 = vpop.f32.mrf.mxu0
  %1195 = vmatprep.mubr.f32.mxu0 0.0
  %1196 = vmatmul.mubr.f32.gmra.mxu0 %v1073
  %v1197 = vpop.f32.mrf.mxu0
  %v1198 = vadd.f32 0.0, %v1197
  %v1199 = vpop.f32.mrf.mxu0
  %1200 = vmatprep.mubr.f32.mxu0 0.0
  %1201 = vmatmul.mubr.f32.gmra.mxu0 %v1074
  %v1202 = vpop.f32.mrf.mxu0
  %v1203 = vadd.f32 0.0, %v1202
  %v1204 = vpop.f32.mrf.mxu0
  %1205 = vmatprep.mubr.f32.mxu0 0.0
  %1206 = vmatmul.mubr.f32.gmra.mxu0 %v1075
  %v1207 = vpop.f32.mrf.mxu0
  %v1208 = vadd.f32 0.0, %v1207
  %v1209 = vpop.f32.mrf.mxu0
  %1210 = vmatprep.mubr.f32.mxu0 0.0
  %1211 = vmatmul.mubr.f32.gmra.mxu0 %v1076
  %v1212 = vpop.f32.mrf.mxu0
  %v1213 = vadd.f32 0.0, %v1212
  %v1214 = vpop.f32.mrf.mxu0
  %1215 = vmatprep.mubr.f32.mxu0 0.0
  %1216 = vmatmul.mubr.f32.gmra.mxu0 %v1077
  %v1217 = vpop.f32.mrf.mxu0
  %v1218 = vadd.f32 0.0, %v1217
  %v1219 = vpop.f32.mrf.mxu0
  %1220 = vmatprep.mubr.f32.mxu0 0.0
  %1221 = vmatmul.mubr.f32.gmra.mxu0 %v1078
  %v1222 = vpop.f32.mrf.mxu0
  %v1223 = vadd.f32 0.0, %v1222
  %v1224 = vpop.f32.mrf.mxu0
  %1225 = vmatprep.mubr.f32.mxu0 0.0
  %1226 = vmatmul.mubr.f32.gmra.mxu0 %v1079
  %v1227 = vpop.f32.mrf.mxu0
  %v1228 = vadd.f32 0.0, %v1227
  %v1229 = vpop.f32.mrf.mxu0
  %1230 = vmatprep.mubr.f32.mxu0 0.0
  %1231 = vmatmul.mubr.f32.gmra.mxu0 %v1080
  %v1232 = vpop.f32.mrf.mxu0
  %v1233 = vadd.f32 0.0, %v1232
  %v1234 = vpop.f32.mrf.mxu0
  %1235 = vmatprep.mubr.f32.mxu0 0.0
  %1236 = vmatmul.mubr.f32.gmra.mxu0 %v1081
  %v1237 = vpop.f32.mrf.mxu0
  %v1238 = vadd.f32 0.0, %v1237
  %v1239 = vpop.f32.mrf.mxu0
  %1240 = vmatprep.mubr.f32.mxu0 0.0
  %1241 = vmatmul.mubr.f32.gmra.mxu0 %v1082
  %v1242 = vpop.f32.mrf.mxu0
  %v1243 = vadd.f32 0.0, %v1242
  %v1244 = vpop.f32.mrf.mxu0
  %1245 = vmatprep.mubr.f32.mxu0 0.0
  %1246 = vmatmul.mubr.f32.gmra.mxu0 %v1083
  %v1247 = vpop.f32.mrf.mxu0
  %v1248 = vadd.f32 0.0, %v1247
  %v1249 = vpop.f32.mrf.mxu0
  %1250 = vdwg.mxu0
  %v1251 = vadd.f32 %v1050, %v1168
  %v1252 = vadd.f32 %v1051, %v1173
  %v1253 = vadd.f32 %v1052, %v1178
  %v1254 = vadd.f32 %v1053, %v1183
  %v1255 = vadd.f32 %v1054, %v1188
  %v1256 = vadd.f32 %v1055, %v1193
  %v1257 = vadd.f32 %v1056, %v1198
  %v1258 = vadd.f32 %v1057, %v1203
  %v1259 = vadd.f32 %v1058, %v1208
  %v1260 = vadd.f32 %v1059, %v1213
  %v1261 = vadd.f32 %v1060, %v1218
  %v1262 = vadd.f32 %v1061, %v1223
  %v1263 = vadd.f32 %v1062, %v1228
  %v1264 = vadd.f32 %v1063, %v1233
  %v1265 = vadd.f32 %v1064, %v1238
  %v1266 = vadd.f32 %v1065, %v1243
  %v1267 = vadd.f32 %v1066, %v1248
  %v1268 = vld [vmem:[#allocation2 + $0xa] sm:$0xff]
  %v1269 = vld [vmem:[#allocation2 + $0x12] sm:$0xff]
  %v1270 = vld [vmem:[#allocation2 + $0x1a] sm:$0xff]
  %v1271 = vld [vmem:[#allocation2 + $0x22] sm:$0xff]
  %v1272 = vld [vmem:[#allocation2 + $0x2a] sm:$0xff]
  %v1273 = vld [vmem:[#allocation2 + $0x32] sm:$0xff]
  %v1274 = vld [vmem:[#allocation2 + $0x3a] sm:$0xff]
  %v1275 = vld [vmem:[#allocation2 + $0x42] sm:$0xff]
  %v1276 = vld [vmem:[#allocation2 + $0x4a] sm:$0xff]
  %v1277 = vld [vmem:[#allocation2 + $0x52] sm:$0xff]
  %v1278 = vld [vmem:[#allocation2 + $0x5a] sm:$0xff]
  %v1279 = vld [vmem:[#allocation2 + $0x62] sm:$0xff]
  %v1280 = vld [vmem:[#allocation2 + $0x6a] sm:$0xff]
  %v1281 = vld [vmem:[#allocation2 + $0x72] sm:$0xff]
  %v1282 = vld [vmem:[#allocation2 + $0x7a] sm:$0xff]
  %v1283 = vld [vmem:[#allocation2 + $0x82] sm:$0xff]
  %v1284 = vld [vmem:[#allocation2 + $0x8a] sm:$0xf]
  %s1285 = scalar_lea.vmem %s3, 640
  %v1286 = vld [vmem:[%s1285] sm:$0xff]
  %v1287 = vld [vmem:[%s1285 + $0x8] sm:$0xff]
  %v1288 = vld [vmem:[%s1285 + $0x10] sm:$0xff]
  %v1289 = vld [vmem:[%s1285 + $0x18] sm:$0xff]
  %v1290 = vld [vmem:[%s1285 + $0x20] sm:$0xff]
  %v1291 = vld [vmem:[%s1285 + $0x28] sm:$0xff]
  %v1292 = vld [vmem:[%s1285 + $0x30] sm:$0xff]
  %v1293 = vld [vmem:[%s1285 + $0x38] sm:$0xff]
  %v1294 = vld [vmem:[%s1285 + $0x40] sm:$0xff]
  %v1295 = vld [vmem:[%s1285 + $0x48] sm:$0xff]
  %v1296 = vld [vmem:[%s1285 + $0x50] sm:$0xff]
  %v1297 = vld [vmem:[%s1285 + $0x58] sm:$0xff]
  %v1298 = vld [vmem:[%s1285 + $0x60] sm:$0xff]
  %v1299 = vld [vmem:[%s1285 + $0x68] sm:$0xff]
  %v1300 = vld [vmem:[%s1285 + $0x70] sm:$0xff]
  %v1301 = vld [vmem:[%s1285 + $0x78] sm:$0xff]
  %1302 = vmatprep.subr.mxu0 0.0
  %1303 = vmatpush1.msra.mxu0 %v1301
  %1304 = vmatprep.subr.mxu0 0.0
  %1305 = vmatpush1.msra.mxu0 %v1300
  %1306 = vmatprep.subr.mxu0 0.0
  %1307 = vmatpush1.msra.mxu0 %v1299
  %1308 = vmatprep.subr.mxu0 0.0
  %1309 = vmatpush1.msra.mxu0 %v1298
  %1310 = vmatprep.subr.mxu0 0.0
  %1311 = vmatpush1.msra.mxu0 %v1297
  %1312 = vmatprep.subr.mxu0 0.0
  %1313 = vmatpush1.msra.mxu0 %v1296
  %1314 = vmatprep.subr.mxu0 0.0
  %1315 = vmatpush1.msra.mxu0 %v1295
  %1316 = vmatprep.subr.mxu0 0.0
  %1317 = vmatpush1.msra.mxu0 %v1294
  %1318 = vmatprep.subr.mxu0 0.0
  %1319 = vmatpush1.msra.mxu0 %v1293
  %1320 = vmatprep.subr.mxu0 0.0
  %1321 = vmatpush1.msra.mxu0 %v1292
  %1322 = vmatprep.subr.mxu0 0.0
  %1323 = vmatpush1.msra.mxu0 %v1291
  %1324 = vmatprep.subr.mxu0 0.0
  %1325 = vmatpush1.msra.mxu0 %v1290
  %1326 = vmatprep.subr.mxu0 0.0
  %1327 = vmatpush1.msra.mxu0 %v1289
  %1328 = vmatprep.subr.mxu0 0.0
  %1329 = vmatpush1.msra.mxu0 %v1288
  %1330 = vmatprep.subr.mxu0 0.0
  %1331 = vmatpush1.msra.mxu0 %v1287
  %1332 = vmatprep.subr.mxu0 0.0
  %1333 = vmatpush1.msra.mxu0 %v1286
  %1334 = vmatprep.subr.mxu0 0.0
  %1335 = vmatpush2.msra.mxu0 0.0
  %1336 = vmatprep.subr.mxu0 0.0
  %1337 = vmatpush2.msra.mxu0 0.0
  %1338 = vmatprep.subr.mxu0 0.0
  %1339 = vmatpush2.msra.mxu0 0.0
  %1340 = vmatprep.subr.mxu0 0.0
  %1341 = vmatpush2.msra.mxu0 0.0
  %1342 = vmatprep.subr.mxu0 0.0
  %1343 = vmatpush2.msra.mxu0 0.0
  %1344 = vmatprep.subr.mxu0 0.0
  %1345 = vmatpush2.msra.mxu0 0.0
  %1346 = vmatprep.subr.mxu0 0.0
  %1347 = vmatpush2.msra.mxu0 0.0
  %1348 = vmatprep.subr.mxu0 0.0
  %1349 = vmatpush2.msra.mxu0 0.0
  %1350 = vmatprep.subr.mxu0 0.0
  %1351 = vmatpush2.msra.mxu0 0.0
  %1352 = vmatprep.subr.mxu0 0.0
  %1353 = vmatpush2.msra.mxu0 0.0
  %1354 = vmatprep.subr.mxu0 0.0
  %1355 = vmatpush2.msra.mxu0 0.0
  %1356 = vmatprep.subr.mxu0 0.0
  %1357 = vmatpush2.msra.mxu0 0.0
  %1358 = vmatprep.subr.mxu0 0.0
  %1359 = vmatpush2.msra.mxu0 0.0
  %1360 = vmatprep.subr.mxu0 0.0
  %1361 = vmatpush2.msra.mxu0 0.0
  %1362 = vmatprep.subr.mxu0 0.0
  %1363 = vmatpush2.msra.mxu0 0.0
  %1364 = vmatprep.subr.mxu0 0.0
  %1365 = vmatpush2.msra.mxu0 0.0
  %1366 = vmatprep.mubr.f32.mxu0 0.0
  %1367 = vmatmul.mubr.f32.gmra.mxu0 %v1268
  %v1368 = vpop.f32.mrf.mxu0
  %v1369 = vadd.f32 0.0, %v1368
  %v1370 = vpop.f32.mrf.mxu0
  %1371 = vmatprep.mubr.f32.mxu0 0.0
  %1372 = vmatmul.mubr.f32.gmra.mxu0 %v1269
  %v1373 = vpop.f32.mrf.mxu0
  %v1374 = vadd.f32 0.0, %v1373
  %v1375 = vpop.f32.mrf.mxu0
  %1376 = vmatprep.mubr.f32.mxu0 0.0
  %1377 = vmatmul.mubr.f32.gmra.mxu0 %v1270
  %v1378 = vpop.f32.mrf.mxu0
  %v1379 = vadd.f32 0.0, %v1378
  %v1380 = vpop.f32.mrf.mxu0
  %1381 = vmatprep.mubr.f32.mxu0 0.0
  %1382 = vmatmul.mubr.f32.gmra.mxu0 %v1271
  %v1383 = vpop.f32.mrf.mxu0
  %v1384 = vadd.f32 0.0, %v1383
  %v1385 = vpop.f32.mrf.mxu0
  %1386 = vmatprep.mubr.f32.mxu0 0.0
  %1387 = vmatmul.mubr.f32.gmra.mxu0 %v1272
  %v1388 = vpop.f32.mrf.mxu0
  %v1389 = vadd.f32 0.0, %v1388
  %v1390 = vpop.f32.mrf.mxu0
  %1391 = vmatprep.mubr.f32.mxu0 0.0
  %1392 = vmatmul.mubr.f32.gmra.mxu0 %v1273
  %v1393 = vpop.f32.mrf.mxu0
  %v1394 = vadd.f32 0.0, %v1393
  %v1395 = vpop.f32.mrf.mxu0
  %1396 = vmatprep.mubr.f32.mxu0 0.0
  %1397 = vmatmul.mubr.f32.gmra.mxu0 %v1274
  %v1398 = vpop.f32.mrf.mxu0
  %v1399 = vadd.f32 0.0, %v1398
  %v1400 = vpop.f32.mrf.mxu0
  %1401 = vmatprep.mubr.f32.mxu0 0.0
  %1402 = vmatmul.mubr.f32.gmra.mxu0 %v1275
  %v1403 = vpop.f32.mrf.mxu0
  %v1404 = vadd.f32 0.0, %v1403
  %v1405 = vpop.f32.mrf.mxu0
  %1406 = vmatprep.mubr.f32.mxu0 0.0
  %1407 = vmatmul.mubr.f32.gmra.mxu0 %v1276
  %v1408 = vpop.f32.mrf.mxu0
  %v1409 = vadd.f32 0.0, %v1408
  %v1410 = vpop.f32.mrf.mxu0
  %1411 = vmatprep.mubr.f32.mxu0 0.0
  %1412 = vmatmul.mubr.f32.gmra.mxu0 %v1277
  %v1413 = vpop.f32.mrf.mxu0
  %v1414 = vadd.f32 0.0, %v1413
  %v1415 = vpop.f32.mrf.mxu0
  %1416 = vmatprep.mubr.f32.mxu0 0.0
  %1417 = vmatmul.mubr.f32.gmra.mxu0 %v1278
  %v1418 = vpop.f32.mrf.mxu0
  %v1419 = vadd.f32 0.0, %v1418
  %v1420 = vpop.f32.mrf.mxu0
  %1421 = vmatprep.mubr.f32.mxu0 0.0
  %1422 = vmatmul.mubr.f32.gmra.mxu0 %v1279
  %v1423 = vpop.f32.mrf.mxu0
  %v1424 = vadd.f32 0.0, %v1423
  %v1425 = vpop.f32.mrf.mxu0
  %1426 = vmatprep.mubr.f32.mxu0 0.0
  %1427 = vmatmul.mubr.f32.gmra.mxu0 %v1280
  %v1428 = vpop.f32.mrf.mxu0
  %v1429 = vadd.f32 0.0, %v1428
  %v1430 = vpop.f32.mrf.mxu0
  %1431 = vmatprep.mubr.f32.mxu0 0.0
  %1432 = vmatmul.mubr.f32.gmra.mxu0 %v1281
  %v1433 = vpop.f32.mrf.mxu0
  %v1434 = vadd.f32 0.0, %v1433
  %v1435 = vpop.f32.mrf.mxu0
  %1436 = vmatprep.mubr.f32.mxu0 0.0
  %1437 = vmatmul.mubr.f32.gmra.mxu0 %v1282
  %v1438 = vpop.f32.mrf.mxu0
  %v1439 = vadd.f32 0.0, %v1438
  %v1440 = vpop.f32.mrf.mxu0
  %1441 = vmatprep.mubr.f32.mxu0 0.0
  %1442 = vmatmul.mubr.f32.gmra.mxu0 %v1283
  %v1443 = vpop.f32.mrf.mxu0
  %v1444 = vadd.f32 0.0, %v1443
  %v1445 = vpop.f32.mrf.mxu0
  %1446 = vmatprep.mubr.f32.mxu0 0.0
  %1447 = vmatmul.mubr.f32.gmra.mxu0 %v1284
  %v1448 = vpop.f32.mrf.mxu0
  %v1449 = vadd.f32 0.0, %v1448
  %v1450 = vpop.f32.mrf.mxu0
  %1451 = vdwg.mxu0
  %v1452 = vadd.f32 %v1251, %v1369
  %v1453 = vadd.f32 %v1252, %v1374
  %v1454 = vadd.f32 %v1253, %v1379
  %v1455 = vadd.f32 %v1254, %v1384
  %v1456 = vadd.f32 %v1255, %v1389
  %v1457 = vadd.f32 %v1256, %v1394
  %v1458 = vadd.f32 %v1257, %v1399
  %v1459 = vadd.f32 %v1258, %v1404
  %v1460 = vadd.f32 %v1259, %v1409
  %v1461 = vadd.f32 %v1260, %v1414
  %v1462 = vadd.f32 %v1261, %v1419
  %v1463 = vadd.f32 %v1262, %v1424
  %v1464 = vadd.f32 %v1263, %v1429
  %v1465 = vadd.f32 %v1264, %v1434
  %v1466 = vadd.f32 %v1265, %v1439
  %v1467 = vadd.f32 %v1266, %v1444
  %v1468 = vadd.f32 %v1267, %v1449
  %v1469 = vld [vmem:[#allocation2 + $0xb] sm:$0xff]
  %v1470 = vld [vmem:[#allocation2 + $0x13] sm:$0xff]
  %v1471 = vld [vmem:[#allocation2 + $0x1b] sm:$0xff]
  %v1472 = vld [vmem:[#allocation2 + $0x23] sm:$0xff]
  %v1473 = vld [vmem:[#allocation2 + $0x2b] sm:$0xff]
  %v1474 = vld [vmem:[#allocation2 + $0x33] sm:$0xff]
  %v1475 = vld [vmem:[#allocation2 + $0x3b] sm:$0xff]
  %v1476 = vld [vmem:[#allocation2 + $0x43] sm:$0xff]
  %v1477 = vld [vmem:[#allocation2 + $0x4b] sm:$0xff]
  %v1478 = vld [vmem:[#allocation2 + $0x53] sm:$0xff]
  %v1479 = vld [vmem:[#allocation2 + $0x5b] sm:$0xff]
  %v1480 = vld [vmem:[#allocation2 + $0x63] sm:$0xff]
  %v1481 = vld [vmem:[#allocation2 + $0x6b] sm:$0xff]
  %v1482 = vld [vmem:[#allocation2 + $0x73] sm:$0xff]
  %v1483 = vld [vmem:[#allocation2 + $0x7b] sm:$0xff]
  %v1484 = vld [vmem:[#allocation2 + $0x83] sm:$0xff]
  %v1485 = vld [vmem:[#allocation2 + $0x8b] sm:$0xf]
  %s1486 = scalar_lea.vmem %s3, 768
  %v1487 = vld [vmem:[%s1486] sm:$0xff]
  %v1488 = vld [vmem:[%s1486 + $0x8] sm:$0xff]
  %v1489 = vld [vmem:[%s1486 + $0x10] sm:$0xff]
  %v1490 = vld [vmem:[%s1486 + $0x18] sm:$0xff]
  %v1491 = vld [vmem:[%s1486 + $0x20] sm:$0xff]
  %v1492 = vld [vmem:[%s1486 + $0x28] sm:$0xff]
  %v1493 = vld [vmem:[%s1486 + $0x30] sm:$0xff]
  %v1494 = vld [vmem:[%s1486 + $0x38] sm:$0xff]
  %v1495 = vld [vmem:[%s1486 + $0x40] sm:$0xff]
  %v1496 = vld [vmem:[%s1486 + $0x48] sm:$0xff]
  %v1497 = vld [vmem:[%s1486 + $0x50] sm:$0xff]
  %v1498 = vld [vmem:[%s1486 + $0x58] sm:$0xff]
  %v1499 = vld [vmem:[%s1486 + $0x60] sm:$0xff]
  %v1500 = vld [vmem:[%s1486 + $0x68] sm:$0xff]
  %v1501 = vld [vmem:[%s1486 + $0x70] sm:$0xff]
  %v1502 = vld [vmem:[%s1486 + $0x78] sm:$0xff]
  %1503 = vmatprep.subr.mxu0 0.0
  %1504 = vmatpush1.msra.mxu0 %v1502
  %1505 = vmatprep.subr.mxu0 0.0
  %1506 = vmatpush1.msra.mxu0 %v1501
  %1507 = vmatprep.subr.mxu0 0.0
  %1508 = vmatpush1.msra.mxu0 %v1500
  %1509 = vmatprep.subr.mxu0 0.0
  %1510 = vmatpush1.msra.mxu0 %v1499
  %1511 = vmatprep.subr.mxu0 0.0
  %1512 = vmatpush1.msra.mxu0 %v1498
  %1513 = vmatprep.subr.mxu0 0.0
  %1514 = vmatpush1.msra.mxu0 %v1497
  %1515 = vmatprep.subr.mxu0 0.0
  %1516 = vmatpush1.msra.mxu0 %v1496
  %1517 = vmatprep.subr.mxu0 0.0
  %1518 = vmatpush1.msra.mxu0 %v1495
  %1519 = vmatprep.subr.mxu0 0.0
  %1520 = vmatpush1.msra.mxu0 %v1494
  %1521 = vmatprep.subr.mxu0 0.0
  %1522 = vmatpush1.msra.mxu0 %v1493
  %1523 = vmatprep.subr.mxu0 0.0
  %1524 = vmatpush1.msra.mxu0 %v1492
  %1525 = vmatprep.subr.mxu0 0.0
  %1526 = vmatpush1.msra.mxu0 %v1491
  %1527 = vmatprep.subr.mxu0 0.0
  %1528 = vmatpush1.msra.mxu0 %v1490
  %1529 = vmatprep.subr.mxu0 0.0
  %1530 = vmatpush1.msra.mxu0 %v1489
  %1531 = vmatprep.subr.mxu0 0.0
  %1532 = vmatpush1.msra.mxu0 %v1488
  %1533 = vmatprep.subr.mxu0 0.0
  %1534 = vmatpush1.msra.mxu0 %v1487
  %1535 = vmatprep.subr.mxu0 0.0
  %1536 = vmatpush2.msra.mxu0 0.0
  %1537 = vmatprep.subr.mxu0 0.0
  %1538 = vmatpush2.msra.mxu0 0.0
  %1539 = vmatprep.subr.mxu0 0.0
  %1540 = vmatpush2.msra.mxu0 0.0
  %1541 = vmatprep.subr.mxu0 0.0
  %1542 = vmatpush2.msra.mxu0 0.0
  %1543 = vmatprep.subr.mxu0 0.0
  %1544 = vmatpush2.msra.mxu0 0.0
  %1545 = vmatprep.subr.mxu0 0.0
  %1546 = vmatpush2.msra.mxu0 0.0
  %1547 = vmatprep.subr.mxu0 0.0
  %1548 = vmatpush2.msra.mxu0 0.0
  %1549 = vmatprep.subr.mxu0 0.0
  %1550 = vmatpush2.msra.mxu0 0.0
  %1551 = vmatprep.subr.mxu0 0.0
  %1552 = vmatpush2.msra.mxu0 0.0
  %1553 = vmatprep.subr.mxu0 0.0
  %1554 = vmatpush2.msra.mxu0 0.0
  %1555 = vmatprep.subr.mxu0 0.0
  %1556 = vmatpush2.msra.mxu0 0.0
  %1557 = vmatprep.subr.mxu0 0.0
  %1558 = vmatpush2.msra.mxu0 0.0
  %1559 = vmatprep.subr.mxu0 0.0
  %1560 = vmatpush2.msra.mxu0 0.0
  %1561 = vmatprep.subr.mxu0 0.0
  %1562 = vmatpush2.msra.mxu0 0.0
  %1563 = vmatprep.subr.mxu0 0.0
  %1564 = vmatpush2.msra.mxu0 0.0
  %1565 = vmatprep.subr.mxu0 0.0
  %1566 = vmatpush2.msra.mxu0 0.0
  %1567 = vmatprep.mubr.f32.mxu0 0.0
  %1568 = vmatmul.mubr.f32.gmra.mxu0 %v1469
  %v1569 = vpop.f32.mrf.mxu0
  %v1570 = vadd.f32 0.0, %v1569
  %v1571 = vpop.f32.mrf.mxu0
  %1572 = vmatprep.mubr.f32.mxu0 0.0
  %1573 = vmatmul.mubr.f32.gmra.mxu0 %v1470
  %v1574 = vpop.f32.mrf.mxu0
  %v1575 = vadd.f32 0.0, %v1574
  %v1576 = vpop.f32.mrf.mxu0
  %1577 = vmatprep.mubr.f32.mxu0 0.0
  %1578 = vmatmul.mubr.f32.gmra.mxu0 %v1471
  %v1579 = vpop.f32.mrf.mxu0
  %v1580 = vadd.f32 0.0, %v1579
  %v1581 = vpop.f32.mrf.mxu0
  %1582 = vmatprep.mubr.f32.mxu0 0.0
  %1583 = vmatmul.mubr.f32.gmra.mxu0 %v1472
  %v1584 = vpop.f32.mrf.mxu0
  %v1585 = vadd.f32 0.0, %v1584
  %v1586 = vpop.f32.mrf.mxu0
  %1587 = vmatprep.mubr.f32.mxu0 0.0
  %1588 = vmatmul.mubr.f32.gmra.mxu0 %v1473
  %v1589 = vpop.f32.mrf.mxu0
  %v1590 = vadd.f32 0.0, %v1589
  %v1591 = vpop.f32.mrf.mxu0
  %1592 = vmatprep.mubr.f32.mxu0 0.0
  %1593 = vmatmul.mubr.f32.gmra.mxu0 %v1474
  %v1594 = vpop.f32.mrf.mxu0
  %v1595 = vadd.f32 0.0, %v1594
  %v1596 = vpop.f32.mrf.mxu0
  %1597 = vmatprep.mubr.f32.mxu0 0.0
  %1598 = vmatmul.mubr.f32.gmra.mxu0 %v1475
  %v1599 = vpop.f32.mrf.mxu0
  %v1600 = vadd.f32 0.0, %v1599
  %v1601 = vpop.f32.mrf.mxu0
  %1602 = vmatprep.mubr.f32.mxu0 0.0
  %1603 = vmatmul.mubr.f32.gmra.mxu0 %v1476
  %v1604 = vpop.f32.mrf.mxu0
  %v1605 = vadd.f32 0.0, %v1604
  %v1606 = vpop.f32.mrf.mxu0
  %1607 = vmatprep.mubr.f32.mxu0 0.0
  %1608 = vmatmul.mubr.f32.gmra.mxu0 %v1477
  %v1609 = vpop.f32.mrf.mxu0
  %v1610 = vadd.f32 0.0, %v1609
  %v1611 = vpop.f32.mrf.mxu0
  %1612 = vmatprep.mubr.f32.mxu0 0.0
  %1613 = vmatmul.mubr.f32.gmra.mxu0 %v1478
  %v1614 = vpop.f32.mrf.mxu0
  %v1615 = vadd.f32 0.0, %v1614
  %v1616 = vpop.f32.mrf.mxu0
  %1617 = vmatprep.mubr.f32.mxu0 0.0
  %1618 = vmatmul.mubr.f32.gmra.mxu0 %v1479
  %v1619 = vpop.f32.mrf.mxu0
  %v1620 = vadd.f32 0.0, %v1619
  %v1621 = vpop.f32.mrf.mxu0
  %1622 = vmatprep.mubr.f32.mxu0 0.0
  %1623 = vmatmul.mubr.f32.gmra.mxu0 %v1480
  %v1624 = vpop.f32.mrf.mxu0
  %v1625 = vadd.f32 0.0, %v1624
  %v1626 = vpop.f32.mrf.mxu0
  %1627 = vmatprep.mubr.f32.mxu0 0.0
  %1628 = vmatmul.mubr.f32.gmra.mxu0 %v1481
  %v1629 = vpop.f32.mrf.mxu0
  %v1630 = vadd.f32 0.0, %v1629
  %v1631 = vpop.f32.mrf.mxu0
  %1632 = vmatprep.mubr.f32.mxu0 0.0
  %1633 = vmatmul.mubr.f32.gmra.mxu0 %v1482
  %v1634 = vpop.f32.mrf.mxu0
  %v1635 = vadd.f32 0.0, %v1634
  %v1636 = vpop.f32.mrf.mxu0
  %1637 = vmatprep.mubr.f32.mxu0 0.0
  %1638 = vmatmul.mubr.f32.gmra.mxu0 %v1483
  %v1639 = vpop.f32.mrf.mxu0
  %v1640 = vadd.f32 0.0, %v1639
  %v1641 = vpop.f32.mrf.mxu0
  %1642 = vmatprep.mubr.f32.mxu0 0.0
  %1643 = vmatmul.mubr.f32.gmra.mxu0 %v1484
  %v1644 = vpop.f32.mrf.mxu0
  %v1645 = vadd.f32 0.0, %v1644
  %v1646 = vpop.f32.mrf.mxu0
  %1647 = vmatprep.mubr.f32.mxu0 0.0
  %1648 = vmatmul.mubr.f32.gmra.mxu0 %v1485
  %v1649 = vpop.f32.mrf.mxu0
  %v1650 = vadd.f32 0.0, %v1649
  %v1651 = vpop.f32.mrf.mxu0
  %1652 = vdwg.mxu0
  %v1653 = vadd.f32 %v1452, %v1570
  %v1654 = vadd.f32 %v1453, %v1575
  %v1655 = vadd.f32 %v1454, %v1580
  %v1656 = vadd.f32 %v1455, %v1585
  %v1657 = vadd.f32 %v1456, %v1590
  %v1658 = vadd.f32 %v1457, %v1595
  %v1659 = vadd.f32 %v1458, %v1600
  %v1660 = vadd.f32 %v1459, %v1605
  %v1661 = vadd.f32 %v1460, %v1610
  %v1662 = vadd.f32 %v1461, %v1615
  %v1663 = vadd.f32 %v1462, %v1620
  %v1664 = vadd.f32 %v1463, %v1625
  %v1665 = vadd.f32 %v1464, %v1630
  %v1666 = vadd.f32 %v1465, %v1635
  %v1667 = vadd.f32 %v1466, %v1640
  %v1668 = vadd.f32 %v1467, %v1645
  %v1669 = vadd.f32 %v1468, %v1650
  %v1670 = vld [vmem:[#allocation2 + $0xc] sm:$0xff]
  %v1671 = vld [vmem:[#allocation2 + $0x14] sm:$0xff]
  %v1672 = vld [vmem:[#allocation2 + $0x1c] sm:$0xff]
  %v1673 = vld [vmem:[#allocation2 + $0x24] sm:$0xff]
  %v1674 = vld [vmem:[#allocation2 + $0x2c] sm:$0xff]
  %v1675 = vld [vmem:[#allocation2 + $0x34] sm:$0xff]
  %v1676 = vld [vmem:[#allocation2 + $0x3c] sm:$0xff]
  %v1677 = vld [vmem:[#allocation2 + $0x44] sm:$0xff]
  %v1678 = vld [vmem:[#allocation2 + $0x4c] sm:$0xff]
  %v1679 = vld [vmem:[#allocation2 + $0x54] sm:$0xff]
  %v1680 = vld [vmem:[#allocation2 + $0x5c] sm:$0xff]
  %v1681 = vld [vmem:[#allocation2 + $0x64] sm:$0xff]
  %v1682 = vld [vmem:[#allocation2 + $0x6c] sm:$0xff]
  %v1683 = vld [vmem:[#allocation2 + $0x74] sm:$0xff]
  %v1684 = vld [vmem:[#allocation2 + $0x7c] sm:$0xff]
  %v1685 = vld [vmem:[#allocation2 + $0x84] sm:$0xff]
  %v1686 = vld [vmem:[#allocation2 + $0x8c] sm:$0xf]
  %s1687 = scalar_lea.vmem %s3, 896
  %v1688 = vld [vmem:[%s1687] sm:$0xff]
  %v1689 = vld [vmem:[%s1687 + $0x8] sm:$0xff]
  %v1690 = vld [vmem:[%s1687 + $0x10] sm:$0xff]
  %v1691 = vld [vmem:[%s1687 + $0x18] sm:$0xff]
  %v1692 = vld [vmem:[%s1687 + $0x20] sm:$0xff]
  %v1693 = vld [vmem:[%s1687 + $0x28] sm:$0xff]
  %v1694 = vld [vmem:[%s1687 + $0x30] sm:$0xff]
  %v1695 = vld [vmem:[%s1687 + $0x38] sm:$0xff]
  %v1696 = vld [vmem:[%s1687 + $0x40] sm:$0xff]
  %v1697 = vld [vmem:[%s1687 + $0x48] sm:$0xff]
  %v1698 = vld [vmem:[%s1687 + $0x50] sm:$0xff]
  %v1699 = vld [vmem:[%s1687 + $0x58] sm:$0xff]
  %v1700 = vld [vmem:[%s1687 + $0x60] sm:$0xff]
  %v1701 = vld [vmem:[%s1687 + $0x68] sm:$0xff]
  %v1702 = vld [vmem:[%s1687 + $0x70] sm:$0xff]
  %v1703 = vld [vmem:[%s1687 + $0x78] sm:$0xff]
  %1704 = vmatprep.subr.mxu0 0.0
  %1705 = vmatpush1.msra.mxu0 %v1703
  %1706 = vmatprep.subr.mxu0 0.0
  %1707 = vmatpush1.msra.mxu0 %v1702
  %1708 = vmatprep.subr.mxu0 0.0
  %1709 = vmatpush1.msra.mxu0 %v1701
  %1710 = vmatprep.subr.mxu0 0.0
  %1711 = vmatpush1.msra.mxu0 %v1700
  %1712 = vmatprep.subr.mxu0 0.0
  %1713 = vmatpush1.msra.mxu0 %v1699
  %1714 = vmatprep.subr.mxu0 0.0
  %1715 = vmatpush1.msra.mxu0 %v1698
  %1716 = vmatprep.subr.mxu0 0.0
  %1717 = vmatpush1.msra.mxu0 %v1697
  %1718 = vmatprep.subr.mxu0 0.0
  %1719 = vmatpush1.msra.mxu0 %v1696
  %1720 = vmatprep.subr.mxu0 0.0
  %1721 = vmatpush1.msra.mxu0 %v1695
  %1722 = vmatprep.subr.mxu0 0.0
  %1723 = vmatpush1.msra.mxu0 %v1694
  %1724 = vmatprep.subr.mxu0 0.0
  %1725 = vmatpush1.msra.mxu0 %v1693
  %1726 = vmatprep.subr.mxu0 0.0
  %1727 = vmatpush1.msra.mxu0 %v1692
  %1728 = vmatprep.subr.mxu0 0.0
  %1729 = vmatpush1.msra.mxu0 %v1691
  %1730 = vmatprep.subr.mxu0 0.0
  %1731 = vmatpush1.msra.mxu0 %v1690
  %1732 = vmatprep.subr.mxu0 0.0
  %1733 = vmatpush1.msra.mxu0 %v1689
  %1734 = vmatprep.subr.mxu0 0.0
  %1735 = vmatpush1.msra.mxu0 %v1688
  %1736 = vmatprep.subr.mxu0 0.0
  %1737 = vmatpush2.msra.mxu0 0.0
  %1738 = vmatprep.subr.mxu0 0.0
  %1739 = vmatpush2.msra.mxu0 0.0
  %1740 = vmatprep.subr.mxu0 0.0
  %1741 = vmatpush2.msra.mxu0 0.0
  %1742 = vmatprep.subr.mxu0 0.0
  %1743 = vmatpush2.msra.mxu0 0.0
  %1744 = vmatprep.subr.mxu0 0.0
  %1745 = vmatpush2.msra.mxu0 0.0
  %1746 = vmatprep.subr.mxu0 0.0
  %1747 = vmatpush2.msra.mxu0 0.0
  %1748 = vmatprep.subr.mxu0 0.0
  %1749 = vmatpush2.msra.mxu0 0.0
  %1750 = vmatprep.subr.mxu0 0.0
  %1751 = vmatpush2.msra.mxu0 0.0
  %1752 = vmatprep.subr.mxu0 0.0
  %1753 = vmatpush2.msra.mxu0 0.0
  %1754 = vmatprep.subr.mxu0 0.0
  %1755 = vmatpush2.msra.mxu0 0.0
  %1756 = vmatprep.subr.mxu0 0.0
  %1757 = vmatpush2.msra.mxu0 0.0
  %1758 = vmatprep.subr.mxu0 0.0
  %1759 = vmatpush2.msra.mxu0 0.0
  %1760 = vmatprep.subr.mxu0 0.0
  %1761 = vmatpush2.msra.mxu0 0.0
  %1762 = vmatprep.subr.mxu0 0.0
  %1763 = vmatpush2.msra.mxu0 0.0
  %1764 = vmatprep.subr.mxu0 0.0
  %1765 = vmatpush2.msra.mxu0 0.0
  %1766 = vmatprep.subr.mxu0 0.0
  %1767 = vmatpush2.msra.mxu0 0.0
  %1768 = vmatprep.mubr.f32.mxu0 0.0
  %1769 = vmatmul.mubr.f32.gmra.mxu0 %v1670
  %v1770 = vpop.f32.mrf.mxu0
  %v1771 = vadd.f32 0.0, %v1770
  %v1772 = vpop.f32.mrf.mxu0
  %1773 = vmatprep.mubr.f32.mxu0 0.0
  %1774 = vmatmul.mubr.f32.gmra.mxu0 %v1671
  %v1775 = vpop.f32.mrf.mxu0
  %v1776 = vadd.f32 0.0, %v1775
  %v1777 = vpop.f32.mrf.mxu0
  %1778 = vmatprep.mubr.f32.mxu0 0.0
  %1779 = vmatmul.mubr.f32.gmra.mxu0 %v1672
  %v1780 = vpop.f32.mrf.mxu0
  %v1781 = vadd.f32 0.0, %v1780
  %v1782 = vpop.f32.mrf.mxu0
  %1783 = vmatprep.mubr.f32.mxu0 0.0
  %1784 = vmatmul.mubr.f32.gmra.mxu0 %v1673
  %v1785 = vpop.f32.mrf.mxu0
  %v1786 = vadd.f32 0.0, %v1785
  %v1787 = vpop.f32.mrf.mxu0
  %1788 = vmatprep.mubr.f32.mxu0 0.0
  %1789 = vmatmul.mubr.f32.gmra.mxu0 %v1674
  %v1790 = vpop.f32.mrf.mxu0
  %v1791 = vadd.f32 0.0, %v1790
  %v1792 = vpop.f32.mrf.mxu0
  %1793 = vmatprep.mubr.f32.mxu0 0.0
  %1794 = vmatmul.mubr.f32.gmra.mxu0 %v1675
  %v1795 = vpop.f32.mrf.mxu0
  %v1796 = vadd.f32 0.0, %v1795
  %v1797 = vpop.f32.mrf.mxu0
  %1798 = vmatprep.mubr.f32.mxu0 0.0
  %1799 = vmatmul.mubr.f32.gmra.mxu0 %v1676
  %v1800 = vpop.f32.mrf.mxu0
  %v1801 = vadd.f32 0.0, %v1800
  %v1802 = vpop.f32.mrf.mxu0
  %1803 = vmatprep.mubr.f32.mxu0 0.0
  %1804 = vmatmul.mubr.f32.gmra.mxu0 %v1677
  %v1805 = vpop.f32.mrf.mxu0
  %v1806 = vadd.f32 0.0, %v1805
  %v1807 = vpop.f32.mrf.mxu0
  %1808 = vmatprep.mubr.f32.mxu0 0.0
  %1809 = vmatmul.mubr.f32.gmra.mxu0 %v1678
  %v1810 = vpop.f32.mrf.mxu0
  %v1811 = vadd.f32 0.0, %v1810
  %v1812 = vpop.f32.mrf.mxu0
  %1813 = vmatprep.mubr.f32.mxu0 0.0
  %1814 = vmatmul.mubr.f32.gmra.mxu0 %v1679
  %v1815 = vpop.f32.mrf.mxu0
  %v1816 = vadd.f32 0.0, %v1815
  %v1817 = vpop.f32.mrf.mxu0
  %1818 = vmatprep.mubr.f32.mxu0 0.0
  %1819 = vmatmul.mubr.f32.gmra.mxu0 %v1680
  %v1820 = vpop.f32.mrf.mxu0
  %v1821 = vadd.f32 0.0, %v1820
  %v1822 = vpop.f32.mrf.mxu0
  %1823 = vmatprep.mubr.f32.mxu0 0.0
  %1824 = vmatmul.mubr.f32.gmra.mxu0 %v1681
  %v1825 = vpop.f32.mrf.mxu0
  %v1826 = vadd.f32 0.0, %v1825
  %v1827 = vpop.f32.mrf.mxu0
  %1828 = vmatprep.mubr.f32.mxu0 0.0
  %1829 = vmatmul.mubr.f32.gmra.mxu0 %v1682
  %v1830 = vpop.f32.mrf.mxu0
  %v1831 = vadd.f32 0.0, %v1830
  %v1832 = vpop.f32.mrf.mxu0
  %1833 = vmatprep.mubr.f32.mxu0 0.0
  %1834 = vmatmul.mubr.f32.gmra.mxu0 %v1683
  %v1835 = vpop.f32.mrf.mxu0
  %v1836 = vadd.f32 0.0, %v1835
  %v1837 = vpop.f32.mrf.mxu0
  %1838 = vmatprep.mubr.f32.mxu0 0.0
  %1839 = vmatmul.mubr.f32.gmra.mxu0 %v1684
  %v1840 = vpop.f32.mrf.mxu0
  %v1841 = vadd.f32 0.0, %v1840
  %v1842 = vpop.f32.mrf.mxu0
  %1843 = vmatprep.mubr.f32.mxu0 0.0
  %1844 = vmatmul.mubr.f32.gmra.mxu0 %v1685
  %v1845 = vpop.f32.mrf.mxu0
  %v1846 = vadd.f32 0.0, %v1845
  %v1847 = vpop.f32.mrf.mxu0
  %1848 = vmatprep.mubr.f32.mxu0 0.0
  %1849 = vmatmul.mubr.f32.gmra.mxu0 %v1686
  %v1850 = vpop.f32.mrf.mxu0
  %v1851 = vadd.f32 0.0, %v1850
  %v1852 = vpop.f32.mrf.mxu0
  %1853 = vdwg.mxu0
  %v1854 = vadd.f32 %v1653, %v1771
  %v1855 = vadd.f32 %v1654, %v1776
  %v1856 = vadd.f32 %v1655, %v1781
  %v1857 = vadd.f32 %v1656, %v1786
  %v1858 = vadd.f32 %v1657, %v1791
  %v1859 = vadd.f32 %v1658, %v1796
  %v1860 = vadd.f32 %v1659, %v1801
  %v1861 = vadd.f32 %v1660, %v1806
  %v1862 = vadd.f32 %v1661, %v1811
  %v1863 = vadd.f32 %v1662, %v1816
  %v1864 = vadd.f32 %v1663, %v1821
  %v1865 = vadd.f32 %v1664, %v1826
  %v1866 = vadd.f32 %v1665, %v1831
  %v1867 = vadd.f32 %v1666, %v1836
  %v1868 = vadd.f32 %v1667, %v1841
  %v1869 = vadd.f32 %v1668, %v1846
  %v1870 = vadd.f32 %v1669, %v1851
  %v1871 = vld [vmem:[#allocation2 + $0x12] sm:$0xff]
  %v1872 = vld [vmem:[#allocation2 + $0x1a] sm:$0xff]
  %v1873 = vld [vmem:[#allocation2 + $0x22] sm:$0xff]
  %v1874 = vld [vmem:[#allocation2 + $0x2a] sm:$0xff]
  %v1875 = vld [vmem:[#allocation2 + $0x32] sm:$0xff]
  %v1876 = vld [vmem:[#allocation2 + $0x3a] sm:$0xff]
  %v1877 = vld [vmem:[#allocation2 + $0x42] sm:$0xff]
  %v1878 = vld [vmem:[#allocation2 + $0x4a] sm:$0xff]
  %v1879 = vld [vmem:[#allocation2 + $0x52] sm:$0xff]
  %v1880 = vld [vmem:[#allocation2 + $0x5a] sm:$0xff]
  %v1881 = vld [vmem:[#allocation2 + $0x62] sm:$0xff]
  %v1882 = vld [vmem:[#allocation2 + $0x6a] sm:$0xff]
  %v1883 = vld [vmem:[#allocation2 + $0x72] sm:$0xff]
  %v1884 = vld [vmem:[#allocation2 + $0x7a] sm:$0xff]
  %v1885 = vld [vmem:[#allocation2 + $0x82] sm:$0xff]
  %v1886 = vld [vmem:[#allocation2 + $0x8a] sm:$0xff]
  %v1887 = vld [vmem:[#allocation2 + $0x92] sm:$0xf]
  %s1888 = scalar_lea.vmem %s3, 1024
  %v1889 = vld [vmem:[%s1888] sm:$0xff]
  %v1890 = vld [vmem:[%s1888 + $0x8] sm:$0xff]
  %v1891 = vld [vmem:[%s1888 + $0x10] sm:$0xff]
  %v1892 = vld [vmem:[%s1888 + $0x18] sm:$0xff]
  %v1893 = vld [vmem:[%s1888 + $0x20] sm:$0xff]
  %v1894 = vld [vmem:[%s1888 + $0x28] sm:$0xff]
  %v1895 = vld [vmem:[%s1888 + $0x30] sm:$0xff]
  %v1896 = vld [vmem:[%s1888 + $0x38] sm:$0xff]
  %v1897 = vld [vmem:[%s1888 + $0x40] sm:$0xff]
  %v1898 = vld [vmem:[%s1888 + $0x48] sm:$0xff]
  %v1899 = vld [vmem:[%s1888 + $0x50] sm:$0xff]
  %v1900 = vld [vmem:[%s1888 + $0x58] sm:$0xff]
  %v1901 = vld [vmem:[%s1888 + $0x60] sm:$0xff]
  %v1902 = vld [vmem:[%s1888 + $0x68] sm:$0xff]
  %v1903 = vld [vmem:[%s1888 + $0x70] sm:$0xff]
  %v1904 = vld [vmem:[%s1888 + $0x78] sm:$0xff]
  %1905 = vmatprep.subr.mxu0 0.0
  %1906 = vmatpush1.msra.mxu0 %v1904
  %1907 = vmatprep.subr.mxu0 0.0
  %1908 = vmatpush1.msra.mxu0 %v1903
  %1909 = vmatprep.subr.mxu0 0.0
  %1910 = vmatpush1.msra.mxu0 %v1902
  %1911 = vmatprep.subr.mxu0 0.0
  %1912 = vmatpush1.msra.mxu0 %v1901
  %1913 = vmatprep.subr.mxu0 0.0
  %1914 = vmatpush1.msra.mxu0 %v1900
  %1915 = vmatprep.subr.mxu0 0.0
  %1916 = vmatpush1.msra.mxu0 %v1899
  %1917 = vmatprep.subr.mxu0 0.0
  %1918 = vmatpush1.msra.mxu0 %v1898
  %1919 = vmatprep.subr.mxu0 0.0
  %1920 = vmatpush1.msra.mxu0 %v1897
  %1921 = vmatprep.subr.mxu0 0.0
  %1922 = vmatpush1.msra.mxu0 %v1896
  %1923 = vmatprep.subr.mxu0 0.0
  %1924 = vmatpush1.msra.mxu0 %v1895
  %1925 = vmatprep.subr.mxu0 0.0
  %1926 = vmatpush1.msra.mxu0 %v1894
  %1927 = vmatprep.subr.mxu0 0.0
  %1928 = vmatpush1.msra.mxu0 %v1893
  %1929 = vmatprep.subr.mxu0 0.0
  %1930 = vmatpush1.msra.mxu0 %v1892
  %1931 = vmatprep.subr.mxu0 0.0
  %1932 = vmatpush1.msra.mxu0 %v1891
  %1933 = vmatprep.subr.mxu0 0.0
  %1934 = vmatpush1.msra.mxu0 %v1890
  %1935 = vmatprep.subr.mxu0 0.0
  %1936 = vmatpush1.msra.mxu0 %v1889
  %1937 = vmatprep.subr.mxu0 0.0
  %1938 = vmatpush2.msra.mxu0 0.0
  %1939 = vmatprep.subr.mxu0 0.0
  %1940 = vmatpush2.msra.mxu0 0.0
  %1941 = vmatprep.subr.mxu0 0.0
  %1942 = vmatpush2.msra.mxu0 0.0
  %1943 = vmatprep.subr.mxu0 0.0
  %1944 = vmatpush2.msra.mxu0 0.0
  %1945 = vmatprep.subr.mxu0 0.0
  %1946 = vmatpush2.msra.mxu0 0.0
  %1947 = vmatprep.subr.mxu0 0.0
  %1948 = vmatpush2.msra.mxu0 0.0
  %1949 = vmatprep.subr.mxu0 0.0
  %1950 = vmatpush2.msra.mxu0 0.0
  %1951 = vmatprep.subr.mxu0 0.0
  %1952 = vmatpush2.msra.mxu0 0.0
  %1953 = vmatprep.subr.mxu0 0.0
  %1954 = vmatpush2.msra.mxu0 0.0
  %1955 = vmatprep.subr.mxu0 0.0
  %1956 = vmatpush2.msra.mxu0 0.0
  %1957 = vmatprep.subr.mxu0 0.0
  %1958 = vmatpush2.msra.mxu0 0.0
  %1959 = vmatprep.subr.mxu0 0.0
  %1960 = vmatpush2.msra.mxu0 0.0
  %1961 = vmatprep.subr.mxu0 0.0
  %1962 = vmatpush2.msra.mxu0 0.0
  %1963 = vmatprep.subr.mxu0 0.0
  %1964 = vmatpush2.msra.mxu0 0.0
  %1965 = vmatprep.subr.mxu0 0.0
  %1966 = vmatpush2.msra.mxu0 0.0
  %1967 = vmatprep.subr.mxu0 0.0
  %1968 = vmatpush2.msra.mxu0 0.0
  %1969 = vmatprep.mubr.f32.mxu0 0.0
  %1970 = vmatmul.mubr.f32.gmra.mxu0 %v1871
  %v1971 = vpop.f32.mrf.mxu0
  %v1972 = vadd.f32 0.0, %v1971
  %v1973 = vpop.f32.mrf.mxu0
  %1974 = vmatprep.mubr.f32.mxu0 0.0
  %1975 = vmatmul.mubr.f32.gmra.mxu0 %v1872
  %v1976 = vpop.f32.mrf.mxu0
  %v1977 = vadd.f32 0.0, %v1976
  %v1978 = vpop.f32.mrf.mxu0
  %1979 = vmatprep.mubr.f32.mxu0 0.0
  %1980 = vmatmul.mubr.f32.gmra.mxu0 %v1873
  %v1981 = vpop.f32.mrf.mxu0
  %v1982 = vadd.f32 0.0, %v1981
  %v1983 = vpop.f32.mrf.mxu0
  %1984 = vmatprep.mubr.f32.mxu0 0.0
  %1985 = vmatmul.mubr.f32.gmra.mxu0 %v1874
  %v1986 = vpop.f32.mrf.mxu0
  %v1987 = vadd.f32 0.0, %v1986
  %v1988 = vpop.f32.mrf.mxu0
  %1989 = vmatprep.mubr.f32.mxu0 0.0
  %1990 = vmatmul.mubr.f32.gmra.mxu0 %v1875
  %v1991 = vpop.f32.mrf.mxu0
  %v1992 = vadd.f32 0.0, %v1991
  %v1993 = vpop.f32.mrf.mxu0
  %1994 = vmatprep.mubr.f32.mxu0 0.0
  %1995 = vmatmul.mubr.f32.gmra.mxu0 %v1876
  %v1996 = vpop.f32.mrf.mxu0
  %v1997 = vadd.f32 0.0, %v1996
  %v1998 = vpop.f32.mrf.mxu0
  %1999 = vmatprep.mubr.f32.mxu0 0.0
  %2000 = vmatmul.mubr.f32.gmra.mxu0 %v1877
  %v2001 = vpop.f32.mrf.mxu0
  %v2002 = vadd.f32 0.0, %v2001
  %v2003 = vpop.f32.mrf.mxu0
  %2004 = vmatprep.mubr.f32.mxu0 0.0
  %2005 = vmatmul.mubr.f32.gmra.mxu0 %v1878
  %v2006 = vpop.f32.mrf.mxu0
  %v2007 = vadd.f32 0.0, %v2006
  %v2008 = vpop.f32.mrf.mxu0
  %2009 = vmatprep.mubr.f32.mxu0 0.0
  %2010 = vmatmul.mubr.f32.gmra.mxu0 %v1879
  %v2011 = vpop.f32.mrf.mxu0
  %v2012 = vadd.f32 0.0, %v2011
  %v2013 = vpop.f32.mrf.mxu0
  %2014 = vmatprep.mubr.f32.mxu0 0.0
  %2015 = vmatmul.mubr.f32.gmra.mxu0 %v1880
  %v2016 = vpop.f32.mrf.mxu0
  %v2017 = vadd.f32 0.0, %v2016
  %v2018 = vpop.f32.mrf.mxu0
  %2019 = vmatprep.mubr.f32.mxu0 0.0
  %2020 = vmatmul.mubr.f32.gmra.mxu0 %v1881
  %v2021 = vpop.f32.mrf.mxu0
  %v2022 = vadd.f32 0.0, %v2021
  %v2023 = vpop.f32.mrf.mxu0
  %2024 = vmatprep.mubr.f32.mxu0 0.0
  %2025 = vmatmul.mubr.f32.gmra.mxu0 %v1882
  %v2026 = vpop.f32.mrf.mxu0
  %v2027 = vadd.f32 0.0, %v2026
  %v2028 = vpop.f32.mrf.mxu0
  %2029 = vmatprep.mubr.f32.mxu0 0.0
  %2030 = vmatmul.mubr.f32.gmra.mxu0 %v1883
  %v2031 = vpop.f32.mrf.mxu0
  %v2032 = vadd.f32 0.0, %v2031
  %v2033 = vpop.f32.mrf.mxu0
  %2034 = vmatprep.mubr.f32.mxu0 0.0
  %2035 = vmatmul.mubr.f32.gmra.mxu0 %v1884
  %v2036 = vpop.f32.mrf.mxu0
  %v2037 = vadd.f32 0.0, %v2036
  %v2038 = vpop.f32.mrf.mxu0
  %2039 = vmatprep.mubr.f32.mxu0 0.0
  %2040 = vmatmul.mubr.f32.gmra.mxu0 %v1885
  %v2041 = vpop.f32.mrf.mxu0
  %v2042 = vadd.f32 0.0, %v2041
  %v2043 = vpop.f32.mrf.mxu0
  %2044 = vmatprep.mubr.f32.mxu0 0.0
  %2045 = vmatmul.mubr.f32.gmra.mxu0 %v1886
  %v2046 = vpop.f32.mrf.mxu0
  %v2047 = vadd.f32 0.0, %v2046
  %v2048 = vpop.f32.mrf.mxu0
  %2049 = vmatprep.mubr.f32.mxu0 0.0
  %2050 = vmatmul.mubr.f32.gmra.mxu0 %v1887
  %v2051 = vpop.f32.mrf.mxu0
  %v2052 = vadd.f32 0.0, %v2051
  %v2053 = vpop.f32.mrf.mxu0
  %2054 = vdwg.mxu0
  %v2055 = vadd.f32 %v1854, %v1972
  %v2056 = vadd.f32 %v1855, %v1977
  %v2057 = vadd.f32 %v1856, %v1982
  %v2058 = vadd.f32 %v1857, %v1987
  %v2059 = vadd.f32 %v1858, %v1992
  %v2060 = vadd.f32 %v1859, %v1997
  %v2061 = vadd.f32 %v1860, %v2002
  %v2062 = vadd.f32 %v1861, %v2007
  %v2063 = vadd.f32 %v1862, %v2012
  %v2064 = vadd.f32 %v1863, %v2017
  %v2065 = vadd.f32 %v1864, %v2022
  %v2066 = vadd.f32 %v1865, %v2027
  %v2067 = vadd.f32 %v1866, %v2032
  %v2068 = vadd.f32 %v1867, %v2037
  %v2069 = vadd.f32 %v1868, %v2042
  %v2070 = vadd.f32 %v1869, %v2047
  %v2071 = vadd.f32 %v1870, %v2052
  %v2072 = vld [vmem:[#allocation2 + $0x13] sm:$0xff]
  %v2073 = vld [vmem:[#allocation2 + $0x1b] sm:$0xff]
  %v2074 = vld [vmem:[#allocation2 + $0x23] sm:$0xff]
  %v2075 = vld [vmem:[#allocation2 + $0x2b] sm:$0xff]
  %v2076 = vld [vmem:[#allocation2 + $0x33] sm:$0xff]
  %v2077 = vld [vmem:[#allocation2 + $0x3b] sm:$0xff]
  %v2078 = vld [vmem:[#allocation2 + $0x43] sm:$0xff]
  %v2079 = vld [vmem:[#allocation2 + $0x4b] sm:$0xff]
  %v2080 = vld [vmem:[#allocation2 + $0x53] sm:$0xff]
  %v2081 = vld [vmem:[#allocation2 + $0x5b] sm:$0xff]
  %v2082 = vld [vmem:[#allocation2 + $0x63] sm:$0xff]
  %v2083 = vld [vmem:[#allocation2 + $0x6b] sm:$0xff]
  %v2084 = vld [vmem:[#allocation2 + $0x73] sm:$0xff]
  %v2085 = vld [vmem:[#allocation2 + $0x7b] sm:$0xff]
  %v2086 = vld [vmem:[#allocation2 + $0x83] sm:$0xff]
  %v2087 = vld [vmem:[#allocation2 + $0x8b] sm:$0xff]
  %v2088 = vld [vmem:[#allocation2 + $0x93] sm:$0xf]
  %s2089 = scalar_lea.vmem %s3, 1152
  %v2090 = vld [vmem:[%s2089] sm:$0xff]
  %v2091 = vld [vmem:[%s2089 + $0x8] sm:$0xff]
  %v2092 = vld [vmem:[%s2089 + $0x10] sm:$0xff]
  %v2093 = vld [vmem:[%s2089 + $0x18] sm:$0xff]
  %v2094 = vld [vmem:[%s2089 + $0x20] sm:$0xff]
  %v2095 = vld [vmem:[%s2089 + $0x28] sm:$0xff]
  %v2096 = vld [vmem:[%s2089 + $0x30] sm:$0xff]
  %v2097 = vld [vmem:[%s2089 + $0x38] sm:$0xff]
  %v2098 = vld [vmem:[%s2089 + $0x40] sm:$0xff]
  %v2099 = vld [vmem:[%s2089 + $0x48] sm:$0xff]
  %v2100 = vld [vmem:[%s2089 + $0x50] sm:$0xff]
  %v2101 = vld [vmem:[%s2089 + $0x58] sm:$0xff]
  %v2102 = vld [vmem:[%s2089 + $0x60] sm:$0xff]
  %v2103 = vld [vmem:[%s2089 + $0x68] sm:$0xff]
  %v2104 = vld [vmem:[%s2089 + $0x70] sm:$0xff]
  %v2105 = vld [vmem:[%s2089 + $0x78] sm:$0xff]
  %2106 = vmatprep.subr.mxu0 0.0
  %2107 = vmatpush1.msra.mxu0 %v2105
  %2108 = vmatprep.subr.mxu0 0.0
  %2109 = vmatpush1.msra.mxu0 %v2104
  %2110 = vmatprep.subr.mxu0 0.0
  %2111 = vmatpush1.msra.mxu0 %v2103
  %2112 = vmatprep.subr.mxu0 0.0
  %2113 = vmatpush1.msra.mxu0 %v2102
  %2114 = vmatprep.subr.mxu0 0.0
  %2115 = vmatpush1.msra.mxu0 %v2101
  %2116 = vmatprep.subr.mxu0 0.0
  %2117 = vmatpush1.msra.mxu0 %v2100
  %2118 = vmatprep.subr.mxu0 0.0
  %2119 = vmatpush1.msra.mxu0 %v2099
  %2120 = vmatprep.subr.mxu0 0.0
  %2121 = vmatpush1.msra.mxu0 %v2098
  %2122 = vmatprep.subr.mxu0 0.0
  %2123 = vmatpush1.msra.mxu0 %v2097
  %2124 = vmatprep.subr.mxu0 0.0
  %2125 = vmatpush1.msra.mxu0 %v2096
  %2126 = vmatprep.subr.mxu0 0.0
  %2127 = vmatpush1.msra.mxu0 %v2095
  %2128 = vmatprep.subr.mxu0 0.0
  %2129 = vmatpush1.msra.mxu0 %v2094
  %2130 = vmatprep.subr.mxu0 0.0
  %2131 = vmatpush1.msra.mxu0 %v2093
  %2132 = vmatprep.subr.mxu0 0.0
  %2133 = vmatpush1.msra.mxu0 %v2092
  %2134 = vmatprep.subr.mxu0 0.0
  %2135 = vmatpush1.msra.mxu0 %v2091
  %2136 = vmatprep.subr.mxu0 0.0
  %2137 = vmatpush1.msra.mxu0 %v2090
  %2138 = vmatprep.subr.mxu0 0.0
  %2139 = vmatpush2.msra.mxu0 0.0
  %2140 = vmatprep.subr.mxu0 0.0
  %2141 = vmatpush2.msra.mxu0 0.0
  %2142 = vmatprep.subr.mxu0 0.0
  %2143 = vmatpush2.msra.mxu0 0.0
  %2144 = vmatprep.subr.mxu0 0.0
  %2145 = vmatpush2.msra.mxu0 0.0
  %2146 = vmatprep.subr.mxu0 0.0
  %2147 = vmatpush2.msra.mxu0 0.0
  %2148 = vmatprep.subr.mxu0 0.0
  %2149 = vmatpush2.msra.mxu0 0.0
  %2150 = vmatprep.subr.mxu0 0.0
  %2151 = vmatpush2.msra.mxu0 0.0
  %2152 = vmatprep.subr.mxu0 0.0
  %2153 = vmatpush2.msra.mxu0 0.0
  %2154 = vmatprep.subr.mxu0 0.0
  %2155 = vmatpush2.msra.mxu0 0.0
  %2156 = vmatprep.subr.mxu0 0.0
  %2157 = vmatpush2.msra.mxu0 0.0
  %2158 = vmatprep.subr.mxu0 0.0
  %2159 = vmatpush2.msra.mxu0 0.0
  %2160 = vmatprep.subr.mxu0 0.0
  %2161 = vmatpush2.msra.mxu0 0.0
  %2162 = vmatprep.subr.mxu0 0.0
  %2163 = vmatpush2.msra.mxu0 0.0
  %2164 = vmatprep.subr.mxu0 0.0
  %2165 = vmatpush2.msra.mxu0 0.0
  %2166 = vmatprep.subr.mxu0 0.0
  %2167 = vmatpush2.msra.mxu0 0.0
  %2168 = vmatprep.subr.mxu0 0.0
  %2169 = vmatpush2.msra.mxu0 0.0
  %2170 = vmatprep.mubr.f32.mxu0 0.0
  %2171 = vmatmul.mubr.f32.gmra.mxu0 %v2072
  %v2172 = vpop.f32.mrf.mxu0
  %v2173 = vadd.f32 0.0, %v2172
  %v2174 = vpop.f32.mrf.mxu0
  %2175 = vmatprep.mubr.f32.mxu0 0.0
  %2176 = vmatmul.mubr.f32.gmra.mxu0 %v2073
  %v2177 = vpop.f32.mrf.mxu0
  %v2178 = vadd.f32 0.0, %v2177
  %v2179 = vpop.f32.mrf.mxu0
  %2180 = vmatprep.mubr.f32.mxu0 0.0
  %2181 = vmatmul.mubr.f32.gmra.mxu0 %v2074
  %v2182 = vpop.f32.mrf.mxu0
  %v2183 = vadd.f32 0.0, %v2182
  %v2184 = vpop.f32.mrf.mxu0
  %2185 = vmatprep.mubr.f32.mxu0 0.0
  %2186 = vmatmul.mubr.f32.gmra.mxu0 %v2075
  %v2187 = vpop.f32.mrf.mxu0
  %v2188 = vadd.f32 0.0, %v2187
  %v2189 = vpop.f32.mrf.mxu0
  %2190 = vmatprep.mubr.f32.mxu0 0.0
  %2191 = vmatmul.mubr.f32.gmra.mxu0 %v2076
  %v2192 = vpop.f32.mrf.mxu0
  %v2193 = vadd.f32 0.0, %v2192
  %v2194 = vpop.f32.mrf.mxu0
  %2195 = vmatprep.mubr.f32.mxu0 0.0
  %2196 = vmatmul.mubr.f32.gmra.mxu0 %v2077
  %v2197 = vpop.f32.mrf.mxu0
  %v2198 = vadd.f32 0.0, %v2197
  %v2199 = vpop.f32.mrf.mxu0
  %2200 = vmatprep.mubr.f32.mxu0 0.0
  %2201 = vmatmul.mubr.f32.gmra.mxu0 %v2078
  %v2202 = vpop.f32.mrf.mxu0
  %v2203 = vadd.f32 0.0, %v2202
  %v2204 = vpop.f32.mrf.mxu0
  %2205 = vmatprep.mubr.f32.mxu0 0.0
  %2206 = vmatmul.mubr.f32.gmra.mxu0 %v2079
  %v2207 = vpop.f32.mrf.mxu0
  %v2208 = vadd.f32 0.0, %v2207
  %v2209 = vpop.f32.mrf.mxu0
  %2210 = vmatprep.mubr.f32.mxu0 0.0
  %2211 = vmatmul.mubr.f32.gmra.mxu0 %v2080
  %v2212 = vpop.f32.mrf.mxu0
  %v2213 = vadd.f32 0.0, %v2212
  %v2214 = vpop.f32.mrf.mxu0
  %2215 = vmatprep.mubr.f32.mxu0 0.0
  %2216 = vmatmul.mubr.f32.gmra.mxu0 %v2081
  %v2217 = vpop.f32.mrf.mxu0
  %v2218 = vadd.f32 0.0, %v2217
  %v2219 = vpop.f32.mrf.mxu0
  %2220 = vmatprep.mubr.f32.mxu0 0.0
  %2221 = vmatmul.mubr.f32.gmra.mxu0 %v2082
  %v2222 = vpop.f32.mrf.mxu0
  %v2223 = vadd.f32 0.0, %v2222
  %v2224 = vpop.f32.mrf.mxu0
  %2225 = vmatprep.mubr.f32.mxu0 0.0
  %2226 = vmatmul.mubr.f32.gmra.mxu0 %v2083
  %v2227 = vpop.f32.mrf.mxu0
  %v2228 = vadd.f32 0.0, %v2227
  %v2229 = vpop.f32.mrf.mxu0
  %2230 = vmatprep.mubr.f32.mxu0 0.0
  %2231 = vmatmul.mubr.f32.gmra.mxu0 %v2084
  %v2232 = vpop.f32.mrf.mxu0
  %v2233 = vadd.f32 0.0, %v2232
  %v2234 = vpop.f32.mrf.mxu0
  %2235 = vmatprep.mubr.f32.mxu0 0.0
  %2236 = vmatmul.mubr.f32.gmra.mxu0 %v2085
  %v2237 = vpop.f32.mrf.mxu0
  %v2238 = vadd.f32 0.0, %v2237
  %v2239 = vpop.f32.mrf.mxu0
  %2240 = vmatprep.mubr.f32.mxu0 0.0
  %2241 = vmatmul.mubr.f32.gmra.mxu0 %v2086
  %v2242 = vpop.f32.mrf.mxu0
  %v2243 = vadd.f32 0.0, %v2242
  %v2244 = vpop.f32.mrf.mxu0
  %2245 = vmatprep.mubr.f32.mxu0 0.0
  %2246 = vmatmul.mubr.f32.gmra.mxu0 %v2087
  %v2247 = vpop.f32.mrf.mxu0
  %v2248 = vadd.f32 0.0, %v2247
  %v2249 = vpop.f32.mrf.mxu0
  %2250 = vmatprep.mubr.f32.mxu0 0.0
  %2251 = vmatmul.mubr.f32.gmra.mxu0 %v2088
  %v2252 = vpop.f32.mrf.mxu0
  %v2253 = vadd.f32 0.0, %v2252
  %v2254 = vpop.f32.mrf.mxu0
  %2255 = vdwg.mxu0
  %v2256 = vadd.f32 %v2055, %v2173
  %v2257 = vadd.f32 %v2056, %v2178
  %v2258 = vadd.f32 %v2057, %v2183
  %v2259 = vadd.f32 %v2058, %v2188
  %v2260 = vadd.f32 %v2059, %v2193
  %v2261 = vadd.f32 %v2060, %v2198
  %v2262 = vadd.f32 %v2061, %v2203
  %v2263 = vadd.f32 %v2062, %v2208
  %v2264 = vadd.f32 %v2063, %v2213
  %v2265 = vadd.f32 %v2064, %v2218
  %v2266 = vadd.f32 %v2065, %v2223
  %v2267 = vadd.f32 %v2066, %v2228
  %v2268 = vadd.f32 %v2067, %v2233
  %v2269 = vadd.f32 %v2068, %v2238
  %v2270 = vadd.f32 %v2069, %v2243
  %v2271 = vadd.f32 %v2070, %v2248
  %v2272 = vadd.f32 %v2071, %v2253
  %v2273 = vld [vmem:[#allocation2 + $0x14] sm:$0xff]
  %v2274 = vld [vmem:[#allocation2 + $0x1c] sm:$0xff]
  %v2275 = vld [vmem:[#allocation2 + $0x24] sm:$0xff]
  %v2276 = vld [vmem:[#allocation2 + $0x2c] sm:$0xff]
  %v2277 = vld [vmem:[#allocation2 + $0x34] sm:$0xff]
  %v2278 = vld [vmem:[#allocation2 + $0x3c] sm:$0xff]
  %v2279 = vld [vmem:[#allocation2 + $0x44] sm:$0xff]
  %v2280 = vld [vmem:[#allocation2 + $0x4c] sm:$0xff]
  %v2281 = vld [vmem:[#allocation2 + $0x54] sm:$0xff]
  %v2282 = vld [vmem:[#allocation2 + $0x5c] sm:$0xff]
  %v2283 = vld [vmem:[#allocation2 + $0x64] sm:$0xff]
  %v2284 = vld [vmem:[#allocation2 + $0x6c] sm:$0xff]
  %v2285 = vld [vmem:[#allocation2 + $0x74] sm:$0xff]
  %v2286 = vld [vmem:[#allocation2 + $0x7c] sm:$0xff]
  %v2287 = vld [vmem:[#allocation2 + $0x84] sm:$0xff]
  %v2288 = vld [vmem:[#allocation2 + $0x8c] sm:$0xff]
  %v2289 = vld [vmem:[#allocation2 + $0x94] sm:$0xf]
  %s2290 = scalar_lea.vmem %s3, 1280
  %v2291 = vld [vmem:[%s2290] sm:$0xff]
  %v2292 = vld [vmem:[%s2290 + $0x8] sm:$0xff]
  %v2293 = vld [vmem:[%s2290 + $0x10] sm:$0xff]
  %v2294 = vld [vmem:[%s2290 + $0x18] sm:$0xff]
  %v2295 = vld [vmem:[%s2290 + $0x20] sm:$0xff]
  %v2296 = vld [vmem:[%s2290 + $0x28] sm:$0xff]
  %v2297 = vld [vmem:[%s2290 + $0x30] sm:$0xff]
  %v2298 = vld [vmem:[%s2290 + $0x38] sm:$0xff]
  %v2299 = vld [vmem:[%s2290 + $0x40] sm:$0xff]
  %v2300 = vld [vmem:[%s2290 + $0x48] sm:$0xff]
  %v2301 = vld [vmem:[%s2290 + $0x50] sm:$0xff]
  %v2302 = vld [vmem:[%s2290 + $0x58] sm:$0xff]
  %v2303 = vld [vmem:[%s2290 + $0x60] sm:$0xff]
  %v2304 = vld [vmem:[%s2290 + $0x68] sm:$0xff]
  %v2305 = vld [vmem:[%s2290 + $0x70] sm:$0xff]
  %v2306 = vld [vmem:[%s2290 + $0x78] sm:$0xff]
  %2307 = vmatprep.subr.mxu0 0.0
  %2308 = vmatpush1.msra.mxu0 %v2306
  %2309 = vmatprep.subr.mxu0 0.0
  %2310 = vmatpush1.msra.mxu0 %v2305
  %2311 = vmatprep.subr.mxu0 0.0
  %2312 = vmatpush1.msra.mxu0 %v2304
  %2313 = vmatprep.subr.mxu0 0.0
  %2314 = vmatpush1.msra.mxu0 %v2303
  %2315 = vmatprep.subr.mxu0 0.0
  %2316 = vmatpush1.msra.mxu0 %v2302
  %2317 = vmatprep.subr.mxu0 0.0
  %2318 = vmatpush1.msra.mxu0 %v2301
  %2319 = vmatprep.subr.mxu0 0.0
  %2320 = vmatpush1.msra.mxu0 %v2300
  %2321 = vmatprep.subr.mxu0 0.0
  %2322 = vmatpush1.msra.mxu0 %v2299
  %2323 = vmatprep.subr.mxu0 0.0
  %2324 = vmatpush1.msra.mxu0 %v2298
  %2325 = vmatprep.subr.mxu0 0.0
  %2326 = vmatpush1.msra.mxu0 %v2297
  %2327 = vmatprep.subr.mxu0 0.0
  %2328 = vmatpush1.msra.mxu0 %v2296
  %2329 = vmatprep.subr.mxu0 0.0
  %2330 = vmatpush1.msra.mxu0 %v2295
  %2331 = vmatprep.subr.mxu0 0.0
  %2332 = vmatpush1.msra.mxu0 %v2294
  %2333 = vmatprep.subr.mxu0 0.0
  %2334 = vmatpush1.msra.mxu0 %v2293
  %2335 = vmatprep.subr.mxu0 0.0
  %2336 = vmatpush1.msra.mxu0 %v2292
  %2337 = vmatprep.subr.mxu0 0.0
  %2338 = vmatpush1.msra.mxu0 %v2291
  %2339 = vmatprep.subr.mxu0 0.0
  %2340 = vmatpush2.msra.mxu0 0.0
  %2341 = vmatprep.subr.mxu0 0.0
  %2342 = vmatpush2.msra.mxu0 0.0
  %2343 = vmatprep.subr.mxu0 0.0
  %2344 = vmatpush2.msra.mxu0 0.0
  %2345 = vmatprep.subr.mxu0 0.0
  %2346 = vmatpush2.msra.mxu0 0.0
  %2347 = vmatprep.subr.mxu0 0.0
  %2348 = vmatpush2.msra.mxu0 0.0
  %2349 = vmatprep.subr.mxu0 0.0
  %2350 = vmatpush2.msra.mxu0 0.0
  %2351 = vmatprep.subr.mxu0 0.0
  %2352 = vmatpush2.msra.mxu0 0.0
  %2353 = vmatprep.subr.mxu0 0.0
  %2354 = vmatpush2.msra.mxu0 0.0
  %2355 = vmatprep.subr.mxu0 0.0
  %2356 = vmatpush2.msra.mxu0 0.0
  %2357 = vmatprep.subr.mxu0 0.0
  %2358 = vmatpush2.msra.mxu0 0.0
  %2359 = vmatprep.subr.mxu0 0.0
  %2360 = vmatpush2.msra.mxu0 0.0
  %2361 = vmatprep.subr.mxu0 0.0
  %2362 = vmatpush2.msra.mxu0 0.0
  %2363 = vmatprep.subr.mxu0 0.0
  %2364 = vmatpush2.msra.mxu0 0.0
  %2365 = vmatprep.subr.mxu0 0.0
  %2366 = vmatpush2.msra.mxu0 0.0
  %2367 = vmatprep.subr.mxu0 0.0
  %2368 = vmatpush2.msra.mxu0 0.0
  %2369 = vmatprep.subr.mxu0 0.0
  %2370 = vmatpush2.msra.mxu0 0.0
  %2371 = vmatprep.mubr.f32.mxu0 0.0
  %2372 = vmatmul.mubr.f32.gmra.mxu0 %v2273
  %v2373 = vpop.f32.mrf.mxu0
  %v2374 = vadd.f32 0.0, %v2373
  %v2375 = vpop.f32.mrf.mxu0
  %2376 = vmatprep.mubr.f32.mxu0 0.0
  %2377 = vmatmul.mubr.f32.gmra.mxu0 %v2274
  %v2378 = vpop.f32.mrf.mxu0
  %v2379 = vadd.f32 0.0, %v2378
  %v2380 = vpop.f32.mrf.mxu0
  %2381 = vmatprep.mubr.f32.mxu0 0.0
  %2382 = vmatmul.mubr.f32.gmra.mxu0 %v2275
  %v2383 = vpop.f32.mrf.mxu0
  %v2384 = vadd.f32 0.0, %v2383
  %v2385 = vpop.f32.mrf.mxu0
  %2386 = vmatprep.mubr.f32.mxu0 0.0
  %2387 = vmatmul.mubr.f32.gmra.mxu0 %v2276
  %v2388 = vpop.f32.mrf.mxu0
  %v2389 = vadd.f32 0.0, %v2388
  %v2390 = vpop.f32.mrf.mxu0
  %2391 = vmatprep.mubr.f32.mxu0 0.0
  %2392 = vmatmul.mubr.f32.gmra.mxu0 %v2277
  %v2393 = vpop.f32.mrf.mxu0
  %v2394 = vadd.f32 0.0, %v2393
  %v2395 = vpop.f32.mrf.mxu0
  %2396 = vmatprep.mubr.f32.mxu0 0.0
  %2397 = vmatmul.mubr.f32.gmra.mxu0 %v2278
  %v2398 = vpop.f32.mrf.mxu0
  %v2399 = vadd.f32 0.0, %v2398
  %v2400 = vpop.f32.mrf.mxu0
  %2401 = vmatprep.mubr.f32.mxu0 0.0
  %2402 = vmatmul.mubr.f32.gmra.mxu0 %v2279
  %v2403 = vpop.f32.mrf.mxu0
  %v2404 = vadd.f32 0.0, %v2403
  %v2405 = vpop.f32.mrf.mxu0
  %2406 = vmatprep.mubr.f32.mxu0 0.0
  %2407 = vmatmul.mubr.f32.gmra.mxu0 %v2280
  %v2408 = vpop.f32.mrf.mxu0
  %v2409 = vadd.f32 0.0, %v2408
  %v2410 = vpop.f32.mrf.mxu0
  %2411 = vmatprep.mubr.f32.mxu0 0.0
  %2412 = vmatmul.mubr.f32.gmra.mxu0 %v2281
  %v2413 = vpop.f32.mrf.mxu0
  %v2414 = vadd.f32 0.0, %v2413
  %v2415 = vpop.f32.mrf.mxu0
  %2416 = vmatprep.mubr.f32.mxu0 0.0
  %2417 = vmatmul.mubr.f32.gmra.mxu0 %v2282
  %v2418 = vpop.f32.mrf.mxu0
  %v2419 = vadd.f32 0.0, %v2418
  %v2420 = vpop.f32.mrf.mxu0
  %2421 = vmatprep.mubr.f32.mxu0 0.0
  %2422 = vmatmul.mubr.f32.gmra.mxu0 %v2283
  %v2423 = vpop.f32.mrf.mxu0
  %v2424 = vadd.f32 0.0, %v2423
  %v2425 = vpop.f32.mrf.mxu0
  %2426 = vmatprep.mubr.f32.mxu0 0.0
  %2427 = vmatmul.mubr.f32.gmra.mxu0 %v2284
  %v2428 = vpop.f32.mrf.mxu0
  %v2429 = vadd.f32 0.0, %v2428
  %v2430 = vpop.f32.mrf.mxu0
  %2431 = vmatprep.mubr.f32.mxu0 0.0
  %2432 = vmatmul.mubr.f32.gmra.mxu0 %v2285
  %v2433 = vpop.f32.mrf.mxu0
  %v2434 = vadd.f32 0.0, %v2433
  %v2435 = vpop.f32.mrf.mxu0
  %2436 = vmatprep.mubr.f32.mxu0 0.0
  %2437 = vmatmul.mubr.f32.gmra.mxu0 %v2286
  %v2438 = vpop.f32.mrf.mxu0
  %v2439 = vadd.f32 0.0, %v2438
  %v2440 = vpop.f32.mrf.mxu0
  %2441 = vmatprep.mubr.f32.mxu0 0.0
  %2442 = vmatmul.mubr.f32.gmra.mxu0 %v2287
  %v2443 = vpop.f32.mrf.mxu0
  %v2444 = vadd.f32 0.0, %v2443
  %v2445 = vpop.f32.mrf.mxu0
  %2446 = vmatprep.mubr.f32.mxu0 0.0
  %2447 = vmatmul.mubr.f32.gmra.mxu0 %v2288
  %v2448 = vpop.f32.mrf.mxu0
  %v2449 = vadd.f32 0.0, %v2448
  %v2450 = vpop.f32.mrf.mxu0
  %2451 = vmatprep.mubr.f32.mxu0 0.0
  %2452 = vmatmul.mubr.f32.gmra.mxu0 %v2289
  %v2453 = vpop.f32.mrf.mxu0
  %v2454 = vadd.f32 0.0, %v2453
  %v2455 = vpop.f32.mrf.mxu0
  %2456 = vdwg.mxu0
  %v2457 = vadd.f32 %v2256, %v2374
  %v2458 = vadd.f32 %v2257, %v2379
  %v2459 = vadd.f32 %v2258, %v2384
  %v2460 = vadd.f32 %v2259, %v2389
  %v2461 = vadd.f32 %v2260, %v2394
  %v2462 = vadd.f32 %v2261, %v2399
  %v2463 = vadd.f32 %v2262, %v2404
  %v2464 = vadd.f32 %v2263, %v2409
  %v2465 = vadd.f32 %v2264, %v2414
  %v2466 = vadd.f32 %v2265, %v2419
  %v2467 = vadd.f32 %v2266, %v2424
  %v2468 = vadd.f32 %v2267, %v2429
  %v2469 = vadd.f32 %v2268, %v2434
  %v2470 = vadd.f32 %v2269, %v2439
  %v2471 = vadd.f32 %v2270, %v2444
  %v2472 = vadd.f32 %v2271, %v2449
  %v2473 = vadd.f32 %v2272, %v2454
  %v2474 = vld [vmem:[#allocation2 + $0x15] sm:$0xff]
  %v2475 = vld [vmem:[#allocation2 + $0x1d] sm:$0xff]
  %v2476 = vld [vmem:[#allocation2 + $0x25] sm:$0xff]
  %v2477 = vld [vmem:[#allocation2 + $0x2d] sm:$0xff]
  %v2478 = vld [vmem:[#allocation2 + $0x35] sm:$0xff]
  %v2479 = vld [vmem:[#allocation2 + $0x3d] sm:$0xff]
  %v2480 = vld [vmem:[#allocation2 + $0x45] sm:$0xff]
  %v2481 = vld [vmem:[#allocation2 + $0x4d] sm:$0xff]
  %v2482 = vld [vmem:[#allocation2 + $0x55] sm:$0xff]
  %v2483 = vld [vmem:[#allocation2 + $0x5d] sm:$0xff]
  %v2484 = vld [vmem:[#allocation2 + $0x65] sm:$0xff]
  %v2485 = vld [vmem:[#allocation2 + $0x6d] sm:$0xff]
  %v2486 = vld [vmem:[#allocation2 + $0x75] sm:$0xff]
  %v2487 = vld [vmem:[#allocation2 + $0x7d] sm:$0xff]
  %v2488 = vld [vmem:[#allocation2 + $0x85] sm:$0xff]
  %v2489 = vld [vmem:[#allocation2 + $0x8d] sm:$0xff]
  %v2490 = vld [vmem:[#allocation2 + $0x95] sm:$0xf]
  %s2491 = scalar_lea.vmem %s3, 1408
  %v2492 = vld [vmem:[%s2491] sm:$0xff]
  %v2493 = vld [vmem:[%s2491 + $0x8] sm:$0xff]
  %v2494 = vld [vmem:[%s2491 + $0x10] sm:$0xff]
  %v2495 = vld [vmem:[%s2491 + $0x18] sm:$0xff]
  %v2496 = vld [vmem:[%s2491 + $0x20] sm:$0xff]
  %v2497 = vld [vmem:[%s2491 + $0x28] sm:$0xff]
  %v2498 = vld [vmem:[%s2491 + $0x30] sm:$0xff]
  %v2499 = vld [vmem:[%s2491 + $0x38] sm:$0xff]
  %v2500 = vld [vmem:[%s2491 + $0x40] sm:$0xff]
  %v2501 = vld [vmem:[%s2491 + $0x48] sm:$0xff]
  %v2502 = vld [vmem:[%s2491 + $0x50] sm:$0xff]
  %v2503 = vld [vmem:[%s2491 + $0x58] sm:$0xff]
  %v2504 = vld [vmem:[%s2491 + $0x60] sm:$0xff]
  %v2505 = vld [vmem:[%s2491 + $0x68] sm:$0xff]
  %v2506 = vld [vmem:[%s2491 + $0x70] sm:$0xff]
  %v2507 = vld [vmem:[%s2491 + $0x78] sm:$0xff]
  %2508 = vmatprep.subr.mxu0 0.0
  %2509 = vmatpush1.msra.mxu0 %v2507
  %2510 = vmatprep.subr.mxu0 0.0
  %2511 = vmatpush1.msra.mxu0 %v2506
  %2512 = vmatprep.subr.mxu0 0.0
  %2513 = vmatpush1.msra.mxu0 %v2505
  %2514 = vmatprep.subr.mxu0 0.0
  %2515 = vmatpush1.msra.mxu0 %v2504
  %2516 = vmatprep.subr.mxu0 0.0
  %2517 = vmatpush1.msra.mxu0 %v2503
  %2518 = vmatprep.subr.mxu0 0.0
  %2519 = vmatpush1.msra.mxu0 %v2502
  %2520 = vmatprep.subr.mxu0 0.0
  %2521 = vmatpush1.msra.mxu0 %v2501
  %2522 = vmatprep.subr.mxu0 0.0
  %2523 = vmatpush1.msra.mxu0 %v2500
  %2524 = vmatprep.subr.mxu0 0.0
  %2525 = vmatpush1.msra.mxu0 %v2499
  %2526 = vmatprep.subr.mxu0 0.0
  %2527 = vmatpush1.msra.mxu0 %v2498
  %2528 = vmatprep.subr.mxu0 0.0
  %2529 = vmatpush1.msra.mxu0 %v2497
  %2530 = vmatprep.subr.mxu0 0.0
  %2531 = vmatpush1.msra.mxu0 %v2496
  %2532 = vmatprep.subr.mxu0 0.0
  %2533 = vmatpush1.msra.mxu0 %v2495
  %2534 = vmatprep.subr.mxu0 0.0
  %2535 = vmatpush1.msra.mxu0 %v2494
  %2536 = vmatprep.subr.mxu0 0.0
  %2537 = vmatpush1.msra.mxu0 %v2493
  %2538 = vmatprep.subr.mxu0 0.0
  %2539 = vmatpush1.msra.mxu0 %v2492
  %2540 = vmatprep.subr.mxu0 0.0
  %2541 = vmatpush2.msra.mxu0 0.0
  %2542 = vmatprep.subr.mxu0 0.0
  %2543 = vmatpush2.msra.mxu0 0.0
  %2544 = vmatprep.subr.mxu0 0.0
  %2545 = vmatpush2.msra.mxu0 0.0
  %2546 = vmatprep.subr.mxu0 0.0
  %2547 = vmatpush2.msra.mxu0 0.0
  %2548 = vmatprep.subr.mxu0 0.0
  %2549 = vmatpush2.msra.mxu0 0.0
  %2550 = vmatprep.subr.mxu0 0.0
  %2551 = vmatpush2.msra.mxu0 0.0
  %2552 = vmatprep.subr.mxu0 0.0
  %2553 = vmatpush2.msra.mxu0 0.0
  %2554 = vmatprep.subr.mxu0 0.0
  %2555 = vmatpush2.msra.mxu0 0.0
  %2556 = vmatprep.subr.mxu0 0.0
  %2557 = vmatpush2.msra.mxu0 0.0
  %2558 = vmatprep.subr.mxu0 0.0
  %2559 = vmatpush2.msra.mxu0 0.0
  %2560 = vmatprep.subr.mxu0 0.0
  %2561 = vmatpush2.msra.mxu0 0.0
  %2562 = vmatprep.subr.mxu0 0.0
  %2563 = vmatpush2.msra.mxu0 0.0
  %2564 = vmatprep.subr.mxu0 0.0
  %2565 = vmatpush2.msra.mxu0 0.0
  %2566 = vmatprep.subr.mxu0 0.0
  %2567 = vmatpush2.msra.mxu0 0.0
  %2568 = vmatprep.subr.mxu0 0.0
  %2569 = vmatpush2.msra.mxu0 0.0
  %2570 = vmatprep.subr.mxu0 0.0
  %2571 = vmatpush2.msra.mxu0 0.0
  %2572 = vmatprep.mubr.f32.mxu0 0.0
  %2573 = vmatmul.mubr.f32.gmra.mxu0 %v2474
  %v2574 = vpop.f32.mrf.mxu0
  %v2575 = vadd.f32 0.0, %v2574
  %v2576 = vpop.f32.mrf.mxu0
  %2577 = vmatprep.mubr.f32.mxu0 0.0
  %2578 = vmatmul.mubr.f32.gmra.mxu0 %v2475
  %v2579 = vpop.f32.mrf.mxu0
  %v2580 = vadd.f32 0.0, %v2579
  %v2581 = vpop.f32.mrf.mxu0
  %2582 = vmatprep.mubr.f32.mxu0 0.0
  %2583 = vmatmul.mubr.f32.gmra.mxu0 %v2476
  %v2584 = vpop.f32.mrf.mxu0
  %v2585 = vadd.f32 0.0, %v2584
  %v2586 = vpop.f32.mrf.mxu0
  %2587 = vmatprep.mubr.f32.mxu0 0.0
  %2588 = vmatmul.mubr.f32.gmra.mxu0 %v2477
  %v2589 = vpop.f32.mrf.mxu0
  %v2590 = vadd.f32 0.0, %v2589
  %v2591 = vpop.f32.mrf.mxu0
  %2592 = vmatprep.mubr.f32.mxu0 0.0
  %2593 = vmatmul.mubr.f32.gmra.mxu0 %v2478
  %v2594 = vpop.f32.mrf.mxu0
  %v2595 = vadd.f32 0.0, %v2594
  %v2596 = vpop.f32.mrf.mxu0
  %2597 = vmatprep.mubr.f32.mxu0 0.0
  %2598 = vmatmul.mubr.f32.gmra.mxu0 %v2479
  %v2599 = vpop.f32.mrf.mxu0
  %v2600 = vadd.f32 0.0, %v2599
  %v2601 = vpop.f32.mrf.mxu0
  %2602 = vmatprep.mubr.f32.mxu0 0.0
  %2603 = vmatmul.mubr.f32.gmra.mxu0 %v2480
  %v2604 = vpop.f32.mrf.mxu0
  %v2605 = vadd.f32 0.0, %v2604
  %v2606 = vpop.f32.mrf.mxu0
  %2607 = vmatprep.mubr.f32.mxu0 0.0
  %2608 = vmatmul.mubr.f32.gmra.mxu0 %v2481
  %v2609 = vpop.f32.mrf.mxu0
  %v2610 = vadd.f32 0.0, %v2609
  %v2611 = vpop.f32.mrf.mxu0
  %2612 = vmatprep.mubr.f32.mxu0 0.0
  %2613 = vmatmul.mubr.f32.gmra.mxu0 %v2482
  %v2614 = vpop.f32.mrf.mxu0
  %v2615 = vadd.f32 0.0, %v2614
  %v2616 = vpop.f32.mrf.mxu0
  %2617 = vmatprep.mubr.f32.mxu0 0.0
  %2618 = vmatmul.mubr.f32.gmra.mxu0 %v2483
  %v2619 = vpop.f32.mrf.mxu0
  %v2620 = vadd.f32 0.0, %v2619
  %v2621 = vpop.f32.mrf.mxu0
  %2622 = vmatprep.mubr.f32.mxu0 0.0
  %2623 = vmatmul.mubr.f32.gmra.mxu0 %v2484
  %v2624 = vpop.f32.mrf.mxu0
  %v2625 = vadd.f32 0.0, %v2624
  %v2626 = vpop.f32.mrf.mxu0
  %2627 = vmatprep.mubr.f32.mxu0 0.0
  %2628 = vmatmul.mubr.f32.gmra.mxu0 %v2485
  %v2629 = vpop.f32.mrf.mxu0
  %v2630 = vadd.f32 0.0, %v2629
  %v2631 = vpop.f32.mrf.mxu0
  %2632 = vmatprep.mubr.f32.mxu0 0.0
  %2633 = vmatmul.mubr.f32.gmra.mxu0 %v2486
  %v2634 = vpop.f32.mrf.mxu0
  %v2635 = vadd.f32 0.0, %v2634
  %v2636 = vpop.f32.mrf.mxu0
  %2637 = vmatprep.mubr.f32.mxu0 0.0
  %2638 = vmatmul.mubr.f32.gmra.mxu0 %v2487
  %v2639 = vpop.f32.mrf.mxu0
  %v2640 = vadd.f32 0.0, %v2639
  %v2641 = vpop.f32.mrf.mxu0
  %2642 = vmatprep.mubr.f32.mxu0 0.0
  %2643 = vmatmul.mubr.f32.gmra.mxu0 %v2488
  %v2644 = vpop.f32.mrf.mxu0
  %v2645 = vadd.f32 0.0, %v2644
  %v2646 = vpop.f32.mrf.mxu0
  %2647 = vmatprep.mubr.f32.mxu0 0.0
  %2648 = vmatmul.mubr.f32.gmra.mxu0 %v2489
  %v2649 = vpop.f32.mrf.mxu0
  %v2650 = vadd.f32 0.0, %v2649
  %v2651 = vpop.f32.mrf.mxu0
  %2652 = vmatprep.mubr.f32.mxu0 0.0
  %2653 = vmatmul.mubr.f32.gmra.mxu0 %v2490
  %v2654 = vpop.f32.mrf.mxu0
  %v2655 = vadd.f32 0.0, %v2654
  %v2656 = vpop.f32.mrf.mxu0
  %2657 = vdwg.mxu0
  %v2658 = vadd.f32 %v2457, %v2575
  %v2659 = vadd.f32 %v2458, %v2580
  %v2660 = vadd.f32 %v2459, %v2585
  %v2661 = vadd.f32 %v2460, %v2590
  %v2662 = vadd.f32 %v2461, %v2595
  %v2663 = vadd.f32 %v2462, %v2600
  %v2664 = vadd.f32 %v2463, %v2605
  %v2665 = vadd.f32 %v2464, %v2610
  %v2666 = vadd.f32 %v2465, %v2615
  %v2667 = vadd.f32 %v2466, %v2620
  %v2668 = vadd.f32 %v2467, %v2625
  %v2669 = vadd.f32 %v2468, %v2630
  %v2670 = vadd.f32 %v2469, %v2635
  %v2671 = vadd.f32 %v2470, %v2640
  %v2672 = vadd.f32 %v2471, %v2645
  %v2673 = vadd.f32 %v2472, %v2650
  %v2674 = vadd.f32 %v2473, %v2655
  %v2675 = vld [vmem:[#allocation2 + $0x1b] sm:$0xff]
  %v2676 = vld [vmem:[#allocation2 + $0x23] sm:$0xff]
  %v2677 = vld [vmem:[#allocation2 + $0x2b] sm:$0xff]
  %v2678 = vld [vmem:[#allocation2 + $0x33] sm:$0xff]
  %v2679 = vld [vmem:[#allocation2 + $0x3b] sm:$0xff]
  %v2680 = vld [vmem:[#allocation2 + $0x43] sm:$0xff]
  %v2681 = vld [vmem:[#allocation2 + $0x4b] sm:$0xff]
  %v2682 = vld [vmem:[#allocation2 + $0x53] sm:$0xff]
  %v2683 = vld [vmem:[#allocation2 + $0x5b] sm:$0xff]
  %v2684 = vld [vmem:[#allocation2 + $0x63] sm:$0xff]
  %v2685 = vld [vmem:[#allocation2 + $0x6b] sm:$0xff]
  %v2686 = vld [vmem:[#allocation2 + $0x73] sm:$0xff]
  %v2687 = vld [vmem:[#allocation2 + $0x7b] sm:$0xff]
  %v2688 = vld [vmem:[#allocation2 + $0x83] sm:$0xff]
  %v2689 = vld [vmem:[#allocation2 + $0x8b] sm:$0xff]
  %v2690 = vld [vmem:[#allocation2 + $0x93] sm:$0xff]
  %v2691 = vld [vmem:[#allocation2 + $0x9b] sm:$0xf]
  %s2692 = scalar_lea.vmem %s3, 1536
  %v2693 = vld [vmem:[%s2692] sm:$0xff]
  %v2694 = vld [vmem:[%s2692 + $0x8] sm:$0xff]
  %v2695 = vld [vmem:[%s2692 + $0x10] sm:$0xff]
  %v2696 = vld [vmem:[%s2692 + $0x18] sm:$0xff]
  %v2697 = vld [vmem:[%s2692 + $0x20] sm:$0xff]
  %v2698 = vld [vmem:[%s2692 + $0x28] sm:$0xff]
  %v2699 = vld [vmem:[%s2692 + $0x30] sm:$0xff]
  %v2700 = vld [vmem:[%s2692 + $0x38] sm:$0xff]
  %v2701 = vld [vmem:[%s2692 + $0x40] sm:$0xff]
  %v2702 = vld [vmem:[%s2692 + $0x48] sm:$0xff]
  %v2703 = vld [vmem:[%s2692 + $0x50] sm:$0xff]
  %v2704 = vld [vmem:[%s2692 + $0x58] sm:$0xff]
  %v2705 = vld [vmem:[%s2692 + $0x60] sm:$0xff]
  %v2706 = vld [vmem:[%s2692 + $0x68] sm:$0xff]
  %v2707 = vld [vmem:[%s2692 + $0x70] sm:$0xff]
  %v2708 = vld [vmem:[%s2692 + $0x78] sm:$0xff]
  %2709 = vmatprep.subr.mxu0 0.0
  %2710 = vmatpush1.msra.mxu0 %v2708
  %2711 = vmatprep.subr.mxu0 0.0
  %2712 = vmatpush1.msra.mxu0 %v2707
  %2713 = vmatprep.subr.mxu0 0.0
  %2714 = vmatpush1.msra.mxu0 %v2706
  %2715 = vmatprep.subr.mxu0 0.0
  %2716 = vmatpush1.msra.mxu0 %v2705
  %2717 = vmatprep.subr.mxu0 0.0
  %2718 = vmatpush1.msra.mxu0 %v2704
  %2719 = vmatprep.subr.mxu0 0.0
  %2720 = vmatpush1.msra.mxu0 %v2703
  %2721 = vmatprep.subr.mxu0 0.0
  %2722 = vmatpush1.msra.mxu0 %v2702
  %2723 = vmatprep.subr.mxu0 0.0
  %2724 = vmatpush1.msra.mxu0 %v2701
  %2725 = vmatprep.subr.mxu0 0.0
  %2726 = vmatpush1.msra.mxu0 %v2700
  %2727 = vmatprep.subr.mxu0 0.0
  %2728 = vmatpush1.msra.mxu0 %v2699
  %2729 = vmatprep.subr.mxu0 0.0
  %2730 = vmatpush1.msra.mxu0 %v2698
  %2731 = vmatprep.subr.mxu0 0.0
  %2732 = vmatpush1.msra.mxu0 %v2697
  %2733 = vmatprep.subr.mxu0 0.0
  %2734 = vmatpush1.msra.mxu0 %v2696
  %2735 = vmatprep.subr.mxu0 0.0
  %2736 = vmatpush1.msra.mxu0 %v2695
  %2737 = vmatprep.subr.mxu0 0.0
  %2738 = vmatpush1.msra.mxu0 %v2694
  %2739 = vmatprep.subr.mxu0 0.0
  %2740 = vmatpush1.msra.mxu0 %v2693
  %2741 = vmatprep.subr.mxu0 0.0
  %2742 = vmatpush2.msra.mxu0 0.0
  %2743 = vmatprep.subr.mxu0 0.0
  %2744 = vmatpush2.msra.mxu0 0.0
  %2745 = vmatprep.subr.mxu0 0.0
  %2746 = vmatpush2.msra.mxu0 0.0
  %2747 = vmatprep.subr.mxu0 0.0
  %2748 = vmatpush2.msra.mxu0 0.0
  %2749 = vmatprep.subr.mxu0 0.0
  %2750 = vmatpush2.msra.mxu0 0.0
  %2751 = vmatprep.subr.mxu0 0.0
  %2752 = vmatpush2.msra.mxu0 0.0
  %2753 = vmatprep.subr.mxu0 0.0
  %2754 = vmatpush2.msra.mxu0 0.0
  %2755 = vmatprep.subr.mxu0 0.0
  %2756 = vmatpush2.msra.mxu0 0.0
  %2757 = vmatprep.subr.mxu0 0.0
  %2758 = vmatpush2.msra.mxu0 0.0
  %2759 = vmatprep.subr.mxu0 0.0
  %2760 = vmatpush2.msra.mxu0 0.0
  %2761 = vmatprep.subr.mxu0 0.0
  %2762 = vmatpush2.msra.mxu0 0.0
  %2763 = vmatprep.subr.mxu0 0.0
  %2764 = vmatpush2.msra.mxu0 0.0
  %2765 = vmatprep.subr.mxu0 0.0
  %2766 = vmatpush2.msra.mxu0 0.0
  %2767 = vmatprep.subr.mxu0 0.0
  %2768 = vmatpush2.msra.mxu0 0.0
  %2769 = vmatprep.subr.mxu0 0.0
  %2770 = vmatpush2.msra.mxu0 0.0
  %2771 = vmatprep.subr.mxu0 0.0
  %2772 = vmatpush2.msra.mxu0 0.0
  %2773 = vmatprep.mubr.f32.mxu0 0.0
  %2774 = vmatmul.mubr.f32.gmra.mxu0 %v2675
  %v2775 = vpop.f32.mrf.mxu0
  %v2776 = vadd.f32 0.0, %v2775
  %v2777 = vpop.f32.mrf.mxu0
  %2778 = vmatprep.mubr.f32.mxu0 0.0
  %2779 = vmatmul.mubr.f32.gmra.mxu0 %v2676
  %v2780 = vpop.f32.mrf.mxu0
  %v2781 = vadd.f32 0.0, %v2780
  %v2782 = vpop.f32.mrf.mxu0
  %2783 = vmatprep.mubr.f32.mxu0 0.0
  %2784 = vmatmul.mubr.f32.gmra.mxu0 %v2677
  %v2785 = vpop.f32.mrf.mxu0
  %v2786 = vadd.f32 0.0, %v2785
  %v2787 = vpop.f32.mrf.mxu0
  %2788 = vmatprep.mubr.f32.mxu0 0.0
  %2789 = vmatmul.mubr.f32.gmra.mxu0 %v2678
  %v2790 = vpop.f32.mrf.mxu0
  %v2791 = vadd.f32 0.0, %v2790
  %v2792 = vpop.f32.mrf.mxu0
  %2793 = vmatprep.mubr.f32.mxu0 0.0
  %2794 = vmatmul.mubr.f32.gmra.mxu0 %v2679
  %v2795 = vpop.f32.mrf.mxu0
  %v2796 = vadd.f32 0.0, %v2795
  %v2797 = vpop.f32.mrf.mxu0
  %2798 = vmatprep.mubr.f32.mxu0 0.0
  %2799 = vmatmul.mubr.f32.gmra.mxu0 %v2680
  %v2800 = vpop.f32.mrf.mxu0
  %v2801 = vadd.f32 0.0, %v2800
  %v2802 = vpop.f32.mrf.mxu0
  %2803 = vmatprep.mubr.f32.mxu0 0.0
  %2804 = vmatmul.mubr.f32.gmra.mxu0 %v2681
  %v2805 = vpop.f32.mrf.mxu0
  %v2806 = vadd.f32 0.0, %v2805
  %v2807 = vpop.f32.mrf.mxu0
  %2808 = vmatprep.mubr.f32.mxu0 0.0
  %2809 = vmatmul.mubr.f32.gmra.mxu0 %v2682
  %v2810 = vpop.f32.mrf.mxu0
  %v2811 = vadd.f32 0.0, %v2810
  %v2812 = vpop.f32.mrf.mxu0
  %2813 = vmatprep.mubr.f32.mxu0 0.0
  %2814 = vmatmul.mubr.f32.gmra.mxu0 %v2683
  %v2815 = vpop.f32.mrf.mxu0
  %v2816 = vadd.f32 0.0, %v2815
  %v2817 = vpop.f32.mrf.mxu0
  %2818 = vmatprep.mubr.f32.mxu0 0.0
  %2819 = vmatmul.mubr.f32.gmra.mxu0 %v2684
  %v2820 = vpop.f32.mrf.mxu0
  %v2821 = vadd.f32 0.0, %v2820
  %v2822 = vpop.f32.mrf.mxu0
  %2823 = vmatprep.mubr.f32.mxu0 0.0
  %2824 = vmatmul.mubr.f32.gmra.mxu0 %v2685
  %v2825 = vpop.f32.mrf.mxu0
  %v2826 = vadd.f32 0.0, %v2825
  %v2827 = vpop.f32.mrf.mxu0
  %2828 = vmatprep.mubr.f32.mxu0 0.0
  %2829 = vmatmul.mubr.f32.gmra.mxu0 %v2686
  %v2830 = vpop.f32.mrf.mxu0
  %v2831 = vadd.f32 0.0, %v2830
  %v2832 = vpop.f32.mrf.mxu0
  %2833 = vmatprep.mubr.f32.mxu0 0.0
  %2834 = vmatmul.mubr.f32.gmra.mxu0 %v2687
  %v2835 = vpop.f32.mrf.mxu0
  %v2836 = vadd.f32 0.0, %v2835
  %v2837 = vpop.f32.mrf.mxu0
  %2838 = vmatprep.mubr.f32.mxu0 0.0
  %2839 = vmatmul.mubr.f32.gmra.mxu0 %v2688
  %v2840 = vpop.f32.mrf.mxu0
  %v2841 = vadd.f32 0.0, %v2840
  %v2842 = vpop.f32.mrf.mxu0
  %2843 = vmatprep.mubr.f32.mxu0 0.0
  %2844 = vmatmul.mubr.f32.gmra.mxu0 %v2689
  %v2845 = vpop.f32.mrf.mxu0
  %v2846 = vadd.f32 0.0, %v2845
  %v2847 = vpop.f32.mrf.mxu0
  %2848 = vmatprep.mubr.f32.mxu0 0.0
  %2849 = vmatmul.mubr.f32.gmra.mxu0 %v2690
  %v2850 = vpop.f32.mrf.mxu0
  %v2851 = vadd.f32 0.0, %v2850
  %v2852 = vpop.f32.mrf.mxu0
  %2853 = vmatprep.mubr.f32.mxu0 0.0
  %2854 = vmatmul.mubr.f32.gmra.mxu0 %v2691
  %v2855 = vpop.f32.mrf.mxu0
  %v2856 = vadd.f32 0.0, %v2855
  %v2857 = vpop.f32.mrf.mxu0
  %2858 = vdwg.mxu0
  %v2859 = vadd.f32 %v2658, %v2776
  %v2860 = vadd.f32 %v2659, %v2781
  %v2861 = vadd.f32 %v2660, %v2786
  %v2862 = vadd.f32 %v2661, %v2791
  %v2863 = vadd.f32 %v2662, %v2796
  %v2864 = vadd.f32 %v2663, %v2801
  %v2865 = vadd.f32 %v2664, %v2806
  %v2866 = vadd.f32 %v2665, %v2811
  %v2867 = vadd.f32 %v2666, %v2816
  %v2868 = vadd.f32 %v2667, %v2821
  %v2869 = vadd.f32 %v2668, %v2826
  %v2870 = vadd.f32 %v2669, %v2831
  %v2871 = vadd.f32 %v2670, %v2836
  %v2872 = vadd.f32 %v2671, %v2841
  %v2873 = vadd.f32 %v2672, %v2846
  %v2874 = vadd.f32 %v2673, %v2851
  %v2875 = vadd.f32 %v2674, %v2856
  %v2876 = vld [vmem:[#allocation2 + $0x1c] sm:$0xff]
  %v2877 = vld [vmem:[#allocation2 + $0x24] sm:$0xff]
  %v2878 = vld [vmem:[#allocation2 + $0x2c] sm:$0xff]
  %v2879 = vld [vmem:[#allocation2 + $0x34] sm:$0xff]
  %v2880 = vld [vmem:[#allocation2 + $0x3c] sm:$0xff]
  %v2881 = vld [vmem:[#allocation2 + $0x44] sm:$0xff]
  %v2882 = vld [vmem:[#allocation2 + $0x4c] sm:$0xff]
  %v2883 = vld [vmem:[#allocation2 + $0x54] sm:$0xff]
  %v2884 = vld [vmem:[#allocation2 + $0x5c] sm:$0xff]
  %v2885 = vld [vmem:[#allocation2 + $0x64] sm:$0xff]
  %v2886 = vld [vmem:[#allocation2 + $0x6c] sm:$0xff]
  %v2887 = vld [vmem:[#allocation2 + $0x74] sm:$0xff]
  %v2888 = vld [vmem:[#allocation2 + $0x7c] sm:$0xff]
  %v2889 = vld [vmem:[#allocation2 + $0x84] sm:$0xff]
  %v2890 = vld [vmem:[#allocation2 + $0x8c] sm:$0xff]
  %v2891 = vld [vmem:[#allocation2 + $0x94] sm:$0xff]
  %v2892 = vld [vmem:[#allocation2 + $0x9c] sm:$0xf]
  %s2893 = scalar_lea.vmem %s3, 1664
  %v2894 = vld [vmem:[%s2893] sm:$0xff]
  %v2895 = vld [vmem:[%s2893 + $0x8] sm:$0xff]
  %v2896 = vld [vmem:[%s2893 + $0x10] sm:$0xff]
  %v2897 = vld [vmem:[%s2893 + $0x18] sm:$0xff]
  %v2898 = vld [vmem:[%s2893 + $0x20] sm:$0xff]
  %v2899 = vld [vmem:[%s2893 + $0x28] sm:$0xff]
  %v2900 = vld [vmem:[%s2893 + $0x30] sm:$0xff]
  %v2901 = vld [vmem:[%s2893 + $0x38] sm:$0xff]
  %v2902 = vld [vmem:[%s2893 + $0x40] sm:$0xff]
  %v2903 = vld [vmem:[%s2893 + $0x48] sm:$0xff]
  %v2904 = vld [vmem:[%s2893 + $0x50] sm:$0xff]
  %v2905 = vld [vmem:[%s2893 + $0x58] sm:$0xff]
  %v2906 = vld [vmem:[%s2893 + $0x60] sm:$0xff]
  %v2907 = vld [vmem:[%s2893 + $0x68] sm:$0xff]
  %v2908 = vld [vmem:[%s2893 + $0x70] sm:$0xff]
  %v2909 = vld [vmem:[%s2893 + $0x78] sm:$0xff]
  %2910 = vmatprep.subr.mxu0 0.0
  %2911 = vmatpush1.msra.mxu0 %v2909
  %2912 = vmatprep.subr.mxu0 0.0
  %2913 = vmatpush1.msra.mxu0 %v2908
  %2914 = vmatprep.subr.mxu0 0.0
  %2915 = vmatpush1.msra.mxu0 %v2907
  %2916 = vmatprep.subr.mxu0 0.0
  %2917 = vmatpush1.msra.mxu0 %v2906
  %2918 = vmatprep.subr.mxu0 0.0
  %2919 = vmatpush1.msra.mxu0 %v2905
  %2920 = vmatprep.subr.mxu0 0.0
  %2921 = vmatpush1.msra.mxu0 %v2904
  %2922 = vmatprep.subr.mxu0 0.0
  %2923 = vmatpush1.msra.mxu0 %v2903
  %2924 = vmatprep.subr.mxu0 0.0
  %2925 = vmatpush1.msra.mxu0 %v2902
  %2926 = vmatprep.subr.mxu0 0.0
  %2927 = vmatpush1.msra.mxu0 %v2901
  %2928 = vmatprep.subr.mxu0 0.0
  %2929 = vmatpush1.msra.mxu0 %v2900
  %2930 = vmatprep.subr.mxu0 0.0
  %2931 = vmatpush1.msra.mxu0 %v2899
  %2932 = vmatprep.subr.mxu0 0.0
  %2933 = vmatpush1.msra.mxu0 %v2898
  %2934 = vmatprep.subr.mxu0 0.0
  %2935 = vmatpush1.msra.mxu0 %v2897
  %2936 = vmatprep.subr.mxu0 0.0
  %2937 = vmatpush1.msra.mxu0 %v2896
  %2938 = vmatprep.subr.mxu0 0.0
  %2939 = vmatpush1.msra.mxu0 %v2895
  %2940 = vmatprep.subr.mxu0 0.0
  %2941 = vmatpush1.msra.mxu0 %v2894
  %2942 = vmatprep.subr.mxu0 0.0
  %2943 = vmatpush2.msra.mxu0 0.0
  %2944 = vmatprep.subr.mxu0 0.0
  %2945 = vmatpush2.msra.mxu0 0.0
  %2946 = vmatprep.subr.mxu0 0.0
  %2947 = vmatpush2.msra.mxu0 0.0
  %2948 = vmatprep.subr.mxu0 0.0
  %2949 = vmatpush2.msra.mxu0 0.0
  %2950 = vmatprep.subr.mxu0 0.0
  %2951 = vmatpush2.msra.mxu0 0.0
  %2952 = vmatprep.subr.mxu0 0.0
  %2953 = vmatpush2.msra.mxu0 0.0
  %2954 = vmatprep.subr.mxu0 0.0
  %2955 = vmatpush2.msra.mxu0 0.0
  %2956 = vmatprep.subr.mxu0 0.0
  %2957 = vmatpush2.msra.mxu0 0.0
  %2958 = vmatprep.subr.mxu0 0.0
  %2959 = vmatpush2.msra.mxu0 0.0
  %2960 = vmatprep.subr.mxu0 0.0
  %2961 = vmatpush2.msra.mxu0 0.0
  %2962 = vmatprep.subr.mxu0 0.0
  %2963 = vmatpush2.msra.mxu0 0.0
  %2964 = vmatprep.subr.mxu0 0.0
  %2965 = vmatpush2.msra.mxu0 0.0
  %2966 = vmatprep.subr.mxu0 0.0
  %2967 = vmatpush2.msra.mxu0 0.0
  %2968 = vmatprep.subr.mxu0 0.0
  %2969 = vmatpush2.msra.mxu0 0.0
  %2970 = vmatprep.subr.mxu0 0.0
  %2971 = vmatpush2.msra.mxu0 0.0
  %2972 = vmatprep.subr.mxu0 0.0
  %2973 = vmatpush2.msra.mxu0 0.0
  %2974 = vmatprep.mubr.f32.mxu0 0.0
  %2975 = vmatmul.mubr.f32.gmra.mxu0 %v2876
  %v2976 = vpop.f32.mrf.mxu0
  %v2977 = vadd.f32 0.0, %v2976
  %v2978 = vpop.f32.mrf.mxu0
  %2979 = vmatprep.mubr.f32.mxu0 0.0
  %2980 = vmatmul.mubr.f32.gmra.mxu0 %v2877
  %v2981 = vpop.f32.mrf.mxu0
  %v2982 = vadd.f32 0.0, %v2981
  %v2983 = vpop.f32.mrf.mxu0
  %2984 = vmatprep.mubr.f32.mxu0 0.0
  %2985 = vmatmul.mubr.f32.gmra.mxu0 %v2878
  %v2986 = vpop.f32.mrf.mxu0
  %v2987 = vadd.f32 0.0, %v2986
  %v2988 = vpop.f32.mrf.mxu0
  %2989 = vmatprep.mubr.f32.mxu0 0.0
  %2990 = vmatmul.mubr.f32.gmra.mxu0 %v2879
  %v2991 = vpop.f32.mrf.mxu0
  %v2992 = vadd.f32 0.0, %v2991
  %v2993 = vpop.f32.mrf.mxu0
  %2994 = vmatprep.mubr.f32.mxu0 0.0
  %2995 = vmatmul.mubr.f32.gmra.mxu0 %v2880
  %v2996 = vpop.f32.mrf.mxu0
  %v2997 = vadd.f32 0.0, %v2996
  %v2998 = vpop.f32.mrf.mxu0
  %2999 = vmatprep.mubr.f32.mxu0 0.0
  %3000 = vmatmul.mubr.f32.gmra.mxu0 %v2881
  %v3001 = vpop.f32.mrf.mxu0
  %v3002 = vadd.f32 0.0, %v3001
  %v3003 = vpop.f32.mrf.mxu0
  %3004 = vmatprep.mubr.f32.mxu0 0.0
  %3005 = vmatmul.mubr.f32.gmra.mxu0 %v2882
  %v3006 = vpop.f32.mrf.mxu0
  %v3007 = vadd.f32 0.0, %v3006
  %v3008 = vpop.f32.mrf.mxu0
  %3009 = vmatprep.mubr.f32.mxu0 0.0
  %3010 = vmatmul.mubr.f32.gmra.mxu0 %v2883
  %v3011 = vpop.f32.mrf.mxu0
  %v3012 = vadd.f32 0.0, %v3011
  %v3013 = vpop.f32.mrf.mxu0
  %3014 = vmatprep.mubr.f32.mxu0 0.0
  %3015 = vmatmul.mubr.f32.gmra.mxu0 %v2884
  %v3016 = vpop.f32.mrf.mxu0
  %v3017 = vadd.f32 0.0, %v3016
  %v3018 = vpop.f32.mrf.mxu0
  %3019 = vmatprep.mubr.f32.mxu0 0.0
  %3020 = vmatmul.mubr.f32.gmra.mxu0 %v2885
  %v3021 = vpop.f32.mrf.mxu0
  %v3022 = vadd.f32 0.0, %v3021
  %v3023 = vpop.f32.mrf.mxu0
  %3024 = vmatprep.mubr.f32.mxu0 0.0
  %3025 = vmatmul.mubr.f32.gmra.mxu0 %v2886
  %v3026 = vpop.f32.mrf.mxu0
  %v3027 = vadd.f32 0.0, %v3026
  %v3028 = vpop.f32.mrf.mxu0
  %3029 = vmatprep.mubr.f32.mxu0 0.0
  %3030 = vmatmul.mubr.f32.gmra.mxu0 %v2887
  %v3031 = vpop.f32.mrf.mxu0
  %v3032 = vadd.f32 0.0, %v3031
  %v3033 = vpop.f32.mrf.mxu0
  %3034 = vmatprep.mubr.f32.mxu0 0.0
  %3035 = vmatmul.mubr.f32.gmra.mxu0 %v2888
  %v3036 = vpop.f32.mrf.mxu0
  %v3037 = vadd.f32 0.0, %v3036
  %v3038 = vpop.f32.mrf.mxu0
  %3039 = vmatprep.mubr.f32.mxu0 0.0
  %3040 = vmatmul.mubr.f32.gmra.mxu0 %v2889
  %v3041 = vpop.f32.mrf.mxu0
  %v3042 = vadd.f32 0.0, %v3041
  %v3043 = vpop.f32.mrf.mxu0
  %3044 = vmatprep.mubr.f32.mxu0 0.0
  %3045 = vmatmul.mubr.f32.gmra.mxu0 %v2890
  %v3046 = vpop.f32.mrf.mxu0
  %v3047 = vadd.f32 0.0, %v3046
  %v3048 = vpop.f32.mrf.mxu0
  %3049 = vmatprep.mubr.f32.mxu0 0.0
  %3050 = vmatmul.mubr.f32.gmra.mxu0 %v2891
  %v3051 = vpop.f32.mrf.mxu0
  %v3052 = vadd.f32 0.0, %v3051
  %v3053 = vpop.f32.mrf.mxu0
  %3054 = vmatprep.mubr.f32.mxu0 0.0
  %3055 = vmatmul.mubr.f32.gmra.mxu0 %v2892
  %v3056 = vpop.f32.mrf.mxu0
  %v3057 = vadd.f32 0.0, %v3056
  %v3058 = vpop.f32.mrf.mxu0
  %3059 = vdwg.mxu0
  %v3060 = vadd.f32 %v2859, %v2977
  %v3061 = vadd.f32 %v2860, %v2982
  %v3062 = vadd.f32 %v2861, %v2987
  %v3063 = vadd.f32 %v2862, %v2992
  %v3064 = vadd.f32 %v2863, %v2997
  %v3065 = vadd.f32 %v2864, %v3002
  %v3066 = vadd.f32 %v2865, %v3007
  %v3067 = vadd.f32 %v2866, %v3012
  %v3068 = vadd.f32 %v2867, %v3017
  %v3069 = vadd.f32 %v2868, %v3022
  %v3070 = vadd.f32 %v2869, %v3027
  %v3071 = vadd.f32 %v2870, %v3032
  %v3072 = vadd.f32 %v2871, %v3037
  %v3073 = vadd.f32 %v2872, %v3042
  %v3074 = vadd.f32 %v2873, %v3047
  %v3075 = vadd.f32 %v2874, %v3052
  %v3076 = vadd.f32 %v2875, %v3057
  %v3077 = vld [vmem:[#allocation2 + $0x1d] sm:$0xff]
  %v3078 = vld [vmem:[#allocation2 + $0x25] sm:$0xff]
  %v3079 = vld [vmem:[#allocation2 + $0x2d] sm:$0xff]
  %v3080 = vld [vmem:[#allocation2 + $0x35] sm:$0xff]
  %v3081 = vld [vmem:[#allocation2 + $0x3d] sm:$0xff]
  %v3082 = vld [vmem:[#allocation2 + $0x45] sm:$0xff]
  %v3083 = vld [vmem:[#allocation2 + $0x4d] sm:$0xff]
  %v3084 = vld [vmem:[#allocation2 + $0x55] sm:$0xff]
  %v3085 = vld [vmem:[#allocation2 + $0x5d] sm:$0xff]
  %v3086 = vld [vmem:[#allocation2 + $0x65] sm:$0xff]
  %v3087 = vld [vmem:[#allocation2 + $0x6d] sm:$0xff]
  %v3088 = vld [vmem:[#allocation2 + $0x75] sm:$0xff]
  %v3089 = vld [vmem:[#allocation2 + $0x7d] sm:$0xff]
  %v3090 = vld [vmem:[#allocation2 + $0x85] sm:$0xff]
  %v3091 = vld [vmem:[#allocation2 + $0x8d] sm:$0xff]
  %v3092 = vld [vmem:[#allocation2 + $0x95] sm:$0xff]
  %v3093 = vld [vmem:[#allocation2 + $0x9d] sm:$0xf]
  %s3094 = scalar_lea.vmem %s3, 1792
  %v3095 = vld [vmem:[%s3094] sm:$0xff]
  %v3096 = vld [vmem:[%s3094 + $0x8] sm:$0xff]
  %v3097 = vld [vmem:[%s3094 + $0x10] sm:$0xff]
  %v3098 = vld [vmem:[%s3094 + $0x18] sm:$0xff]
  %v3099 = vld [vmem:[%s3094 + $0x20] sm:$0xff]
  %v3100 = vld [vmem:[%s3094 + $0x28] sm:$0xff]
  %v3101 = vld [vmem:[%s3094 + $0x30] sm:$0xff]
  %v3102 = vld [vmem:[%s3094 + $0x38] sm:$0xff]
  %v3103 = vld [vmem:[%s3094 + $0x40] sm:$0xff]
  %v3104 = vld [vmem:[%s3094 + $0x48] sm:$0xff]
  %v3105 = vld [vmem:[%s3094 + $0x50] sm:$0xff]
  %v3106 = vld [vmem:[%s3094 + $0x58] sm:$0xff]
  %v3107 = vld [vmem:[%s3094 + $0x60] sm:$0xff]
  %v3108 = vld [vmem:[%s3094 + $0x68] sm:$0xff]
  %v3109 = vld [vmem:[%s3094 + $0x70] sm:$0xff]
  %v3110 = vld [vmem:[%s3094 + $0x78] sm:$0xff]
  %3111 = vmatprep.subr.mxu0 0.0
  %3112 = vmatpush1.msra.mxu0 %v3110
  %3113 = vmatprep.subr.mxu0 0.0
  %3114 = vmatpush1.msra.mxu0 %v3109
  %3115 = vmatprep.subr.mxu0 0.0
  %3116 = vmatpush1.msra.mxu0 %v3108
  %3117 = vmatprep.subr.mxu0 0.0
  %3118 = vmatpush1.msra.mxu0 %v3107
  %3119 = vmatprep.subr.mxu0 0.0
  %3120 = vmatpush1.msra.mxu0 %v3106
  %3121 = vmatprep.subr.mxu0 0.0
  %3122 = vmatpush1.msra.mxu0 %v3105
  %3123 = vmatprep.subr.mxu0 0.0
  %3124 = vmatpush1.msra.mxu0 %v3104
  %3125 = vmatprep.subr.mxu0 0.0
  %3126 = vmatpush1.msra.mxu0 %v3103
  %3127 = vmatprep.subr.mxu0 0.0
  %3128 = vmatpush1.msra.mxu0 %v3102
  %3129 = vmatprep.subr.mxu0 0.0
  %3130 = vmatpush1.msra.mxu0 %v3101
  %3131 = vmatprep.subr.mxu0 0.0
  %3132 = vmatpush1.msra.mxu0 %v3100
  %3133 = vmatprep.subr.mxu0 0.0
  %3134 = vmatpush1.msra.mxu0 %v3099
  %3135 = vmatprep.subr.mxu0 0.0
  %3136 = vmatpush1.msra.mxu0 %v3098
  %3137 = vmatprep.subr.mxu0 0.0
  %3138 = vmatpush1.msra.mxu0 %v3097
  %3139 = vmatprep.subr.mxu0 0.0
  %3140 = vmatpush1.msra.mxu0 %v3096
  %3141 = vmatprep.subr.mxu0 0.0
  %3142 = vmatpush1.msra.mxu0 %v3095
  %3143 = vmatprep.subr.mxu0 0.0
  %3144 = vmatpush2.msra.mxu0 0.0
  %3145 = vmatprep.subr.mxu0 0.0
  %3146 = vmatpush2.msra.mxu0 0.0
  %3147 = vmatprep.subr.mxu0 0.0
  %3148 = vmatpush2.msra.mxu0 0.0
  %3149 = vmatprep.subr.mxu0 0.0
  %3150 = vmatpush2.msra.mxu0 0.0
  %3151 = vmatprep.subr.mxu0 0.0
  %3152 = vmatpush2.msra.mxu0 0.0
  %3153 = vmatprep.subr.mxu0 0.0
  %3154 = vmatpush2.msra.mxu0 0.0
  %3155 = vmatprep.subr.mxu0 0.0
  %3156 = vmatpush2.msra.mxu0 0.0
  %3157 = vmatprep.subr.mxu0 0.0
  %3158 = vmatpush2.msra.mxu0 0.0
  %3159 = vmatprep.subr.mxu0 0.0
  %3160 = vmatpush2.msra.mxu0 0.0
  %3161 = vmatprep.subr.mxu0 0.0
  %3162 = vmatpush2.msra.mxu0 0.0
  %3163 = vmatprep.subr.mxu0 0.0
  %3164 = vmatpush2.msra.mxu0 0.0
  %3165 = vmatprep.subr.mxu0 0.0
  %3166 = vmatpush2.msra.mxu0 0.0
  %3167 = vmatprep.subr.mxu0 0.0
  %3168 = vmatpush2.msra.mxu0 0.0
  %3169 = vmatprep.subr.mxu0 0.0
  %3170 = vmatpush2.msra.mxu0 0.0
  %3171 = vmatprep.subr.mxu0 0.0
  %3172 = vmatpush2.msra.mxu0 0.0
  %3173 = vmatprep.subr.mxu0 0.0
  %3174 = vmatpush2.msra.mxu0 0.0
  %3175 = vmatprep.mubr.f32.mxu0 0.0
  %3176 = vmatmul.mubr.f32.gmra.mxu0 %v3077
  %v3177 = vpop.f32.mrf.mxu0
  %v3178 = vadd.f32 0.0, %v3177
  %v3179 = vpop.f32.mrf.mxu0
  %3180 = vmatprep.mubr.f32.mxu0 0.0
  %3181 = vmatmul.mubr.f32.gmra.mxu0 %v3078
  %v3182 = vpop.f32.mrf.mxu0
  %v3183 = vadd.f32 0.0, %v3182
  %v3184 = vpop.f32.mrf.mxu0
  %3185 = vmatprep.mubr.f32.mxu0 0.0
  %3186 = vmatmul.mubr.f32.gmra.mxu0 %v3079
  %v3187 = vpop.f32.mrf.mxu0
  %v3188 = vadd.f32 0.0, %v3187
  %v3189 = vpop.f32.mrf.mxu0
  %3190 = vmatprep.mubr.f32.mxu0 0.0
  %3191 = vmatmul.mubr.f32.gmra.mxu0 %v3080
  %v3192 = vpop.f32.mrf.mxu0
  %v3193 = vadd.f32 0.0, %v3192
  %v3194 = vpop.f32.mrf.mxu0
  %3195 = vmatprep.mubr.f32.mxu0 0.0
  %3196 = vmatmul.mubr.f32.gmra.mxu0 %v3081
  %v3197 = vpop.f32.mrf.mxu0
  %v3198 = vadd.f32 0.0, %v3197
  %v3199 = vpop.f32.mrf.mxu0
  %3200 = vmatprep.mubr.f32.mxu0 0.0
  %3201 = vmatmul.mubr.f32.gmra.mxu0 %v3082
  %v3202 = vpop.f32.mrf.mxu0
  %v3203 = vadd.f32 0.0, %v3202
  %v3204 = vpop.f32.mrf.mxu0
  %3205 = vmatprep.mubr.f32.mxu0 0.0
  %3206 = vmatmul.mubr.f32.gmra.mxu0 %v3083
  %v3207 = vpop.f32.mrf.mxu0
  %v3208 = vadd.f32 0.0, %v3207
  %v3209 = vpop.f32.mrf.mxu0
  %3210 = vmatprep.mubr.f32.mxu0 0.0
  %3211 = vmatmul.mubr.f32.gmra.mxu0 %v3084
  %v3212 = vpop.f32.mrf.mxu0
  %v3213 = vadd.f32 0.0, %v3212
  %v3214 = vpop.f32.mrf.mxu0
  %3215 = vmatprep.mubr.f32.mxu0 0.0
  %3216 = vmatmul.mubr.f32.gmra.mxu0 %v3085
  %v3217 = vpop.f32.mrf.mxu0
  %v3218 = vadd.f32 0.0, %v3217
  %v3219 = vpop.f32.mrf.mxu0
  %3220 = vmatprep.mubr.f32.mxu0 0.0
  %3221 = vmatmul.mubr.f32.gmra.mxu0 %v3086
  %v3222 = vpop.f32.mrf.mxu0
  %v3223 = vadd.f32 0.0, %v3222
  %v3224 = vpop.f32.mrf.mxu0
  %3225 = vmatprep.mubr.f32.mxu0 0.0
  %3226 = vmatmul.mubr.f32.gmra.mxu0 %v3087
  %v3227 = vpop.f32.mrf.mxu0
  %v3228 = vadd.f32 0.0, %v3227
  %v3229 = vpop.f32.mrf.mxu0
  %3230 = vmatprep.mubr.f32.mxu0 0.0
  %3231 = vmatmul.mubr.f32.gmra.mxu0 %v3088
  %v3232 = vpop.f32.mrf.mxu0
  %v3233 = vadd.f32 0.0, %v3232
  %v3234 = vpop.f32.mrf.mxu0
  %3235 = vmatprep.mubr.f32.mxu0 0.0
  %3236 = vmatmul.mubr.f32.gmra.mxu0 %v3089
  %v3237 = vpop.f32.mrf.mxu0
  %v3238 = vadd.f32 0.0, %v3237
  %v3239 = vpop.f32.mrf.mxu0
  %3240 = vmatprep.mubr.f32.mxu0 0.0
  %3241 = vmatmul.mubr.f32.gmra.mxu0 %v3090
  %v3242 = vpop.f32.mrf.mxu0
  %v3243 = vadd.f32 0.0, %v3242
  %v3244 = vpop.f32.mrf.mxu0
  %3245 = vmatprep.mubr.f32.mxu0 0.0
  %3246 = vmatmul.mubr.f32.gmra.mxu0 %v3091
  %v3247 = vpop.f32.mrf.mxu0
  %v3248 = vadd.f32 0.0, %v3247
  %v3249 = vpop.f32.mrf.mxu0
  %3250 = vmatprep.mubr.f32.mxu0 0.0
  %3251 = vmatmul.mubr.f32.gmra.mxu0 %v3092
  %v3252 = vpop.f32.mrf.mxu0
  %v3253 = vadd.f32 0.0, %v3252
  %v3254 = vpop.f32.mrf.mxu0
  %3255 = vmatprep.mubr.f32.mxu0 0.0
  %3256 = vmatmul.mubr.f32.gmra.mxu0 %v3093
  %v3257 = vpop.f32.mrf.mxu0
  %v3258 = vadd.f32 0.0, %v3257
  %v3259 = vpop.f32.mrf.mxu0
  %3260 = vdwg.mxu0
  %v3261 = vadd.f32 %v3060, %v3178
  %v3262 = vadd.f32 %v3061, %v3183
  %v3263 = vadd.f32 %v3062, %v3188
  %v3264 = vadd.f32 %v3063, %v3193
  %v3265 = vadd.f32 %v3064, %v3198
  %v3266 = vadd.f32 %v3065, %v3203
  %v3267 = vadd.f32 %v3066, %v3208
  %v3268 = vadd.f32 %v3067, %v3213
  %v3269 = vadd.f32 %v3068, %v3218
  %v3270 = vadd.f32 %v3069, %v3223
  %v3271 = vadd.f32 %v3070, %v3228
  %v3272 = vadd.f32 %v3071, %v3233
  %v3273 = vadd.f32 %v3072, %v3238
  %v3274 = vadd.f32 %v3073, %v3243
  %v3275 = vadd.f32 %v3074, %v3248
  %v3276 = vadd.f32 %v3075, %v3253
  %v3277 = vadd.f32 %v3076, %v3258
  %v3278 = vld [vmem:[#allocation2 + $0x1e] sm:$0xff]
  %v3279 = vld [vmem:[#allocation2 + $0x26] sm:$0xff]
  %v3280 = vld [vmem:[#allocation2 + $0x2e] sm:$0xff]
  %v3281 = vld [vmem:[#allocation2 + $0x36] sm:$0xff]
  %v3282 = vld [vmem:[#allocation2 + $0x3e] sm:$0xff]
  %v3283 = vld [vmem:[#allocation2 + $0x46] sm:$0xff]
  %v3284 = vld [vmem:[#allocation2 + $0x4e] sm:$0xff]
  %v3285 = vld [vmem:[#allocation2 + $0x56] sm:$0xff]
  %v3286 = vld [vmem:[#allocation2 + $0x5e] sm:$0xff]
  %v3287 = vld [vmem:[#allocation2 + $0x66] sm:$0xff]
  %v3288 = vld [vmem:[#allocation2 + $0x6e] sm:$0xff]
  %v3289 = vld [vmem:[#allocation2 + $0x76] sm:$0xff]
  %v3290 = vld [vmem:[#allocation2 + $0x7e] sm:$0xff]
  %v3291 = vld [vmem:[#allocation2 + $0x86] sm:$0xff]
  %v3292 = vld [vmem:[#allocation2 + $0x8e] sm:$0xff]
  %v3293 = vld [vmem:[#allocation2 + $0x96] sm:$0xff]
  %v3294 = vld [vmem:[#allocation2 + $0x9e] sm:$0xf]
  %s3295 = scalar_lea.vmem %s3, 1920
  %v3296 = vld [vmem:[%s3295] sm:$0xff]
  %v3297 = vld [vmem:[%s3295 + $0x8] sm:$0xff]
  %v3298 = vld [vmem:[%s3295 + $0x10] sm:$0xff]
  %v3299 = vld [vmem:[%s3295 + $0x18] sm:$0xff]
  %v3300 = vld [vmem:[%s3295 + $0x20] sm:$0xff]
  %v3301 = vld [vmem:[%s3295 + $0x28] sm:$0xff]
  %v3302 = vld [vmem:[%s3295 + $0x30] sm:$0xff]
  %v3303 = vld [vmem:[%s3295 + $0x38] sm:$0xff]
  %v3304 = vld [vmem:[%s3295 + $0x40] sm:$0xff]
  %v3305 = vld [vmem:[%s3295 + $0x48] sm:$0xff]
  %v3306 = vld [vmem:[%s3295 + $0x50] sm:$0xff]
  %v3307 = vld [vmem:[%s3295 + $0x58] sm:$0xff]
  %v3308 = vld [vmem:[%s3295 + $0x60] sm:$0xff]
  %v3309 = vld [vmem:[%s3295 + $0x68] sm:$0xff]
  %v3310 = vld [vmem:[%s3295 + $0x70] sm:$0xff]
  %v3311 = vld [vmem:[%s3295 + $0x78] sm:$0xff]
  %3312 = vmatprep.subr.mxu0 0.0
  %3313 = vmatpush1.msra.mxu0 %v3311
  %3314 = vmatprep.subr.mxu0 0.0
  %3315 = vmatpush1.msra.mxu0 %v3310
  %3316 = vmatprep.subr.mxu0 0.0
  %3317 = vmatpush1.msra.mxu0 %v3309
  %3318 = vmatprep.subr.mxu0 0.0
  %3319 = vmatpush1.msra.mxu0 %v3308
  %3320 = vmatprep.subr.mxu0 0.0
  %3321 = vmatpush1.msra.mxu0 %v3307
  %3322 = vmatprep.subr.mxu0 0.0
  %3323 = vmatpush1.msra.mxu0 %v3306
  %3324 = vmatprep.subr.mxu0 0.0
  %3325 = vmatpush1.msra.mxu0 %v3305
  %3326 = vmatprep.subr.mxu0 0.0
  %3327 = vmatpush1.msra.mxu0 %v3304
  %3328 = vmatprep.subr.mxu0 0.0
  %3329 = vmatpush1.msra.mxu0 %v3303
  %3330 = vmatprep.subr.mxu0 0.0
  %3331 = vmatpush1.msra.mxu0 %v3302
  %3332 = vmatprep.subr.mxu0 0.0
  %3333 = vmatpush1.msra.mxu0 %v3301
  %3334 = vmatprep.subr.mxu0 0.0
  %3335 = vmatpush1.msra.mxu0 %v3300
  %3336 = vmatprep.subr.mxu0 0.0
  %3337 = vmatpush1.msra.mxu0 %v3299
  %3338 = vmatprep.subr.mxu0 0.0
  %3339 = vmatpush1.msra.mxu0 %v3298
  %3340 = vmatprep.subr.mxu0 0.0
  %3341 = vmatpush1.msra.mxu0 %v3297
  %3342 = vmatprep.subr.mxu0 0.0
  %3343 = vmatpush1.msra.mxu0 %v3296
  %3344 = vmatprep.subr.mxu0 0.0
  %3345 = vmatpush2.msra.mxu0 0.0
  %3346 = vmatprep.subr.mxu0 0.0
  %3347 = vmatpush2.msra.mxu0 0.0
  %3348 = vmatprep.subr.mxu0 0.0
  %3349 = vmatpush2.msra.mxu0 0.0
  %3350 = vmatprep.subr.mxu0 0.0
  %3351 = vmatpush2.msra.mxu0 0.0
  %3352 = vmatprep.subr.mxu0 0.0
  %3353 = vmatpush2.msra.mxu0 0.0
  %3354 = vmatprep.subr.mxu0 0.0
  %3355 = vmatpush2.msra.mxu0 0.0
  %3356 = vmatprep.subr.mxu0 0.0
  %3357 = vmatpush2.msra.mxu0 0.0
  %3358 = vmatprep.subr.mxu0 0.0
  %3359 = vmatpush2.msra.mxu0 0.0
  %3360 = vmatprep.subr.mxu0 0.0
  %3361 = vmatpush2.msra.mxu0 0.0
  %3362 = vmatprep.subr.mxu0 0.0
  %3363 = vmatpush2.msra.mxu0 0.0
  %3364 = vmatprep.subr.mxu0 0.0
  %3365 = vmatpush2.msra.mxu0 0.0
  %3366 = vmatprep.subr.mxu0 0.0
  %3367 = vmatpush2.msra.mxu0 0.0
  %3368 = vmatprep.subr.mxu0 0.0
  %3369 = vmatpush2.msra.mxu0 0.0
  %3370 = vmatprep.subr.mxu0 0.0
  %3371 = vmatpush2.msra.mxu0 0.0
  %3372 = vmatprep.subr.mxu0 0.0
  %3373 = vmatpush2.msra.mxu0 0.0
  %3374 = vmatprep.subr.mxu0 0.0
  %3375 = vmatpush2.msra.mxu0 0.0
  %3376 = vmatprep.mubr.f32.mxu0 0.0
  %3377 = vmatmul.mubr.f32.gmra.mxu0 %v3278
  %v3378 = vpop.f32.mrf.mxu0
  %v3379 = vadd.f32 0.0, %v3378
  %v3380 = vpop.f32.mrf.mxu0
  %3381 = vmatprep.mubr.f32.mxu0 0.0
  %3382 = vmatmul.mubr.f32.gmra.mxu0 %v3279
  %v3383 = vpop.f32.mrf.mxu0
  %v3384 = vadd.f32 0.0, %v3383
  %v3385 = vpop.f32.mrf.mxu0
  %3386 = vmatprep.mubr.f32.mxu0 0.0
  %3387 = vmatmul.mubr.f32.gmra.mxu0 %v3280
  %v3388 = vpop.f32.mrf.mxu0
  %v3389 = vadd.f32 0.0, %v3388
  %v3390 = vpop.f32.mrf.mxu0
  %3391 = vmatprep.mubr.f32.mxu0 0.0
  %3392 = vmatmul.mubr.f32.gmra.mxu0 %v3281
  %v3393 = vpop.f32.mrf.mxu0
  %v3394 = vadd.f32 0.0, %v3393
  %v3395 = vpop.f32.mrf.mxu0
  %3396 = vmatprep.mubr.f32.mxu0 0.0
  %3397 = vmatmul.mubr.f32.gmra.mxu0 %v3282
  %v3398 = vpop.f32.mrf.mxu0
  %v3399 = vadd.f32 0.0, %v3398
  %v3400 = vpop.f32.mrf.mxu0
  %3401 = vmatprep.mubr.f32.mxu0 0.0
  %3402 = vmatmul.mubr.f32.gmra.mxu0 %v3283
  %v3403 = vpop.f32.mrf.mxu0
  %v3404 = vadd.f32 0.0, %v3403
  %v3405 = vpop.f32.mrf.mxu0
  %3406 = vmatprep.mubr.f32.mxu0 0.0
  %3407 = vmatmul.mubr.f32.gmra.mxu0 %v3284
  %v3408 = vpop.f32.mrf.mxu0
  %v3409 = vadd.f32 0.0, %v3408
  %v3410 = vpop.f32.mrf.mxu0
  %3411 = vmatprep.mubr.f32.mxu0 0.0
  %3412 = vmatmul.mubr.f32.gmra.mxu0 %v3285
  %v3413 = vpop.f32.mrf.mxu0
  %v3414 = vadd.f32 0.0, %v3413
  %v3415 = vpop.f32.mrf.mxu0
  %3416 = vmatprep.mubr.f32.mxu0 0.0
  %3417 = vmatmul.mubr.f32.gmra.mxu0 %v3286
  %v3418 = vpop.f32.mrf.mxu0
  %v3419 = vadd.f32 0.0, %v3418
  %v3420 = vpop.f32.mrf.mxu0
  %3421 = vmatprep.mubr.f32.mxu0 0.0
  %3422 = vmatmul.mubr.f32.gmra.mxu0 %v3287
  %v3423 = vpop.f32.mrf.mxu0
  %v3424 = vadd.f32 0.0, %v3423
  %v3425 = vpop.f32.mrf.mxu0
  %3426 = vmatprep.mubr.f32.mxu0 0.0
  %3427 = vmatmul.mubr.f32.gmra.mxu0 %v3288
  %v3428 = vpop.f32.mrf.mxu0
  %v3429 = vadd.f32 0.0, %v3428
  %v3430 = vpop.f32.mrf.mxu0
  %3431 = vmatprep.mubr.f32.mxu0 0.0
  %3432 = vmatmul.mubr.f32.gmra.mxu0 %v3289
  %v3433 = vpop.f32.mrf.mxu0
  %v3434 = vadd.f32 0.0, %v3433
  %v3435 = vpop.f32.mrf.mxu0
  %3436 = vmatprep.mubr.f32.mxu0 0.0
  %3437 = vmatmul.mubr.f32.gmra.mxu0 %v3290
  %v3438 = vpop.f32.mrf.mxu0
  %v3439 = vadd.f32 0.0, %v3438
  %v3440 = vpop.f32.mrf.mxu0
  %3441 = vmatprep.mubr.f32.mxu0 0.0
  %3442 = vmatmul.mubr.f32.gmra.mxu0 %v3291
  %v3443 = vpop.f32.mrf.mxu0
  %v3444 = vadd.f32 0.0, %v3443
  %v3445 = vpop.f32.mrf.mxu0
  %3446 = vmatprep.mubr.f32.mxu0 0.0
  %3447 = vmatmul.mubr.f32.gmra.mxu0 %v3292
  %v3448 = vpop.f32.mrf.mxu0
  %v3449 = vadd.f32 0.0, %v3448
  %v3450 = vpop.f32.mrf.mxu0
  %3451 = vmatprep.mubr.f32.mxu0 0.0
  %3452 = vmatmul.mubr.f32.gmra.mxu0 %v3293
  %v3453 = vpop.f32.mrf.mxu0
  %v3454 = vadd.f32 0.0, %v3453
  %v3455 = vpop.f32.mrf.mxu0
  %3456 = vmatprep.mubr.f32.mxu0 0.0
  %3457 = vmatmul.mubr.f32.gmra.mxu0 %v3294
  %v3458 = vpop.f32.mrf.mxu0
  %v3459 = vadd.f32 0.0, %v3458
  %v3460 = vpop.f32.mrf.mxu0
  %3461 = vdwg.mxu0
  %v3462 = vadd.f32 %v3261, %v3379
  %v3463 = vadd.f32 %v3262, %v3384
  %v3464 = vadd.f32 %v3263, %v3389
  %v3465 = vadd.f32 %v3264, %v3394
  %v3466 = vadd.f32 %v3265, %v3399
  %v3467 = vadd.f32 %v3266, %v3404
  %v3468 = vadd.f32 %v3267, %v3409
  %v3469 = vadd.f32 %v3268, %v3414
  %v3470 = vadd.f32 %v3269, %v3419
  %v3471 = vadd.f32 %v3270, %v3424
  %v3472 = vadd.f32 %v3271, %v3429
  %v3473 = vadd.f32 %v3272, %v3434
  %v3474 = vadd.f32 %v3273, %v3439
  %v3475 = vadd.f32 %v3274, %v3444
  %v3476 = vadd.f32 %v3275, %v3449
  %v3477 = vadd.f32 %v3276, %v3454
  %v3478 = vadd.f32 %v3277, %v3459
  %v3479 = vld [vmem:[%s4] sm:$0x1]
  %v3481 = vlaneseq
  %v3482 = vshrl.u32 %v3481, 7
  %v3483 = vsub.s32 0, %v3482
  %v3484 = vrot.slane %v3479, %v3483
  %v3486 = vadd.f32 %v3462, %v3484
  %v3487 = vadd.f32 %v3463, %v3484
  %v3488 = vadd.f32 %v3464, %v3484
  %v3489 = vadd.f32 %v3465, %v3484
  %v3490 = vadd.f32 %v3466, %v3484
  %v3491 = vadd.f32 %v3467, %v3484
  %v3492 = vadd.f32 %v3468, %v3484
  %v3493 = vadd.f32 %v3469, %v3484
  %v3494 = vadd.f32 %v3470, %v3484
  %v3495 = vadd.f32 %v3471, %v3484
  %v3496 = vadd.f32 %v3472, %v3484
  %v3497 = vadd.f32 %v3473, %v3484
  %v3498 = vadd.f32 %v3474, %v3484
  %v3499 = vadd.f32 %v3475, %v3484
  %v3500 = vadd.f32 %v3476, %v3484
  %v3501 = vadd.f32 %v3477, %v3484
  %v3502 = vadd.f32 %v3478, %v3484
  %3503 = vst [vmem:[#allocation3] sm:$0xff] %v3486
  %3504 = vst [vmem:[#allocation3 + $0x8] sm:$0xff] %v3487
  %3505 = vst [vmem:[#allocation3 + $0x10] sm:$0xff] %v3488
  %3506 = vst [vmem:[#allocation3 + $0x18] sm:$0xff] %v3489
  %3507 = vst [vmem:[#allocation3 + $0x20] sm:$0xff] %v3490
  %3508 = vst [vmem:[#allocation3 + $0x28] sm:$0xff] %v3491
  %3509 = vst [vmem:[#allocation3 + $0x30] sm:$0xff] %v3492
  %3510 = vst [vmem:[#allocation3 + $0x38] sm:$0xff] %v3493
  %3511 = vst [vmem:[#allocation3 + $0x40] sm:$0xff] %v3494
  %3512 = vst [vmem:[#allocation3 + $0x48] sm:$0xff] %v3495
  %3513 = vst [vmem:[#allocation3 + $0x50] sm:$0xff] %v3496
  %3514 = vst [vmem:[#allocation3 + $0x58] sm:$0xff] %v3497
  %3515 = vst [vmem:[#allocation3 + $0x60] sm:$0xff] %v3498
  %3516 = vst [vmem:[#allocation3 + $0x68] sm:$0xff] %v3499
  %3517 = vst [vmem:[#allocation3 + $0x70] sm:$0xff] %v3500
  %3518 = vst [vmem:[#allocation3 + $0x78] sm:$0xff] %v3501
  %3519 = vst [vmem:[#allocation3 + $0x80] sm:$0xf] %v3502
  %v3520 = vld [vmem:[#allocation3] sm:$0xff]
  %v3521 = vld [vmem:[#allocation3 + $0x8] sm:$0xff]
  %v3522 = vld [vmem:[#allocation3 + $0x10] sm:$0xff]
  %v3523 = vld [vmem:[#allocation3 + $0x18] sm:$0xff]
  %v3524 = vld [vmem:[#allocation3 + $0x20] sm:$0xff]
  %v3525 = vld [vmem:[#allocation3 + $0x28] sm:$0xff]
  %v3526 = vld [vmem:[#allocation3 + $0x30] sm:$0xff]
  %v3527 = vld [vmem:[#allocation3 + $0x38] sm:$0xff]
  %v3528 = vld [vmem:[#allocation3 + $0x40] sm:$0xff]
  %v3529 = vld [vmem:[#allocation3 + $0x48] sm:$0xff]
  %v3530 = vld [vmem:[#allocation3 + $0x50] sm:$0xff]
  %v3531 = vld [vmem:[#allocation3 + $0x58] sm:$0xff]
  %v3532 = vld [vmem:[#allocation3 + $0x60] sm:$0xff]
  %v3533 = vld [vmem:[#allocation3 + $0x68] sm:$0xff]
  %v3534 = vld [vmem:[#allocation3 + $0x70] sm:$0xff]
  %v3535 = vld [vmem:[#allocation3 + $0x78] sm:$0x3]
  %v3536 = vld [vmem:[%s5] sm:$0xff]
  %v3537 = vld [vmem:[%s5 + $0x8] sm:$0xff]
  %v3538 = vld [vmem:[%s5 + $0x10] sm:$0xff]
  %v3539 = vld [vmem:[%s5 + $0x18] sm:$0xff]
  %v3540 = vld [vmem:[%s5 + $0x20] sm:$0xff]
  %v3541 = vld [vmem:[%s5 + $0x28] sm:$0xff]
  %v3542 = vld [vmem:[%s5 + $0x30] sm:$0xff]
  %v3543 = vld [vmem:[%s5 + $0x38] sm:$0xff]
  %v3544 = vld [vmem:[%s5 + $0x40] sm:$0xff]
  %v3545 = vld [vmem:[%s5 + $0x48] sm:$0xff]
  %v3546 = vld [vmem:[%s5 + $0x50] sm:$0xff]
  %v3547 = vld [vmem:[%s5 + $0x58] sm:$0xff]
  %v3548 = vld [vmem:[%s5 + $0x60] sm:$0xff]
  %v3549 = vld [vmem:[%s5 + $0x68] sm:$0xff]
  %v3550 = vld [vmem:[%s5 + $0x70] sm:$0xff]
  %v3551 = vld [vmem:[%s5 + $0x78] sm:$0xff]
  %v3552 = vld [vmem:[#allocation3 + $0x1] sm:$0xff]
  %v3553 = vld [vmem:[#allocation3 + $0x9] sm:$0xff]
  %v3554 = vld [vmem:[#allocation3 + $0x11] sm:$0xff]
  %v3555 = vld [vmem:[#allocation3 + $0x19] sm:$0xff]
  %v3556 = vld [vmem:[#allocation3 + $0x21] sm:$0xff]
  %v3557 = vld [vmem:[#allocation3 + $0x29] sm:$0xff]
  %v3558 = vld [vmem:[#allocation3 + $0x31] sm:$0xff]
  %v3559 = vld [vmem:[#allocation3 + $0x39] sm:$0xff]
  %v3560 = vld [vmem:[#allocation3 + $0x41] sm:$0xff]
  %v3561 = vld [vmem:[#allocation3 + $0x49] sm:$0xff]
  %v3562 = vld [vmem:[#allocation3 + $0x51] sm:$0xff]
  %v3563 = vld [vmem:[#allocation3 + $0x59] sm:$0xff]
  %v3564 = vld [vmem:[#allocation3 + $0x61] sm:$0xff]
  %v3565 = vld [vmem:[#allocation3 + $0x69] sm:$0xff]
  %v3566 = vld [vmem:[#allocation3 + $0x71] sm:$0xff]
  %v3567 = vld [vmem:[#allocation3 + $0x79] sm:$0x3]
  %s3568 = scalar_lea.vmem %s5, 128
  %v3569 = vld [vmem:[%s3568] sm:$0xff]
  %v3570 = vld [vmem:[%s3568 + $0x8] sm:$0xff]
  %v3571 = vld [vmem:[%s3568 + $0x10] sm:$0xff]
  %v3572 = vld [vmem:[%s3568 + $0x18] sm:$0xff]
  %v3573 = vld [vmem:[%s3568 + $0x20] sm:$0xff]
  %v3574 = vld [vmem:[%s3568 + $0x28] sm:$0xff]
  %v3575 = vld [vmem:[%s3568 + $0x30] sm:$0xff]
  %v3576 = vld [vmem:[%s3568 + $0x38] sm:$0xff]
  %v3577 = vld [vmem:[%s3568 + $0x40] sm:$0xff]
  %v3578 = vld [vmem:[%s3568 + $0x48] sm:$0xff]
  %v3579 = vld [vmem:[%s3568 + $0x50] sm:$0xff]
  %v3580 = vld [vmem:[%s3568 + $0x58] sm:$0xff]
  %v3581 = vld [vmem:[%s3568 + $0x60] sm:$0xff]
  %v3582 = vld [vmem:[%s3568 + $0x68] sm:$0xff]
  %v3583 = vld [vmem:[%s3568 + $0x70] sm:$0xff]
  %v3584 = vld [vmem:[%s3568 + $0x78] sm:$0xff]
  %3585 = vmatprep.subr.mxu0 0.0
  %3586 = vmatpush1.msra.mxu0 %v3584
  %3587 = vmatprep.subr.mxu0 0.0
  %3588 = vmatpush1.msra.mxu0 %v3583
  %3589 = vmatprep.subr.mxu0 0.0
  %3590 = vmatpush1.msra.mxu0 %v3582
  %3591 = vmatprep.subr.mxu0 0.0
  %3592 = vmatpush1.msra.mxu0 %v3581
  %3593 = vmatprep.subr.mxu0 0.0
  %3594 = vmatpush1.msra.mxu0 %v3580
  %3595 = vmatprep.subr.mxu0 0.0
  %3596 = vmatpush1.msra.mxu0 %v3579
  %3597 = vmatprep.subr.mxu0 0.0
  %3598 = vmatpush1.msra.mxu0 %v3578
  %3599 = vmatprep.subr.mxu0 0.0
  %3600 = vmatpush1.msra.mxu0 %v3577
  %3601 = vmatprep.subr.mxu0 0.0
  %3602 = vmatpush1.msra.mxu0 %v3576
  %3603 = vmatprep.subr.mxu0 0.0
  %3604 = vmatpush1.msra.mxu0 %v3575
  %3605 = vmatprep.subr.mxu0 0.0
  %3606 = vmatpush1.msra.mxu0 %v3574
  %3607 = vmatprep.subr.mxu0 0.0
  %3608 = vmatpush1.msra.mxu0 %v3573
  %3609 = vmatprep.subr.mxu0 0.0
  %3610 = vmatpush1.msra.mxu0 %v3572
  %3611 = vmatprep.subr.mxu0 0.0
  %3612 = vmatpush1.msra.mxu0 %v3571
  %3613 = vmatprep.subr.mxu0 0.0
  %3614 = vmatpush1.msra.mxu0 %v3570
  %3615 = vmatprep.subr.mxu0 0.0
  %3616 = vmatpush1.msra.mxu0 %v3569
  %3617 = vmatprep.subr.mxu0 0.0
  %3618 = vmatpush2.msra.mxu0 0.0
  %3619 = vmatprep.subr.mxu0 0.0
  %3620 = vmatpush2.msra.mxu0 0.0
  %3621 = vmatprep.subr.mxu0 0.0
  %3622 = vmatpush2.msra.mxu0 0.0
  %3623 = vmatprep.subr.mxu0 0.0
  %3624 = vmatpush2.msra.mxu0 0.0
  %3625 = vmatprep.subr.mxu0 0.0
  %3626 = vmatpush2.msra.mxu0 0.0
  %3627 = vmatprep.subr.mxu0 0.0
  %3628 = vmatpush2.msra.mxu0 0.0
  %3629 = vmatprep.subr.mxu0 0.0
  %3630 = vmatpush2.msra.mxu0 0.0
  %3631 = vmatprep.subr.mxu0 0.0
  %3632 = vmatpush2.msra.mxu0 0.0
  %3633 = vmatprep.subr.mxu0 0.0
  %3634 = vmatpush2.msra.mxu0 0.0
  %3635 = vmatprep.subr.mxu0 0.0
  %3636 = vmatpush2.msra.mxu0 0.0
  %3637 = vmatprep.subr.mxu0 0.0
  %3638 = vmatpush2.msra.mxu0 0.0
  %3639 = vmatprep.subr.mxu0 0.0
  %3640 = vmatpush2.msra.mxu0 0.0
  %3641 = vmatprep.subr.mxu0 0.0
  %3642 = vmatpush2.msra.mxu0 0.0
  %3643 = vmatprep.subr.mxu0 0.0
  %3644 = vmatpush2.msra.mxu0 0.0
  %3645 = vmatprep.subr.mxu0 0.0
  %3646 = vmatpush2.msra.mxu0 0.0
  %3647 = vmatprep.subr.mxu0 0.0
  %3648 = vmatpush2.msra.mxu0 0.0
  %3649 = vmatprep.mubr.f32.mxu0 0.0
  %3650 = vmatmul.mubr.f32.gmra.mxu0 %v3552
  %v3651 = vpop.f32.mrf.mxu0
  %v3652 = vadd.f32 0.0, %v3651
  %v3653 = vpop.f32.mrf.mxu0
  %3654 = vmatprep.mubr.f32.mxu0 0.0
  %3655 = vmatmul.mubr.f32.gmra.mxu0 %v3553
  %v3656 = vpop.f32.mrf.mxu0
  %v3657 = vadd.f32 0.0, %v3656
  %v3658 = vpop.f32.mrf.mxu0
  %3659 = vmatprep.mubr.f32.mxu0 0.0
  %3660 = vmatmul.mubr.f32.gmra.mxu0 %v3554
  %v3661 = vpop.f32.mrf.mxu0
  %v3662 = vadd.f32 0.0, %v3661
  %v3663 = vpop.f32.mrf.mxu0
  %3664 = vmatprep.mubr.f32.mxu0 0.0
  %3665 = vmatmul.mubr.f32.gmra.mxu0 %v3555
  %v3666 = vpop.f32.mrf.mxu0
  %v3667 = vadd.f32 0.0, %v3666
  %v3668 = vpop.f32.mrf.mxu0
  %3669 = vmatprep.mubr.f32.mxu0 0.0
  %3670 = vmatmul.mubr.f32.gmra.mxu0 %v3556
  %v3671 = vpop.f32.mrf.mxu0
  %v3672 = vadd.f32 0.0, %v3671
  %v3673 = vpop.f32.mrf.mxu0
  %3674 = vmatprep.mubr.f32.mxu0 0.0
  %3675 = vmatmul.mubr.f32.gmra.mxu0 %v3557
  %v3676 = vpop.f32.mrf.mxu0
  %v3677 = vadd.f32 0.0, %v3676
  %v3678 = vpop.f32.mrf.mxu0
  %3679 = vmatprep.mubr.f32.mxu0 0.0
  %3680 = vmatmul.mubr.f32.gmra.mxu0 %v3558
  %v3681 = vpop.f32.mrf.mxu0
  %v3682 = vadd.f32 0.0, %v3681
  %v3683 = vpop.f32.mrf.mxu0
  %3684 = vmatprep.mubr.f32.mxu0 0.0
  %3685 = vmatmul.mubr.f32.gmra.mxu0 %v3559
  %v3686 = vpop.f32.mrf.mxu0
  %v3687 = vadd.f32 0.0, %v3686
  %v3688 = vpop.f32.mrf.mxu0
  %3689 = vmatprep.mubr.f32.mxu0 0.0
  %3690 = vmatmul.mubr.f32.gmra.mxu0 %v3560
  %v3691 = vpop.f32.mrf.mxu0
  %v3692 = vadd.f32 0.0, %v3691
  %v3693 = vpop.f32.mrf.mxu0
  %3694 = vmatprep.mubr.f32.mxu0 0.0
  %3695 = vmatmul.mubr.f32.gmra.mxu0 %v3561
  %v3696 = vpop.f32.mrf.mxu0
  %v3697 = vadd.f32 0.0, %v3696
  %v3698 = vpop.f32.mrf.mxu0
  %3699 = vmatprep.mubr.f32.mxu0 0.0
  %3700 = vmatmul.mubr.f32.gmra.mxu0 %v3562
  %v3701 = vpop.f32.mrf.mxu0
  %v3702 = vadd.f32 0.0, %v3701
  %v3703 = vpop.f32.mrf.mxu0
  %3704 = vmatprep.mubr.f32.mxu0 0.0
  %3705 = vmatmul.mubr.f32.gmra.mxu0 %v3563
  %v3706 = vpop.f32.mrf.mxu0
  %v3707 = vadd.f32 0.0, %v3706
  %v3708 = vpop.f32.mrf.mxu0
  %3709 = vmatprep.mubr.f32.mxu0 0.0
  %3710 = vmatmul.mubr.f32.gmra.mxu0 %v3564
  %v3711 = vpop.f32.mrf.mxu0
  %v3712 = vadd.f32 0.0, %v3711
  %v3713 = vpop.f32.mrf.mxu0
  %3714 = vmatprep.mubr.f32.mxu0 0.0
  %3715 = vmatmul.mubr.f32.gmra.mxu0 %v3565
  %v3716 = vpop.f32.mrf.mxu0
  %v3717 = vadd.f32 0.0, %v3716
  %v3718 = vpop.f32.mrf.mxu0
  %3719 = vmatprep.mubr.f32.mxu0 0.0
  %3720 = vmatmul.mubr.f32.gmra.mxu0 %v3566
  %v3721 = vpop.f32.mrf.mxu0
  %v3722 = vadd.f32 0.0, %v3721
  %v3723 = vpop.f32.mrf.mxu0
  %3724 = vmatprep.mubr.f32.mxu0 0.0
  %3725 = vmatmul.mubr.f32.gmra.mxu0 %v3567
  %v3726 = vpop.f32.mrf.mxu0
  %v3727 = vadd.f32 0.0, %v3726
  %v3728 = vpop.f32.mrf.mxu0
  %3729 = vdwg.mxu0
  %3730 = vmatprep.subr.mxu0 0.0
  %3731 = vmatpush1.msra.mxu0 %v3551
  %3732 = vmatprep.subr.mxu0 0.0
  %3733 = vmatpush1.msra.mxu0 %v3550
  %3734 = vmatprep.subr.mxu0 0.0
  %3735 = vmatpush1.msra.mxu0 %v3549
  %3736 = vmatprep.subr.mxu0 0.0
  %3737 = vmatpush1.msra.mxu0 %v3548
  %3738 = vmatprep.subr.mxu0 0.0
  %3739 = vmatpush1.msra.mxu0 %v3547
  %3740 = vmatprep.subr.mxu0 0.0
  %3741 = vmatpush1.msra.mxu0 %v3546
  %3742 = vmatprep.subr.mxu0 0.0
  %3743 = vmatpush1.msra.mxu0 %v3545
  %3744 = vmatprep.subr.mxu0 0.0
  %3745 = vmatpush1.msra.mxu0 %v3544
  %3746 = vmatprep.subr.mxu0 0.0
  %3747 = vmatpush1.msra.mxu0 %v3543
  %3748 = vmatprep.subr.mxu0 0.0
  %3749 = vmatpush1.msra.mxu0 %v3542
  %3750 = vmatprep.subr.mxu0 0.0
  %3751 = vmatpush1.msra.mxu0 %v3541
  %3752 = vmatprep.subr.mxu0 0.0
  %3753 = vmatpush1.msra.mxu0 %v3540
  %3754 = vmatprep.subr.mxu0 0.0
  %3755 = vmatpush1.msra.mxu0 %v3539
  %3756 = vmatprep.subr.mxu0 0.0
  %3757 = vmatpush1.msra.mxu0 %v3538
  %3758 = vmatprep.subr.mxu0 0.0
  %3759 = vmatpush1.msra.mxu0 %v3537
  %3760 = vmatprep.subr.mxu0 0.0
  %3761 = vmatpush1.msra.mxu0 %v3536
  %3762 = vmatprep.subr.mxu0 0.0
  %3763 = vmatpush2.msra.mxu0 0.0
  %3764 = vmatprep.subr.mxu0 0.0
  %3765 = vmatpush2.msra.mxu0 0.0
  %3766 = vmatprep.subr.mxu0 0.0
  %3767 = vmatpush2.msra.mxu0 0.0
  %3768 = vmatprep.subr.mxu0 0.0
  %3769 = vmatpush2.msra.mxu0 0.0
  %3770 = vmatprep.subr.mxu0 0.0
  %3771 = vmatpush2.msra.mxu0 0.0
  %3772 = vmatprep.subr.mxu0 0.0
  %3773 = vmatpush2.msra.mxu0 0.0
  %3774 = vmatprep.subr.mxu0 0.0
  %3775 = vmatpush2.msra.mxu0 0.0
  %3776 = vmatprep.subr.mxu0 0.0
  %3777 = vmatpush2.msra.mxu0 0.0
  %3778 = vmatprep.subr.mxu0 0.0
  %3779 = vmatpush2.msra.mxu0 0.0
  %3780 = vmatprep.subr.mxu0 0.0
  %3781 = vmatpush2.msra.mxu0 0.0
  %3782 = vmatprep.subr.mxu0 0.0
  %3783 = vmatpush2.msra.mxu0 0.0
  %3784 = vmatprep.subr.mxu0 0.0
  %3785 = vmatpush2.msra.mxu0 0.0
  %3786 = vmatprep.subr.mxu0 0.0
  %3787 = vmatpush2.msra.mxu0 0.0
  %3788 = vmatprep.subr.mxu0 0.0
  %3789 = vmatpush2.msra.mxu0 0.0
  %3790 = vmatprep.subr.mxu0 0.0
  %3791 = vmatpush2.msra.mxu0 0.0
  %3792 = vmatprep.subr.mxu0 0.0
  %3793 = vmatpush2.msra.mxu0 0.0
  %3794 = vmatprep.mubr.f32.mxu0 0.0
  %3795 = vmatmul.mubr.f32.gmra.mxu0 %v3520
  %v3796 = vpop.f32.mrf.mxu0
  %v3797 = vadd.f32 %v3652, %v3796
  %v3798 = vpop.f32.mrf.mxu0
  %3799 = vmatprep.mubr.f32.mxu0 0.0
  %3800 = vmatmul.mubr.f32.gmra.mxu0 %v3521
  %v3801 = vpop.f32.mrf.mxu0
  %v3802 = vadd.f32 %v3657, %v3801
  %v3803 = vpop.f32.mrf.mxu0
  %3804 = vmatprep.mubr.f32.mxu0 0.0
  %3805 = vmatmul.mubr.f32.gmra.mxu0 %v3522
  %v3806 = vpop.f32.mrf.mxu0
  %v3807 = vadd.f32 %v3662, %v3806
  %v3808 = vpop.f32.mrf.mxu0
  %3809 = vmatprep.mubr.f32.mxu0 0.0
  %3810 = vmatmul.mubr.f32.gmra.mxu0 %v3523
  %v3811 = vpop.f32.mrf.mxu0
  %v3812 = vadd.f32 %v3667, %v3811
  %v3813 = vpop.f32.mrf.mxu0
  %3814 = vmatprep.mubr.f32.mxu0 0.0
  %3815 = vmatmul.mubr.f32.gmra.mxu0 %v3524
  %v3816 = vpop.f32.mrf.mxu0
  %v3817 = vadd.f32 %v3672, %v3816
  %v3818 = vpop.f32.mrf.mxu0
  %3819 = vmatprep.mubr.f32.mxu0 0.0
  %3820 = vmatmul.mubr.f32.gmra.mxu0 %v3525
  %v3821 = vpop.f32.mrf.mxu0
  %v3822 = vadd.f32 %v3677, %v3821
  %v3823 = vpop.f32.mrf.mxu0
  %3824 = vmatprep.mubr.f32.mxu0 0.0
  %3825 = vmatmul.mubr.f32.gmra.mxu0 %v3526
  %v3826 = vpop.f32.mrf.mxu0
  %v3827 = vadd.f32 %v3682, %v3826
  %v3828 = vpop.f32.mrf.mxu0
  %3829 = vmatprep.mubr.f32.mxu0 0.0
  %3830 = vmatmul.mubr.f32.gmra.mxu0 %v3527
  %v3831 = vpop.f32.mrf.mxu0
  %v3832 = vadd.f32 %v3687, %v3831
  %v3833 = vpop.f32.mrf.mxu0
  %3834 = vmatprep.mubr.f32.mxu0 0.0
  %3835 = vmatmul.mubr.f32.gmra.mxu0 %v3528
  %v3836 = vpop.f32.mrf.mxu0
  %v3837 = vadd.f32 %v3692, %v3836
  %v3838 = vpop.f32.mrf.mxu0
  %3839 = vmatprep.mubr.f32.mxu0 0.0
  %3840 = vmatmul.mubr.f32.gmra.mxu0 %v3529
  %v3841 = vpop.f32.mrf.mxu0
  %v3842 = vadd.f32 %v3697, %v3841
  %v3843 = vpop.f32.mrf.mxu0
  %3844 = vmatprep.mubr.f32.mxu0 0.0
  %3845 = vmatmul.mubr.f32.gmra.mxu0 %v3530
  %v3846 = vpop.f32.mrf.mxu0
  %v3847 = vadd.f32 %v3702, %v3846
  %v3848 = vpop.f32.mrf.mxu0
  %3849 = vmatprep.mubr.f32.mxu0 0.0
  %3850 = vmatmul.mubr.f32.gmra.mxu0 %v3531
  %v3851 = vpop.f32.mrf.mxu0
  %v3852 = vadd.f32 %v3707, %v3851
  %v3853 = vpop.f32.mrf.mxu0
  %3854 = vmatprep.mubr.f32.mxu0 0.0
  %3855 = vmatmul.mubr.f32.gmra.mxu0 %v3532
  %v3856 = vpop.f32.mrf.mxu0
  %v3857 = vadd.f32 %v3712, %v3856
  %v3858 = vpop.f32.mrf.mxu0
  %3859 = vmatprep.mubr.f32.mxu0 0.0
  %3860 = vmatmul.mubr.f32.gmra.mxu0 %v3533
  %v3861 = vpop.f32.mrf.mxu0
  %v3862 = vadd.f32 %v3717, %v3861
  %v3863 = vpop.f32.mrf.mxu0
  %3864 = vmatprep.mubr.f32.mxu0 0.0
  %3865 = vmatmul.mubr.f32.gmra.mxu0 %v3534
  %v3866 = vpop.f32.mrf.mxu0
  %v3867 = vadd.f32 %v3722, %v3866
  %v3868 = vpop.f32.mrf.mxu0
  %3869 = vmatprep.mubr.f32.mxu0 0.0
  %3870 = vmatmul.mubr.f32.gmra.mxu0 %v3535
  %v3871 = vpop.f32.mrf.mxu0
  %v3872 = vadd.f32 %v3727, %v3871
  %v3873 = vpop.f32.mrf.mxu0
  %3874 = vdwg.mxu0
  %v3875 = vld [vmem:[#allocation3 + $0x9] sm:$0xff]
  %v3876 = vld [vmem:[#allocation3 + $0x11] sm:$0xff]
  %v3877 = vld [vmem:[#allocation3 + $0x19] sm:$0xff]
  %v3878 = vld [vmem:[#allocation3 + $0x21] sm:$0xff]
  %v3879 = vld [vmem:[#allocation3 + $0x29] sm:$0xff]
  %v3880 = vld [vmem:[#allocation3 + $0x31] sm:$0xff]
  %v3881 = vld [vmem:[#allocation3 + $0x39] sm:$0xff]
  %v3882 = vld [vmem:[#allocation3 + $0x41] sm:$0xff]
  %v3883 = vld [vmem:[#allocation3 + $0x49] sm:$0xff]
  %v3884 = vld [vmem:[#allocation3 + $0x51] sm:$0xff]
  %v3885 = vld [vmem:[#allocation3 + $0x59] sm:$0xff]
  %v3886 = vld [vmem:[#allocation3 + $0x61] sm:$0xff]
  %v3887 = vld [vmem:[#allocation3 + $0x69] sm:$0xff]
  %v3888 = vld [vmem:[#allocation3 + $0x71] sm:$0xff]
  %v3889 = vld [vmem:[#allocation3 + $0x79] sm:$0xff]
  %v3890 = vld [vmem:[#allocation3 + $0x81] sm:$0x3]
  %s3891 = scalar_lea.vmem %s5, 256
  %v3892 = vld [vmem:[%s3891] sm:$0xff]
  %v3893 = vld [vmem:[%s3891 + $0x8] sm:$0xff]
  %v3894 = vld [vmem:[%s3891 + $0x10] sm:$0xff]
  %v3895 = vld [vmem:[%s3891 + $0x18] sm:$0xff]
  %v3896 = vld [vmem:[%s3891 + $0x20] sm:$0xff]
  %v3897 = vld [vmem:[%s3891 + $0x28] sm:$0xff]
  %v3898 = vld [vmem:[%s3891 + $0x30] sm:$0xff]
  %v3899 = vld [vmem:[%s3891 + $0x38] sm:$0xff]
  %v3900 = vld [vmem:[%s3891 + $0x40] sm:$0xff]
  %v3901 = vld [vmem:[%s3891 + $0x48] sm:$0xff]
  %v3902 = vld [vmem:[%s3891 + $0x50] sm:$0xff]
  %v3903 = vld [vmem:[%s3891 + $0x58] sm:$0xff]
  %v3904 = vld [vmem:[%s3891 + $0x60] sm:$0xff]
  %v3905 = vld [vmem:[%s3891 + $0x68] sm:$0xff]
  %v3906 = vld [vmem:[%s3891 + $0x70] sm:$0xff]
  %v3907 = vld [vmem:[%s3891 + $0x78] sm:$0xff]
  %3908 = vmatprep.subr.mxu0 0.0
  %3909 = vmatpush1.msra.mxu0 %v3907
  %3910 = vmatprep.subr.mxu0 0.0
  %3911 = vmatpush1.msra.mxu0 %v3906
  %3912 = vmatprep.subr.mxu0 0.0
  %3913 = vmatpush1.msra.mxu0 %v3905
  %3914 = vmatprep.subr.mxu0 0.0
  %3915 = vmatpush1.msra.mxu0 %v3904
  %3916 = vmatprep.subr.mxu0 0.0
  %3917 = vmatpush1.msra.mxu0 %v3903
  %3918 = vmatprep.subr.mxu0 0.0
  %3919 = vmatpush1.msra.mxu0 %v3902
  %3920 = vmatprep.subr.mxu0 0.0
  %3921 = vmatpush1.msra.mxu0 %v3901
  %3922 = vmatprep.subr.mxu0 0.0
  %3923 = vmatpush1.msra.mxu0 %v3900
  %3924 = vmatprep.subr.mxu0 0.0
  %3925 = vmatpush1.msra.mxu0 %v3899
  %3926 = vmatprep.subr.mxu0 0.0
  %3927 = vmatpush1.msra.mxu0 %v3898
  %3928 = vmatprep.subr.mxu0 0.0
  %3929 = vmatpush1.msra.mxu0 %v3897
  %3930 = vmatprep.subr.mxu0 0.0
  %3931 = vmatpush1.msra.mxu0 %v3896
  %3932 = vmatprep.subr.mxu0 0.0
  %3933 = vmatpush1.msra.mxu0 %v3895
  %3934 = vmatprep.subr.mxu0 0.0
  %3935 = vmatpush1.msra.mxu0 %v3894
  %3936 = vmatprep.subr.mxu0 0.0
  %3937 = vmatpush1.msra.mxu0 %v3893
  %3938 = vmatprep.subr.mxu0 0.0
  %3939 = vmatpush1.msra.mxu0 %v3892
  %3940 = vmatprep.subr.mxu0 0.0
  %3941 = vmatpush2.msra.mxu0 0.0
  %3942 = vmatprep.subr.mxu0 0.0
  %3943 = vmatpush2.msra.mxu0 0.0
  %3944 = vmatprep.subr.mxu0 0.0
  %3945 = vmatpush2.msra.mxu0 0.0
  %3946 = vmatprep.subr.mxu0 0.0
  %3947 = vmatpush2.msra.mxu0 0.0
  %3948 = vmatprep.subr.mxu0 0.0
  %3949 = vmatpush2.msra.mxu0 0.0
  %3950 = vmatprep.subr.mxu0 0.0
  %3951 = vmatpush2.msra.mxu0 0.0
  %3952 = vmatprep.subr.mxu0 0.0
  %3953 = vmatpush2.msra.mxu0 0.0
  %3954 = vmatprep.subr.mxu0 0.0
  %3955 = vmatpush2.msra.mxu0 0.0
  %3956 = vmatprep.subr.mxu0 0.0
  %3957 = vmatpush2.msra.mxu0 0.0
  %3958 = vmatprep.subr.mxu0 0.0
  %3959 = vmatpush2.msra.mxu0 0.0
  %3960 = vmatprep.subr.mxu0 0.0
  %3961 = vmatpush2.msra.mxu0 0.0
  %3962 = vmatprep.subr.mxu0 0.0
  %3963 = vmatpush2.msra.mxu0 0.0
  %3964 = vmatprep.subr.mxu0 0.0
  %3965 = vmatpush2.msra.mxu0 0.0
  %3966 = vmatprep.subr.mxu0 0.0
  %3967 = vmatpush2.msra.mxu0 0.0
  %3968 = vmatprep.subr.mxu0 0.0
  %3969 = vmatpush2.msra.mxu0 0.0
  %3970 = vmatprep.subr.mxu0 0.0
  %3971 = vmatpush2.msra.mxu0 0.0
  %3972 = vmatprep.mubr.f32.mxu0 0.0
  %3973 = vmatmul.mubr.f32.gmra.mxu0 %v3875
  %v3974 = vpop.f32.mrf.mxu0
  %v3975 = vadd.f32 0.0, %v3974
  %v3976 = vpop.f32.mrf.mxu0
  %3977 = vmatprep.mubr.f32.mxu0 0.0
  %3978 = vmatmul.mubr.f32.gmra.mxu0 %v3876
  %v3979 = vpop.f32.mrf.mxu0
  %v3980 = vadd.f32 0.0, %v3979
  %v3981 = vpop.f32.mrf.mxu0
  %3982 = vmatprep.mubr.f32.mxu0 0.0
  %3983 = vmatmul.mubr.f32.gmra.mxu0 %v3877
  %v3984 = vpop.f32.mrf.mxu0
  %v3985 = vadd.f32 0.0, %v3984
  %v3986 = vpop.f32.mrf.mxu0
  %3987 = vmatprep.mubr.f32.mxu0 0.0
  %3988 = vmatmul.mubr.f32.gmra.mxu0 %v3878
  %v3989 = vpop.f32.mrf.mxu0
  %v3990 = vadd.f32 0.0, %v3989
  %v3991 = vpop.f32.mrf.mxu0
  %3992 = vmatprep.mubr.f32.mxu0 0.0
  %3993 = vmatmul.mubr.f32.gmra.mxu0 %v3879
  %v3994 = vpop.f32.mrf.mxu0
  %v3995 = vadd.f32 0.0, %v3994
  %v3996 = vpop.f32.mrf.mxu0
  %3997 = vmatprep.mubr.f32.mxu0 0.0
  %3998 = vmatmul.mubr.f32.gmra.mxu0 %v3880
  %v3999 = vpop.f32.mrf.mxu0
  %v4000 = vadd.f32 0.0, %v3999
  %v4001 = vpop.f32.mrf.mxu0
  %4002 = vmatprep.mubr.f32.mxu0 0.0
  %4003 = vmatmul.mubr.f32.gmra.mxu0 %v3881
  %v4004 = vpop.f32.mrf.mxu0
  %v4005 = vadd.f32 0.0, %v4004
  %v4006 = vpop.f32.mrf.mxu0
  %4007 = vmatprep.mubr.f32.mxu0 0.0
  %4008 = vmatmul.mubr.f32.gmra.mxu0 %v3882
  %v4009 = vpop.f32.mrf.mxu0
  %v4010 = vadd.f32 0.0, %v4009
  %v4011 = vpop.f32.mrf.mxu0
  %4012 = vmatprep.mubr.f32.mxu0 0.0
  %4013 = vmatmul.mubr.f32.gmra.mxu0 %v3883
  %v4014 = vpop.f32.mrf.mxu0
  %v4015 = vadd.f32 0.0, %v4014
  %v4016 = vpop.f32.mrf.mxu0
  %4017 = vmatprep.mubr.f32.mxu0 0.0
  %4018 = vmatmul.mubr.f32.gmra.mxu0 %v3884
  %v4019 = vpop.f32.mrf.mxu0
  %v4020 = vadd.f32 0.0, %v4019
  %v4021 = vpop.f32.mrf.mxu0
  %4022 = vmatprep.mubr.f32.mxu0 0.0
  %4023 = vmatmul.mubr.f32.gmra.mxu0 %v3885
  %v4024 = vpop.f32.mrf.mxu0
  %v4025 = vadd.f32 0.0, %v4024
  %v4026 = vpop.f32.mrf.mxu0
  %4027 = vmatprep.mubr.f32.mxu0 0.0
  %4028 = vmatmul.mubr.f32.gmra.mxu0 %v3886
  %v4029 = vpop.f32.mrf.mxu0
  %v4030 = vadd.f32 0.0, %v4029
  %v4031 = vpop.f32.mrf.mxu0
  %4032 = vmatprep.mubr.f32.mxu0 0.0
  %4033 = vmatmul.mubr.f32.gmra.mxu0 %v3887
  %v4034 = vpop.f32.mrf.mxu0
  %v4035 = vadd.f32 0.0, %v4034
  %v4036 = vpop.f32.mrf.mxu0
  %4037 = vmatprep.mubr.f32.mxu0 0.0
  %4038 = vmatmul.mubr.f32.gmra.mxu0 %v3888
  %v4039 = vpop.f32.mrf.mxu0
  %v4040 = vadd.f32 0.0, %v4039
  %v4041 = vpop.f32.mrf.mxu0
  %4042 = vmatprep.mubr.f32.mxu0 0.0
  %4043 = vmatmul.mubr.f32.gmra.mxu0 %v3889
  %v4044 = vpop.f32.mrf.mxu0
  %v4045 = vadd.f32 0.0, %v4044
  %v4046 = vpop.f32.mrf.mxu0
  %4047 = vmatprep.mubr.f32.mxu0 0.0
  %4048 = vmatmul.mubr.f32.gmra.mxu0 %v3890
  %v4049 = vpop.f32.mrf.mxu0
  %v4050 = vadd.f32 0.0, %v4049
  %v4051 = vpop.f32.mrf.mxu0
  %4052 = vdwg.mxu0
  %v4053 = vadd.f32 %v3797, %v3975
  %v4054 = vadd.f32 %v3802, %v3980
  %v4055 = vadd.f32 %v3807, %v3985
  %v4056 = vadd.f32 %v3812, %v3990
  %v4057 = vadd.f32 %v3817, %v3995
  %v4058 = vadd.f32 %v3822, %v4000
  %v4059 = vadd.f32 %v3827, %v4005
  %v4060 = vadd.f32 %v3832, %v4010
  %v4061 = vadd.f32 %v3837, %v4015
  %v4062 = vadd.f32 %v3842, %v4020
  %v4063 = vadd.f32 %v3847, %v4025
  %v4064 = vadd.f32 %v3852, %v4030
  %v4065 = vadd.f32 %v3857, %v4035
  %v4066 = vadd.f32 %v3862, %v4040
  %v4067 = vadd.f32 %v3867, %v4045
  %v4068 = vadd.f32 %v3872, %v4050
  %v4069 = vld [vmem:[#allocation3 + $0xa] sm:$0xff]
  %v4070 = vld [vmem:[#allocation3 + $0x12] sm:$0xff]
  %v4071 = vld [vmem:[#allocation3 + $0x1a] sm:$0xff]
  %v4072 = vld [vmem:[#allocation3 + $0x22] sm:$0xff]
  %v4073 = vld [vmem:[#allocation3 + $0x2a] sm:$0xff]
  %v4074 = vld [vmem:[#allocation3 + $0x32] sm:$0xff]
  %v4075 = vld [vmem:[#allocation3 + $0x3a] sm:$0xff]
  %v4076 = vld [vmem:[#allocation3 + $0x42] sm:$0xff]
  %v4077 = vld [vmem:[#allocation3 + $0x4a] sm:$0xff]
  %v4078 = vld [vmem:[#allocation3 + $0x52] sm:$0xff]
  %v4079 = vld [vmem:[#allocation3 + $0x5a] sm:$0xff]
  %v4080 = vld [vmem:[#allocation3 + $0x62] sm:$0xff]
  %v4081 = vld [vmem:[#allocation3 + $0x6a] sm:$0xff]
  %v4082 = vld [vmem:[#allocation3 + $0x72] sm:$0xff]
  %v4083 = vld [vmem:[#allocation3 + $0x7a] sm:$0xff]
  %v4084 = vld [vmem:[#allocation3 + $0x82] sm:$0x3]
  %s4085 = scalar_lea.vmem %s5, 384
  %v4086 = vld [vmem:[%s4085] sm:$0xff]
  %v4087 = vld [vmem:[%s4085 + $0x8] sm:$0xff]
  %v4088 = vld [vmem:[%s4085 + $0x10] sm:$0xff]
  %v4089 = vld [vmem:[%s4085 + $0x18] sm:$0xff]
  %v4090 = vld [vmem:[%s4085 + $0x20] sm:$0xff]
  %v4091 = vld [vmem:[%s4085 + $0x28] sm:$0xff]
  %v4092 = vld [vmem:[%s4085 + $0x30] sm:$0xff]
  %v4093 = vld [vmem:[%s4085 + $0x38] sm:$0xff]
  %v4094 = vld [vmem:[%s4085 + $0x40] sm:$0xff]
  %v4095 = vld [vmem:[%s4085 + $0x48] sm:$0xff]
  %v4096 = vld [vmem:[%s4085 + $0x50] sm:$0xff]
  %v4097 = vld [vmem:[%s4085 + $0x58] sm:$0xff]
  %v4098 = vld [vmem:[%s4085 + $0x60] sm:$0xff]
  %v4099 = vld [vmem:[%s4085 + $0x68] sm:$0xff]
  %v4100 = vld [vmem:[%s4085 + $0x70] sm:$0xff]
  %v4101 = vld [vmem:[%s4085 + $0x78] sm:$0xff]
  %4102 = vmatprep.subr.mxu0 0.0
  %4103 = vmatpush1.msra.mxu0 %v4101
  %4104 = vmatprep.subr.mxu0 0.0
  %4105 = vmatpush1.msra.mxu0 %v4100
  %4106 = vmatprep.subr.mxu0 0.0
  %4107 = vmatpush1.msra.mxu0 %v4099
  %4108 = vmatprep.subr.mxu0 0.0
  %4109 = vmatpush1.msra.mxu0 %v4098
  %4110 = vmatprep.subr.mxu0 0.0
  %4111 = vmatpush1.msra.mxu0 %v4097
  %4112 = vmatprep.subr.mxu0 0.0
  %4113 = vmatpush1.msra.mxu0 %v4096
  %4114 = vmatprep.subr.mxu0 0.0
  %4115 = vmatpush1.msra.mxu0 %v4095
  %4116 = vmatprep.subr.mxu0 0.0
  %4117 = vmatpush1.msra.mxu0 %v4094
  %4118 = vmatprep.subr.mxu0 0.0
  %4119 = vmatpush1.msra.mxu0 %v4093
  %4120 = vmatprep.subr.mxu0 0.0
  %4121 = vmatpush1.msra.mxu0 %v4092
  %4122 = vmatprep.subr.mxu0 0.0
  %4123 = vmatpush1.msra.mxu0 %v4091
  %4124 = vmatprep.subr.mxu0 0.0
  %4125 = vmatpush1.msra.mxu0 %v4090
  %4126 = vmatprep.subr.mxu0 0.0
  %4127 = vmatpush1.msra.mxu0 %v4089
  %4128 = vmatprep.subr.mxu0 0.0
  %4129 = vmatpush1.msra.mxu0 %v4088
  %4130 = vmatprep.subr.mxu0 0.0
  %4131 = vmatpush1.msra.mxu0 %v4087
  %4132 = vmatprep.subr.mxu0 0.0
  %4133 = vmatpush1.msra.mxu0 %v4086
  %4134 = vmatprep.subr.mxu0 0.0
  %4135 = vmatpush2.msra.mxu0 0.0
  %4136 = vmatprep.subr.mxu0 0.0
  %4137 = vmatpush2.msra.mxu0 0.0
  %4138 = vmatprep.subr.mxu0 0.0
  %4139 = vmatpush2.msra.mxu0 0.0
  %4140 = vmatprep.subr.mxu0 0.0
  %4141 = vmatpush2.msra.mxu0 0.0
  %4142 = vmatprep.subr.mxu0 0.0
  %4143 = vmatpush2.msra.mxu0 0.0
  %4144 = vmatprep.subr.mxu0 0.0
  %4145 = vmatpush2.msra.mxu0 0.0
  %4146 = vmatprep.subr.mxu0 0.0
  %4147 = vmatpush2.msra.mxu0 0.0
  %4148 = vmatprep.subr.mxu0 0.0
  %4149 = vmatpush2.msra.mxu0 0.0
  %4150 = vmatprep.subr.mxu0 0.0
  %4151 = vmatpush2.msra.mxu0 0.0
  %4152 = vmatprep.subr.mxu0 0.0
  %4153 = vmatpush2.msra.mxu0 0.0
  %4154 = vmatprep.subr.mxu0 0.0
  %4155 = vmatpush2.msra.mxu0 0.0
  %4156 = vmatprep.subr.mxu0 0.0
  %4157 = vmatpush2.msra.mxu0 0.0
  %4158 = vmatprep.subr.mxu0 0.0
  %4159 = vmatpush2.msra.mxu0 0.0
  %4160 = vmatprep.subr.mxu0 0.0
  %4161 = vmatpush2.msra.mxu0 0.0
  %4162 = vmatprep.subr.mxu0 0.0
  %4163 = vmatpush2.msra.mxu0 0.0
  %4164 = vmatprep.subr.mxu0 0.0
  %4165 = vmatpush2.msra.mxu0 0.0
  %4166 = vmatprep.mubr.f32.mxu0 0.0
  %4167 = vmatmul.mubr.f32.gmra.mxu0 %v4069
  %v4168 = vpop.f32.mrf.mxu0
  %v4169 = vadd.f32 0.0, %v4168
  %v4170 = vpop.f32.mrf.mxu0
  %4171 = vmatprep.mubr.f32.mxu0 0.0
  %4172 = vmatmul.mubr.f32.gmra.mxu0 %v4070
  %v4173 = vpop.f32.mrf.mxu0
  %v4174 = vadd.f32 0.0, %v4173
  %v4175 = vpop.f32.mrf.mxu0
  %4176 = vmatprep.mubr.f32.mxu0 0.0
  %4177 = vmatmul.mubr.f32.gmra.mxu0 %v4071
  %v4178 = vpop.f32.mrf.mxu0
  %v4179 = vadd.f32 0.0, %v4178
  %v4180 = vpop.f32.mrf.mxu0
  %4181 = vmatprep.mubr.f32.mxu0 0.0
  %4182 = vmatmul.mubr.f32.gmra.mxu0 %v4072
  %v4183 = vpop.f32.mrf.mxu0
  %v4184 = vadd.f32 0.0, %v4183
  %v4185 = vpop.f32.mrf.mxu0
  %4186 = vmatprep.mubr.f32.mxu0 0.0
  %4187 = vmatmul.mubr.f32.gmra.mxu0 %v4073
  %v4188 = vpop.f32.mrf.mxu0
  %v4189 = vadd.f32 0.0, %v4188
  %v4190 = vpop.f32.mrf.mxu0
  %4191 = vmatprep.mubr.f32.mxu0 0.0
  %4192 = vmatmul.mubr.f32.gmra.mxu0 %v4074
  %v4193 = vpop.f32.mrf.mxu0
  %v4194 = vadd.f32 0.0, %v4193
  %v4195 = vpop.f32.mrf.mxu0
  %4196 = vmatprep.mubr.f32.mxu0 0.0
  %4197 = vmatmul.mubr.f32.gmra.mxu0 %v4075
  %v4198 = vpop.f32.mrf.mxu0
  %v4199 = vadd.f32 0.0, %v4198
  %v4200 = vpop.f32.mrf.mxu0
  %4201 = vmatprep.mubr.f32.mxu0 0.0
  %4202 = vmatmul.mubr.f32.gmra.mxu0 %v4076
  %v4203 = vpop.f32.mrf.mxu0
  %v4204 = vadd.f32 0.0, %v4203
  %v4205 = vpop.f32.mrf.mxu0
  %4206 = vmatprep.mubr.f32.mxu0 0.0
  %4207 = vmatmul.mubr.f32.gmra.mxu0 %v4077
  %v4208 = vpop.f32.mrf.mxu0
  %v4209 = vadd.f32 0.0, %v4208
  %v4210 = vpop.f32.mrf.mxu0
  %4211 = vmatprep.mubr.f32.mxu0 0.0
  %4212 = vmatmul.mubr.f32.gmra.mxu0 %v4078
  %v4213 = vpop.f32.mrf.mxu0
  %v4214 = vadd.f32 0.0, %v4213
  %v4215 = vpop.f32.mrf.mxu0
  %4216 = vmatprep.mubr.f32.mxu0 0.0
  %4217 = vmatmul.mubr.f32.gmra.mxu0 %v4079
  %v4218 = vpop.f32.mrf.mxu0
  %v4219 = vadd.f32 0.0, %v4218
  %v4220 = vpop.f32.mrf.mxu0
  %4221 = vmatprep.mubr.f32.mxu0 0.0
  %4222 = vmatmul.mubr.f32.gmra.mxu0 %v4080
  %v4223 = vpop.f32.mrf.mxu0
  %v4224 = vadd.f32 0.0, %v4223
  %v4225 = vpop.f32.mrf.mxu0
  %4226 = vmatprep.mubr.f32.mxu0 0.0
  %4227 = vmatmul.mubr.f32.gmra.mxu0 %v4081
  %v4228 = vpop.f32.mrf.mxu0
  %v4229 = vadd.f32 0.0, %v4228
  %v4230 = vpop.f32.mrf.mxu0
  %4231 = vmatprep.mubr.f32.mxu0 0.0
  %4232 = vmatmul.mubr.f32.gmra.mxu0 %v4082
  %v4233 = vpop.f32.mrf.mxu0
  %v4234 = vadd.f32 0.0, %v4233
  %v4235 = vpop.f32.mrf.mxu0
  %4236 = vmatprep.mubr.f32.mxu0 0.0
  %4237 = vmatmul.mubr.f32.gmra.mxu0 %v4083
  %v4238 = vpop.f32.mrf.mxu0
  %v4239 = vadd.f32 0.0, %v4238
  %v4240 = vpop.f32.mrf.mxu0
  %4241 = vmatprep.mubr.f32.mxu0 0.0
  %4242 = vmatmul.mubr.f32.gmra.mxu0 %v4084
  %v4243 = vpop.f32.mrf.mxu0
  %v4244 = vadd.f32 0.0, %v4243
  %v4245 = vpop.f32.mrf.mxu0
  %4246 = vdwg.mxu0
  %v4247 = vadd.f32 %v4053, %v4169
  %v4248 = vadd.f32 %v4054, %v4174
  %v4249 = vadd.f32 %v4055, %v4179
  %v4250 = vadd.f32 %v4056, %v4184
  %v4251 = vadd.f32 %v4057, %v4189
  %v4252 = vadd.f32 %v4058, %v4194
  %v4253 = vadd.f32 %v4059, %v4199
  %v4254 = vadd.f32 %v4060, %v4204
  %v4255 = vadd.f32 %v4061, %v4209
  %v4256 = vadd.f32 %v4062, %v4214
  %v4257 = vadd.f32 %v4063, %v4219
  %v4258 = vadd.f32 %v4064, %v4224
  %v4259 = vadd.f32 %v4065, %v4229
  %v4260 = vadd.f32 %v4066, %v4234
  %v4261 = vadd.f32 %v4067, %v4239
  %v4262 = vadd.f32 %v4068, %v4244
  %v4263 = vld [vmem:[%s6] sm:$0x1]
  %v4265 = vlaneseq
  %v4266 = vshrl.u32 %v4265, 7
  %v4267 = vsub.s32 0, %v4266
  %v4268 = vrot.slane %v4263, %v4267
  %v4270 = vadd.f32 %v4247, %v4268
  %v4271 = vadd.f32 %v4248, %v4268
  %v4272 = vadd.f32 %v4249, %v4268
  %v4273 = vadd.f32 %v4250, %v4268
  %v4274 = vadd.f32 %v4251, %v4268
  %v4275 = vadd.f32 %v4252, %v4268
  %v4276 = vadd.f32 %v4253, %v4268
  %v4277 = vadd.f32 %v4254, %v4268
  %v4278 = vadd.f32 %v4255, %v4268
  %v4279 = vadd.f32 %v4256, %v4268
  %v4280 = vadd.f32 %v4257, %v4268
  %v4281 = vadd.f32 %v4258, %v4268
  %v4282 = vadd.f32 %v4259, %v4268
  %v4283 = vadd.f32 %v4260, %v4268
  %v4284 = vadd.f32 %v4261, %v4268
  %v4285 = vadd.f32 %v4262, %v4268
  %4286 = vst [vmem:[%s7] sm:$0xff] %v4270
  %4287 = vst [vmem:[%s7 + $0x8] sm:$0xff] %v4271
  %4288 = vst [vmem:[%s7 + $0x10] sm:$0xff] %v4272
  %4289 = vst [vmem:[%s7 + $0x18] sm:$0xff] %v4273
  %4290 = vst [vmem:[%s7 + $0x20] sm:$0xff] %v4274
  %4291 = vst [vmem:[%s7 + $0x28] sm:$0xff] %v4275
  %4292 = vst [vmem:[%s7 + $0x30] sm:$0xff] %v4276
  %4293 = vst [vmem:[%s7 + $0x38] sm:$0xff] %v4277
  %4294 = vst [vmem:[%s7 + $0x40] sm:$0xff] %v4278
  %4295 = vst [vmem:[%s7 + $0x48] sm:$0xff] %v4279
  %4296 = vst [vmem:[%s7 + $0x50] sm:$0xff] %v4280
  %4297 = vst [vmem:[%s7 + $0x58] sm:$0xff] %v4281
  %4298 = vst [vmem:[%s7 + $0x60] sm:$0xff] %v4282
  %4299 = vst [vmem:[%s7 + $0x68] sm:$0xff] %v4283
  %4300 = vst [vmem:[%s7 + $0x70] sm:$0xff] %v4284
  %4301 = vst [vmem:[%s7 + $0x78] sm:$0x3] %v4285
  // Predicated region
  $region30: #{_lambda_.1} parent=0 // pred_check
    _
  $region31: #{_lambda_.1} parent=0 // pred_check_branch
    %4303 = sbr.rel (0) target = $region33
  $region32: #{_lambda_.1} parent=0 // pred_region
    _
  $region33: #{_lambda_.1} parent=0 // pred_fallthru
    _
  // Predicated region
  $region34: #{_lambda_.1} parent=0 // pred_check
    _
  $region35: #{_lambda_.1} parent=0 // pred_check_branch
    %4305 = sbr.rel (0) target = $region37
  $region36: #{_lambda_.1} parent=0 // pred_region
    _
  $region37: #{_lambda_.1} parent=0 // pred_fallthru
    _

</llo_original>
